<compile_context>
chip_gen: v7x
topology: tpu7x:2x2x1
jax: 0.10.0
libtpu: 0.0.40
codegen_flags: <defaults>
</compile_context>

<pallas_src>
import math

import jax
import jax.numpy as jnp
from jax import lax
from jax.experimental import pallas as pl
from jax.experimental.pallas import tpu as pltpu


# --------------------------------------------------------------------------
# Pallas kernel: forward Kalman recursion + backward RTS smoothing recursion.
def _hmm_kernel(u_ref, f_ref, h_ref, c_ref, ba_ref, bmu0_ref,
                mu_s_ref, yhat_ref, mu_tt_ref):
    T, S, BB = u_ref.shape
    O = yhat_ref.shape[1]
    f32 = jnp.float32
    unroll = True if T <= 64 else 8

    # ---------------- forward roll: one matmul on the serial chain ----------
    mu = u_ref[0]                    # mu_tt[0] = (I - G0 B) mu0 + G0 y0 (folded into u[0])
    mu_tt_ref[0] = mu

    def fwd_body(t, mu):
        mu = jnp.dot(f_ref[t - 1], mu, preferred_element_type=f32) + u_ref[t]
        mu_tt_ref[t] = mu
        return mu

    mu = lax.fori_loop(1, T, fwd_body, mu, unroll=unroll)

    # -------- T-parallel epilogue of the forward pass (off the serial chain) --------
    # yhat[0] = B mu0 (data independent), yhat[t>=1] = (B A_{t-1}) mu_tt[t-1]
    yhat_ref[0] = jnp.broadcast_to(bmu0_ref[...], (O, BB))
    yhat_ref[pl.ds(1, T - 1), :, :] = jnp.einsum(
        'tos,tsb->tob', ba_ref[...], mu_tt_ref[pl.ds(0, T - 1), :, :],
        preferred_element_type=f32)

    # c_t = (I - H_t A_t) mu_tt[t]; overwrite the mu_tt scratch in place.
    # (Index T-1 is untouched, so write-before-read ordering is preserved.)
    mu_tt_ref[pl.ds(0, T - 1), :, :] = jnp.einsum(
        'tij,tjb->tib', c_ref[...], mu_tt_ref[pl.ds(0, T - 1), :, :],
        preferred_element_type=f32)

    # ---------------- backward roll: one matmul on the serial chain ---------
    mu_s_ref[T - 1] = mu             # mu_s[T-1] = mu_tt[T-1] (still resident in vregs)

    def bwd_body(s, mu_s):
        t = T - 2 - s
        mu_s = jnp.dot(h_ref[t], mu_s, preferred_element_type=f32) + mu_tt_ref[t]
        mu_s_ref[t] = mu_s
        return mu_s

    lax.fori_loop(0, T - 1, bwd_body, mu, unroll=unroll)


def _pallas_rolls(u, f_t, h_t, c_t, ba_t, bmu0, *, batch_block=128):
    T, S, Bpad = u.shape
    O = ba_t.shape[1]
    assert Bpad % batch_block == 0
    nb = Bpad // batch_block
    BB = batch_block

    flops = 2 * Bpad * S * (T * S + (T - 1) * (2 * S + O))
    bytes_accessed = 4 * (u.size + f_t.size + h_t.size + c_t.size + ba_t.size
                          + bmu0.size + T * S * Bpad + T * O * Bpad)

    grid_spec = pltpu.PrefetchScalarGridSpec(
        num_scalar_prefetch=0,
        grid=(nb,),
        in_specs=[
            pl.BlockSpec((T, S, BB), lambda j: (0, 0, j)),          # u_t     (T,S,BB)
            pl.BlockSpec((T - 1, S, S), lambda j: (0, 0, 0)),       # F_t     (T-1,S,S)
            pl.BlockSpec((T - 1, S, S), lambda j: (0, 0, 0)),       # H_t     (T-1,S,S)
            pl.BlockSpec((T - 1, S, S), lambda j: (0, 0, 0)),       # I-H_t A (T-1,S,S)
            pl.BlockSpec((T - 1, O, S), lambda j: (0, 0, 0)),       # B A_t   (T-1,O,S)
            pl.BlockSpec((O, 1), lambda j: (0, 0)),                 # B mu0   (O,1)
        ],
        out_specs=[
            pl.BlockSpec((T, S, BB), lambda j: (0, 0, j)),          # mu_s
            pl.BlockSpec((T, O, BB), lambda j: (0, 0, j)),          # yhat
        ],
        scratch_shapes=[pltpu.VMEM((T, S, BB), jnp.float32)],       # mu_tt / c_t
    )
    return pl.pallas_call(
        _hmm_kernel,
        out_shape=(jax.ShapeDtypeStruct((T, S, Bpad), jnp.float32),
                   jax.ShapeDtypeStruct((T, O, Bpad), jnp.float32)),
        grid_spec=grid_spec,
        compiler_params=pltpu.CompilerParams(
            # Batch blocks are independent -> megacore-parallel on v7x.
            dimension_semantics=("parallel",)),
        cost_estimate=pl.CostEstimate(flops=flops, transcendentals=0,
                                      bytes_accessed=bytes_accessed),
    )(u, f_t, h_t, c_t, ba_t, bmu0)


# ----------------- plain-JAX glue: data-independent covariance precompute ----
def _data_update_covariances(b_mat, r_mat, p_pred):
    sig = b_mat @ p_pred @ b_mat.T + r_mat
    g = p_pred @ b_mat.T @ jnp.linalg.pinv(sig, hermitian=True)
    p_tt = p_pred - g @ b_mat @ p_pred
    return g, p_tt, sig


def precompute_covariances(a_t, q_t, b_mat, r_mat, p0):
    """lax.scan forward/backward covariance recursions (no unrolled Python graph)."""
    g0, ptt0, s0 = _data_update_covariances(b_mat, r_mat, p0)

    def fwd_step(p_tt_prev, aq):
        a, q = aq
        p_pred = a @ p_tt_prev @ a.T + q
        g, p_tt, sig = _data_update_covariances(b_mat, r_mat, p_pred)
        return p_tt, (p_pred, g, p_tt, sig)

    _, (pp_rest, g_rest, ptt_rest, sig_rest) = lax.scan(fwd_step, ptt0, (a_t, q_t))
    p_ttm1 = jnp.concatenate([p0[None], pp_rest], axis=0)
    g_t = jnp.concatenate([g0[None], g_rest], axis=0)
    p_tt = jnp.concatenate([ptt0[None], ptt_rest], axis=0)
    sig_t = jnp.concatenate([s0[None], sig_rest], axis=0)

    p_ttm1_inv = jnp.linalg.pinv(p_ttm1, hermitian=True)

    def bwd_step(p_next, inp):
        p_tt_t, a_tt, p_pred_next, p_pred_inv_next = inp
        h = p_tt_t @ a_tt.T @ p_pred_inv_next
        p_cur = p_tt_t + h @ (p_next - p_pred_next) @ h.T
        return p_cur, (h, p_cur)

    _, (h_t, p_head) = lax.scan(
        bwd_step, p_tt[-1],
        (p_tt[:-1], a_t, p_ttm1[1:], p_ttm1_inv[1:]),
        reverse=True)
    p_t = jnp.concatenate([p_head, p_tt[-1:]], axis=0)
    # NOTE: v_ttm1 from the torch module is not needed for forward() outputs.
    return g_t, p_tt, p_ttm1, sig_t, h_t, p_t


def hmm_forward(y, params, *, batch_block=128):
    """y: (B, T, O, 1) — same convention as the torch module."""
    assert y.ndim == 4
    B, T, O, _ = y.shape
    assert T >= 2
    f32 = jnp.float32
    a_t = params["a_tensor"].astype(f32)        # (T-1,S,S)
    q_t = params["q_t_tensor"].astype(f32)      # (T-1,S,S)
    b_mat = params["mat_b"].astype(f32)         # (O,S)
    r_mat = params["mat_r"].astype(f32)         # (O,O)
    mu0 = params["mat_mu0"].astype(f32)         # (S,)
    p0 = params["mat_p0"].astype(f32)           # (S,S)
    S = mu0.shape[0]

    g_t, p_tt, p_ttm1, sig_t, h_t, p_t = precompute_covariances(
        a_t, q_t, b_mat, r_mat, p0)

    # ---- fold the data-independent matrices so the kernel's serial chain is 1 matmul
    eye_s = jnp.eye(S, dtype=f32)
    f_t = (eye_s[None] - g_t[1:] @ b_mat[None]) @ a_t      # (T-1,S,S)  (I - G_t B) A_{t-1}
    c_t = eye_s[None] - h_t @ a_t                          # (T-1,S,S)  I - H_t A_t
    ba_t = jnp.einsum('os,tsk->tok', b_mat, a_t)           # (T-1,O,S)  B A_{t-1}
    bmu0 = (b_mat @ mu0)[:, None]                          # (O,1)      yhat[0]
    m0_filt = (eye_s - g_t[0] @ b_mat) @ mu0               # (S,)       (I - G_0 B) mu0

    # ---- lane-dense layout: batch on lanes, padded to a multiple of batch_block ----
    Bpad = ((B + batch_block - 1) // batch_block) * batch_block
    y_col = jnp.transpose(y[..., 0], (1, 2, 0)).astype(f32)      # (T,O,B)
    y_col = jnp.pad(y_col, ((0, 0), (0, 0), (0, Bpad - B)))
    u = jnp.einsum('tso,tob->tsb', g_t, y_col)                   # (T,S,Bpad)  G_t y_t
    u = u.at[0].add(m0_filt[:, None])                            # fold init into u[0]

    mu_s, yhat = _pallas_rolls(u, f_t, h_t, c_t, ba_t, bmu0,
                               batch_block=batch_block)

    mu_t_out = jnp.transpose(mu_s[:, :, :B], (2, 0, 1))[..., None]   # (B,T,S,1)
    yhat_out = jnp.transpose(yhat[:, :, :B], (2, 0, 1))[..., None]   # (B,T,O,1)
    return mu_t_out, p_t, yhat_out, sig_t


# ----------------- pure-JAX reference (mirrors the torch loops exactly) ------
def reference_forward(y, params):
    Bb, T, O, _ = y.shape
    a_t = params["a_tensor"]
    q_t = params["q_t_tensor"]
    b_mat = params["mat_b"]
    r_mat = params["mat_r"]
    mu0 = params["mat_mu0"]
    p0 = params["mat_p0"]
    S = mu0.shape[0]

    g_t, p_tt, p_ttm1, sig_t, h_t, p_t = precompute_covariances(
        a_t, q_t, b_mat, r_mat, p0)

    y_t = jnp.transpose(y, (1, 0, 2, 3))  # (T,B,O,1)
    mu_ttm1_0 = jnp.broadcast_to(mu0[None, :, None], (Bb, S, 1))
    yhat = [b_mat @ mu_ttm1_0]
    mu_tt = [mu_ttm1_0 + g_t[0] @ (y_t[0] - b_mat @ mu_ttm1_0)]
    for t in range(1, T):
        mtm1 = a_t[t - 1] @ mu_tt[t - 1]
        yh = b_mat @ mtm1
        yhat.append(yh)
        mu_tt.append(mtm1 + g_t[t] @ (y_t[t] - yh))
    mu_s = [None] * T
    mu_s[T - 1] = mu_tt[T - 1]
    for t in reversed(range(T - 1)):
        mu_s[t] = mu_tt[t] + h_t[t] @ (mu_s[t + 1] - a_t[t] @ mu_tt[t])
    mu_s = jnp.transpose(jnp.stack(mu_s), (1, 0, 2, 3))
    yhat = jnp.transpose(jnp.stack(yhat), (1, 0, 2, 3))
    return mu_s, p_t, yhat, sig_t


if __name__ == "__main__":
    key = jax.random.PRNGKey(0)
    length, num_states, num_outputs, batch = 8, 8, 4, 8   # kappa = 4 (>= 0 branch)
    k1, k2, k3, k4 = jax.random.split(key, 4)

    w_a = 1.0 / math.sqrt(num_states)
    w_b = 1.0 / math.sqrt(num_outputs * num_states)
    params = dict(
        a_tensor=w_a * jax.random.normal(
            k1, (length - 1, num_states, num_states), jnp.float32),
        q_t_tensor=jnp.tile(jnp.eye(num_states, dtype=jnp.float32),
                            (length - 1, 1, 1)),
        mat_b=w_b * jax.random.normal(k2, (num_outputs, num_states), jnp.float32),
        mat_r=jnp.eye(num_outputs, dtype=jnp.float32),
        mat_mu0=jax.random.normal(k3, (num_states,), jnp.float32),
        mat_p0=jnp.eye(num_states, dtype=jnp.float32),
    )
    y = jax.random.normal(k4, (batch, length, num_outputs, 1), jnp.float32)

    mu_t, p_t, yhat, sig_t = jax.jit(hmm_forward)(y, params)
    jax.block_until_ready((mu_t, p_t, yhat, sig_t))

    mu_ref, p_ref, yhat_r, sig_ref = reference_forward(y, params)
    assert mu_t.shape == (batch, length, num_states, 1)
    assert yhat.shape == (batch, length, num_outputs, 1)
    assert p_t.shape == (length, num_states, num_states)
    assert sig_t.shape == (length, num_outputs, num_outputs)
    assert jnp.allclose(mu_t, mu_ref, atol=1e-4, rtol=1e-4)
    assert jnp.allclose(yhat, yhat_r, atol=1e-4, rtol=1e-4)

    print("KERNEL_OK")
</pallas_src>

<mosaic_0001>
module attributes {stable_mosaic.version = 11 : i64} {
  func.func @_hmm_kernel(%arg0: i32, %arg1: memref<8x8x128xf32, #tpu.memory_space<vmem>>, %arg2: memref<7x8x8xf32, #tpu.memory_space<vmem>>, %arg3: memref<7x8x8xf32, #tpu.memory_space<vmem>>, %arg4: memref<7x8x8xf32, #tpu.memory_space<vmem>>, %arg5: memref<7x4x8xf32, #tpu.memory_space<vmem>>, %arg6: memref<4x1xf32, #tpu.memory_space<vmem>>, %arg7: memref<8x8x128xf32, #tpu.memory_space<vmem>>, %arg8: memref<8x4x128xf32, #tpu.memory_space<vmem>>, %arg9: memref<8x8x128xf32, #tpu.memory_space<vmem>>) attributes {dimension_semantics = [#tpu.dimension_semantics<parallel>], iteration_bounds = array<i64: 1>, scalar_prefetch = 0 : i64, scratch_operands = 1 : i64, tpu.core_type = #tpu.core_type<tc>, window_params = [{transform_indices = @transform_0, window_bounds = array<i64: 8, 8, 128>}, {pipeline_mode = #tpu.pipeline_mode<synchronous>, transform_indices = @transform_1, window_bounds = array<i64: 7, 8, 8>}, {pipeline_mode = #tpu.pipeline_mode<synchronous>, transform_indices = @transform_2, window_bounds = array<i64: 7, 8, 8>}, {pipeline_mode = #tpu.pipeline_mode<synchronous>, transform_indices = @transform_3, window_bounds = array<i64: 7, 8, 8>}, {pipeline_mode = #tpu.pipeline_mode<synchronous>, transform_indices = @transform_4, window_bounds = array<i64: 7, 4, 8>}, {pipeline_mode = #tpu.pipeline_mode<synchronous>, transform_indices = @transform_5, window_bounds = array<i64: 4, 1>}, {transform_indices = @transform_6, window_bounds = array<i64: 8, 8, 128>}, {transform_indices = @transform_7, window_bounds = array<i64: 8, 4, 128>}]} {
    %c0 = arith.constant 0 : index
    %c0_0 = arith.constant 0 : index
    %c0_1 = arith.constant 0 : index
    %0 = vector.load %arg1[%c0, %c0_0, %c0_1] : memref<8x8x128xf32, #tpu.memory_space<vmem>>, vector<1x8x128xf32>
    %1 = vector.shape_cast %0 : vector<1x8x128xf32> to vector<8x128xf32>
    %c0_2 = arith.constant 0 : index
    %c0_3 = arith.constant 0 : index
    %c0_4 = arith.constant 0 : index
    %2 = vector.load %arg9[%c0_2, %c0_3, %c0_4] : memref<8x8x128xf32, #tpu.memory_space<vmem>>, vector<1x8x128xf32>
    %3 = vector.shape_cast %2 : vector<1x8x128xf32> to vector<8x128xf32>
    %4 = vector.shape_cast %1 : vector<8x128xf32> to vector<1x8x128xf32>
    tpu.vector_store %arg9[%c0_2, %c0_3, %c0_4], %4 {strides = array<i32>} : memref<8x8x128xf32, #tpu.memory_space<vmem>>, vector<1x8x128xf32>,
    %c1_i32 = arith.constant 1 : i32
    %c1_i32_5 = arith.constant 1 : i32
    %5 = arith.subi %c1_i32, %c1_i32_5 : i32
    %6 = arith.index_cast %5 : i32 to index
    %c0_6 = arith.constant 0 : index
    %c0_7 = arith.constant 0 : index
    %7 = vector.load %arg2[%6, %c0_6, %c0_7] : memref<7x8x8xf32, #tpu.memory_space<vmem>>, vector<1x8x8xf32>
    %8 = vector.shape_cast %7 : vector<1x8x8xf32> to vector<8x8xf32>
    %cst = arith.constant dense<0.000000e+00> : vector<8x128xf32>
    %9 = tpu.matmul %8, %1, %cst {dimension_numbers = #tpu.dot_dimension_numbers<[1], [0], [0], [1], [0, 0, 1, 1], [], []>} : vector<8x8xf32>, vector<8x128xf32>, vector<8x128xf32> -> vector<8x128xf32>
    %10 = arith.index_cast %c1_i32 : i32 to index
    %c0_8 = arith.constant 0 : index
    %c0_9 = arith.constant 0 : index
    %11 = vector.load %arg1[%10, %c0_8, %c0_9] : memref<8x8x128xf32, #tpu.memory_space<vmem>>, vector<1x8x128xf32>
    %12 = vector.shape_cast %11 : vector<1x8x128xf32> to vector<8x128xf32>
    %13 = arith.addf %9, %12 : vector<8x128xf32>
    %14 = arith.index_cast %c1_i32 : i32 to index
    %c0_10 = arith.constant 0 : index
    %c0_11 = arith.constant 0 : index
    %15 = vector.load %arg9[%14, %c0_10, %c0_11] : memref<8x8x128xf32, #tpu.memory_space<vmem>>, vector<1x8x128xf32>
    %16 = vector.shape_cast %15 : vector<1x8x128xf32> to vector<8x128xf32>
    %17 = vector.shape_cast %13 : vector<8x128xf32> to vector<1x8x128xf32>
    tpu.vector_store %arg9[%14, %c0_10, %c0_11], %17 {strides = array<i32>} : memref<8x8x128xf32, #tpu.memory_space<vmem>>, vector<1x8x128xf32>,
    %c2_i32 = arith.constant 2 : i32
    %c1_i32_12 = arith.constant 1 : i32
    %18 = arith.subi %c2_i32, %c1_i32_12 : i32
    %19 = arith.index_cast %18 : i32 to index
    %c0_13 = arith.constant 0 : index
    %c0_14 = arith.constant 0 : index
    %20 = vector.load %arg2[%19, %c0_13, %c0_14] : memref<7x8x8xf32, #tpu.memory_space<vmem>>, vector<1x8x8xf32>
    %21 = vector.shape_cast %20 : vector<1x8x8xf32> to vector<8x8xf32>
    %cst_15 = arith.constant dense<0.000000e+00> : vector<8x128xf32>
    %22 = tpu.matmul %21, %13, %cst_15 {dimension_numbers = #tpu.dot_dimension_numbers<[1], [0], [0], [1], [0, 0, 1, 1], [], []>} : vector<8x8xf32>, vector<8x128xf32>, vector<8x128xf32> -> vector<8x128xf32>
    %23 = arith.index_cast %c2_i32 : i32 to index
    %c0_16 = arith.constant 0 : index
    %c0_17 = arith.constant 0 : index
    %24 = vector.load %arg1[%23, %c0_16, %c0_17] : memref<8x8x128xf32, #tpu.memory_space<vmem>>, vector<1x8x128xf32>
    %25 = vector.shape_cast %24 : vector<1x8x128xf32> to vector<8x128xf32>
    %26 = arith.addf %22, %25 : vector<8x128xf32>
    %27 = arith.index_cast %c2_i32 : i32 to index
    %c0_18 = arith.constant 0 : index
    %c0_19 = arith.constant 0 : index
    %28 = vector.load %arg9[%27, %c0_18, %c0_19] : memref<8x8x128xf32, #tpu.memory_space<vmem>>, vector<1x8x128xf32>
    %29 = vector.shape_cast %28 : vector<1x8x128xf32> to vector<8x128xf32>
    %30 = vector.shape_cast %26 : vector<8x128xf32> to vector<1x8x128xf32>
    tpu.vector_store %arg9[%27, %c0_18, %c0_19], %30 {strides = array<i32>} : memref<8x8x128xf32, #tpu.memory_space<vmem>>, vector<1x8x128xf32>,
    %c3_i32 = arith.constant 3 : i32
    %c1_i32_20 = arith.constant 1 : i32
    %31 = arith.subi %c3_i32, %c1_i32_20 : i32
    %32 = arith.index_cast %31 : i32 to index
    %c0_21 = arith.constant 0 : index
    %c0_22 = arith.constant 0 : index
    %33 = vector.load %arg2[%32, %c0_21, %c0_22] : memref<7x8x8xf32, #tpu.memory_space<vmem>>, vector<1x8x8xf32>
    %34 = vector.shape_cast %33 : vector<1x8x8xf32> to vector<8x8xf32>
    %cst_23 = arith.constant dense<0.000000e+00> : vector<8x128xf32>
    %35 = tpu.matmul %34, %26, %cst_23 {dimension_numbers = #tpu.dot_dimension_numbers<[1], [0], [0], [1], [0, 0, 1, 1], [], []>} : vector<8x8xf32>, vector<8x128xf32>, vector<8x128xf32> -> vector<8x128xf32>
    %36 = arith.index_cast %c3_i32 : i32 to index
    %c0_24 = arith.constant 0 : index
    %c0_25 = arith.constant 0 : index
    %37 = vector.load %arg1[%36, %c0_24, %c0_25] : memref<8x8x128xf32, #tpu.memory_space<vmem>>, vector<1x8x128xf32>
    %38 = vector.shape_cast %37 : vector<1x8x128xf32> to vector<8x128xf32>
    %39 = arith.addf %35, %38 : vector<8x128xf32>
    %40 = arith.index_cast %c3_i32 : i32 to index
    %c0_26 = arith.constant 0 : index
    %c0_27 = arith.constant 0 : index
    %41 = vector.load %arg9[%40, %c0_26, %c0_27] : memref<8x8x128xf32, #tpu.memory_space<vmem>>, vector<1x8x128xf32>
    %42 = vector.shape_cast %41 : vector<1x8x128xf32> to vector<8x128xf32>
    %43 = vector.shape_cast %39 : vector<8x128xf32> to vector<1x8x128xf32>
    tpu.vector_store %arg9[%40, %c0_26, %c0_27], %43 {strides = array<i32>} : memref<8x8x128xf32, #tpu.memory_space<vmem>>, vector<1x8x128xf32>,
    %c4_i32 = arith.constant 4 : i32
    %c1_i32_28 = arith.constant 1 : i32
    %44 = arith.subi %c4_i32, %c1_i32_28 : i32
    %45 = arith.index_cast %44 : i32 to index
    %c0_29 = arith.constant 0 : index
    %c0_30 = arith.constant 0 : index
    %46 = vector.load %arg2[%45, %c0_29, %c0_30] : memref<7x8x8xf32, #tpu.memory_space<vmem>>, vector<1x8x8xf32>
    %47 = vector.shape_cast %46 : vector<1x8x8xf32> to vector<8x8xf32>
    %cst_31 = arith.constant dense<0.000000e+00> : vector<8x128xf32>
    %48 = tpu.matmul %47, %39, %cst_31 {dimension_numbers = #tpu.dot_dimension_numbers<[1], [0], [0], [1], [0, 0, 1, 1], [], []>} : vector<8x8xf32>, vector<8x128xf32>, vector<8x128xf32> -> vector<8x128xf32>
    %49 = arith.index_cast %c4_i32 : i32 to index
    %c0_32 = arith.constant 0 : index
    %c0_33 = arith.constant 0 : index
    %50 = vector.load %arg1[%49, %c0_32, %c0_33] : memref<8x8x128xf32, #tpu.memory_space<vmem>>, vector<1x8x128xf32>
    %51 = vector.shape_cast %50 : vector<1x8x128xf32> to vector<8x128xf32>
    %52 = arith.addf %48, %51 : vector<8x128xf32>
    %53 = arith.index_cast %c4_i32 : i32 to index
    %c0_34 = arith.constant 0 : index
    %c0_35 = arith.constant 0 : index
    %54 = vector.load %arg9[%53, %c0_34, %c0_35] : memref<8x8x128xf32, #tpu.memory_space<vmem>>, vector<1x8x128xf32>
    %55 = vector.shape_cast %54 : vector<1x8x128xf32> to vector<8x128xf32>
    %56 = vector.shape_cast %52 : vector<8x128xf32> to vector<1x8x128xf32>
    tpu.vector_store %arg9[%53, %c0_34, %c0_35], %56 {strides = array<i32>} : memref<8x8x128xf32, #tpu.memory_space<vmem>>, vector<1x8x128xf32>,
    %c5_i32 = arith.constant 5 : i32
    %c1_i32_36 = arith.constant 1 : i32
    %57 = arith.subi %c5_i32, %c1_i32_36 : i32
    %58 = arith.index_cast %57 : i32 to index
    %c0_37 = arith.constant 0 : index
    %c0_38 = arith.constant 0 : index
    %59 = vector.load %arg2[%58, %c0_37, %c0_38] : memref<7x8x8xf32, #tpu.memory_space<vmem>>, vector<1x8x8xf32>
    %60 = vector.shape_cast %59 : vector<1x8x8xf32> to vector<8x8xf32>
    %cst_39 = arith.constant dense<0.000000e+00> : vector<8x128xf32>
    %61 = tpu.matmul %60, %52, %cst_39 {dimension_numbers = #tpu.dot_dimension_numbers<[1], [0], [0], [1], [0, 0, 1, 1], [], []>} : vector<8x8xf32>, vector<8x128xf32>, vector<8x128xf32> -> vector<8x128xf32>
    %62 = arith.index_cast %c5_i32 : i32 to index
    %c0_40 = arith.constant 0 : index
    %c0_41 = arith.constant 0 : index
    %63 = vector.load %arg1[%62, %c0_40, %c0_41] : memref<8x8x128xf32, #tpu.memory_space<vmem>>, vector<1x8x128xf32>
    %64 = vector.shape_cast %63 : vector<1x8x128xf32> to vector<8x128xf32>
    %65 = arith.addf %61, %64 : vector<8x128xf32>
    %66 = arith.index_cast %c5_i32 : i32 to index
    %c0_42 = arith.constant 0 : index
    %c0_43 = arith.constant 0 : index
    %67 = vector.load %arg9[%66, %c0_42, %c0_43] : memref<8x8x128xf32, #tpu.memory_space<vmem>>, vector<1x8x128xf32>
    %68 = vector.shape_cast %67 : vector<1x8x128xf32> to vector<8x128xf32>
    %69 = vector.shape_cast %65 : vector<8x128xf32> to vector<1x8x128xf32>
    tpu.vector_store %arg9[%66, %c0_42, %c0_43], %69 {strides = array<i32>} : memref<8x8x128xf32, #tpu.memory_space<vmem>>, vector<1x8x128xf32>,
    %c6_i32 = arith.constant 6 : i32
    %c1_i32_44 = arith.constant 1 : i32
    %70 = arith.subi %c6_i32, %c1_i32_44 : i32
    %71 = arith.index_cast %70 : i32 to index
    %c0_45 = arith.constant 0 : index
    %c0_46 = arith.constant 0 : index
    %72 = vector.load %arg2[%71, %c0_45, %c0_46] : memref<7x8x8xf32, #tpu.memory_space<vmem>>, vector<1x8x8xf32>
    %73 = vector.shape_cast %72 : vector<1x8x8xf32> to vector<8x8xf32>
    %cst_47 = arith.constant dense<0.000000e+00> : vector<8x128xf32>
    %74 = tpu.matmul %73, %65, %cst_47 {dimension_numbers = #tpu.dot_dimension_numbers<[1], [0], [0], [1], [0, 0, 1, 1], [], []>} : vector<8x8xf32>, vector<8x128xf32>, vector<8x128xf32> -> vector<8x128xf32>
    %75 = arith.index_cast %c6_i32 : i32 to index
    %c0_48 = arith.constant 0 : index
    %c0_49 = arith.constant 0 : index
    %76 = vector.load %arg1[%75, %c0_48, %c0_49] : memref<8x8x128xf32, #tpu.memory_space<vmem>>, vector<1x8x128xf32>
    %77 = vector.shape_cast %76 : vector<1x8x128xf32> to vector<8x128xf32>
    %78 = arith.addf %74, %77 : vector<8x128xf32>
    %79 = arith.index_cast %c6_i32 : i32 to index
    %c0_50 = arith.constant 0 : index
    %c0_51 = arith.constant 0 : index
    %80 = vector.load %arg9[%79, %c0_50, %c0_51] : memref<8x8x128xf32, #tpu.memory_space<vmem>>, vector<1x8x128xf32>
    %81 = vector.shape_cast %80 : vector<1x8x128xf32> to vector<8x128xf32>
    %82 = vector.shape_cast %78 : vector<8x128xf32> to vector<1x8x128xf32>
    tpu.vector_store %arg9[%79, %c0_50, %c0_51], %82 {strides = array<i32>} : memref<8x8x128xf32, #tpu.memory_space<vmem>>, vector<1x8x128xf32>,
    %c7_i32 = arith.constant 7 : i32
    %c1_i32_52 = arith.constant 1 : i32
    %83 = arith.subi %c7_i32, %c1_i32_52 : i32
    %84 = arith.index_cast %83 : i32 to index
    %c0_53 = arith.constant 0 : index
    %c0_54 = arith.constant 0 : index
    %85 = vector.load %arg2[%84, %c0_53, %c0_54] : memref<7x8x8xf32, #tpu.memory_space<vmem>>, vector<1x8x8xf32>
    %86 = vector.shape_cast %85 : vector<1x8x8xf32> to vector<8x8xf32>
    %cst_55 = arith.constant dense<0.000000e+00> : vector<8x128xf32>
    %87 = tpu.matmul %86, %78, %cst_55 {dimension_numbers = #tpu.dot_dimension_numbers<[1], [0], [0], [1], [0, 0, 1, 1], [], []>} : vector<8x8xf32>, vector<8x128xf32>, vector<8x128xf32> -> vector<8x128xf32>
    %88 = arith.index_cast %c7_i32 : i32 to index
    %c0_56 = arith.constant 0 : index
    %c0_57 = arith.constant 0 : index
    %89 = vector.load %arg1[%88, %c0_56, %c0_57] : memref<8x8x128xf32, #tpu.memory_space<vmem>>, vector<1x8x128xf32>
    %90 = vector.shape_cast %89 : vector<1x8x128xf32> to vector<8x128xf32>
    %91 = arith.addf %87, %90 : vector<8x128xf32>
    %92 = arith.index_cast %c7_i32 : i32 to index
    %c0_58 = arith.constant 0 : index
    %c0_59 = arith.constant 0 : index
    %93 = vector.load %arg9[%92, %c0_58, %c0_59] : memref<8x8x128xf32, #tpu.memory_space<vmem>>, vector<1x8x128xf32>
    %94 = vector.shape_cast %93 : vector<1x8x128xf32> to vector<8x128xf32>
    %95 = vector.shape_cast %91 : vector<8x128xf32> to vector<1x8x128xf32>
    tpu.vector_store %arg9[%92, %c0_58, %c0_59], %95 {strides = array<i32>} : memref<8x8x128xf32, #tpu.memory_space<vmem>>, vector<1x8x128xf32>,
    %c7_i32_60 = arith.constant 7 : i32
    %c0_61 = arith.constant 0 : index
    %c0_62 = arith.constant 0 : index
    %96 = vector.load %arg6[%c0_61, %c0_62] : memref<4x1xf32, #tpu.memory_space<vmem>>, vector<4x1xf32>
    %97 = vector.shape_cast %96 : vector<4x1xf32> to vector<4x1xf32>
    %98 = vector.broadcast %97 : vector<4x1xf32> to vector<4x128xf32>
    %c0_63 = arith.constant 0 : index
    %c0_64 = arith.constant 0 : index
    %c0_65 = arith.constant 0 : index
    %99 = vector.load %arg8[%c0_63, %c0_64, %c0_65] : memref<8x4x128xf32, #tpu.memory_space<vmem>>, vector<1x4x128xf32>
    %100 = vector.shape_cast %99 : vector<1x4x128xf32> to vector<4x128xf32>
    %101 = vector.shape_cast %98 : vector<4x128xf32> to vector<1x4x128xf32>
    tpu.vector_store %arg8[%c0_63, %c0_64, %c0_65], %101 {strides = array<i32>} : memref<8x4x128xf32, #tpu.memory_space<vmem>>, vector<1x4x128xf32>,
    %c0_66 = arith.constant 0 : index
    %c0_67 = arith.constant 0 : index
    %c0_68 = arith.constant 0 : index
    %102 = vector.load %arg5[%c0_66, %c0_67, %c0_68] : memref<7x4x8xf32, #tpu.memory_space<vmem>>, vector<7x4x8xf32>
    %c0_69 = arith.constant 0 : index
    %c0_70 = arith.constant 0 : index
    %c0_71 = arith.constant 0 : index
    %103 = vector.load %arg9[%c0_69, %c0_70, %c0_71] : memref<8x8x128xf32, #tpu.memory_space<vmem>>, vector<7x8x128xf32>
    "tpu.trace_start"() <{level = 10 : i32, message = "tos,tsb->tob"}> : () -> ()
    %cst_72 = arith.constant dense<0.000000e+00> : vector<7x4x128xf32>
    %104 = tpu.matmul %102, %103, %cst_72 {dimension_numbers = #tpu.dot_dimension_numbers<[2], [1], [1], [2], [0, 0, 0, 1, 1, 2], [0], [0]>} : vector<7x4x8xf32>, vector<7x8x128xf32>, vector<7x4x128xf32> -> vector<7x4x128xf32>
    "tpu.trace_stop"() : () -> ()
    %c1 = arith.constant 1 : index
    %c0_73 = arith.constant 0 : index
    %c0_74 = arith.constant 0 : index
    %105 = vector.load %arg8[%c1, %c0_73, %c0_74] : memref<8x4x128xf32, #tpu.memory_space<vmem>>, vector<7x4x128xf32>
    tpu.vector_store %arg8[%c1, %c0_73, %c0_74], %104 {strides = array<i32>} : memref<8x4x128xf32, #tpu.memory_space<vmem>>, vector<7x4x128xf32>,
    %c0_75 = arith.constant 0 : index
    %c0_76 = arith.constant 0 : index
    %c0_77 = arith.constant 0 : index
    %106 = vector.load %arg4[%c0_75, %c0_76, %c0_77] : memref<7x8x8xf32, #tpu.memory_space<vmem>>, vector<7x8x8xf32>
    %c0_78 = arith.constant 0 : index
    %c0_79 = arith.constant 0 : index
    %c0_80 = arith.constant 0 : index
    %107 = vector.load %arg9[%c0_78, %c0_79, %c0_80] : memref<8x8x128xf32, #tpu.memory_space<vmem>>, vector<7x8x128xf32>
    "tpu.trace_start"() <{level = 10 : i32, message = "tij,tjb->tib"}> : () -> ()
    %cst_81 = arith.constant dense<0.000000e+00> : vector<7x8x128xf32>
    %108 = tpu.matmul %106, %107, %cst_81 {dimension_numbers = #tpu.dot_dimension_numbers<[2], [1], [1], [2], [0, 0, 0, 1, 1, 2], [0], [0]>} : vector<7x8x8xf32>, vector<7x8x128xf32>, vector<7x8x128xf32> -> vector<7x8x128xf32>
    "tpu.trace_stop"() : () -> ()
    %c0_82 = arith.constant 0 : index
    %c0_83 = arith.constant 0 : index
    %c0_84 = arith.constant 0 : index
    %109 = vector.load %arg9[%c0_82, %c0_83, %c0_84] : memref<8x8x128xf32, #tpu.memory_space<vmem>>, vector<7x8x128xf32>
    tpu.vector_store %arg9[%c0_82, %c0_83, %c0_84], %108 {strides = array<i32>} : memref<8x8x128xf32, #tpu.memory_space<vmem>>, vector<7x8x128xf32>,
    %c7 = arith.constant 7 : index
    %c0_85 = arith.constant 0 : index
    %c0_86 = arith.constant 0 : index
    %110 = vector.load %arg7[%c7, %c0_85, %c0_86] : memref<8x8x128xf32, #tpu.memory_space<vmem>>, vector<1x8x128xf32>
    %111 = vector.shape_cast %110 : vector<1x8x128xf32> to vector<8x128xf32>
    %112 = vector.shape_cast %91 : vector<8x128xf32> to vector<1x8x128xf32>
    tpu.vector_store %arg7[%c7, %c0_85, %c0_86], %112 {strides = array<i32>} : memref<8x8x128xf32, #tpu.memory_space<vmem>>, vector<1x8x128xf32>,
    %c0_i32 = arith.constant 0 : i32
    %c6_i32_87 = arith.constant 6 : i32
    %113 = arith.subi %c6_i32_87, %c0_i32 : i32
    %114 = arith.index_cast %113 : i32 to index
    %c0_88 = arith.constant 0 : index
    %c0_89 = arith.constant 0 : index
    %115 = vector.load %arg3[%114, %c0_88, %c0_89] : memref<7x8x8xf32, #tpu.memory_space<vmem>>, vector<1x8x8xf32>
    %116 = vector.shape_cast %115 : vector<1x8x8xf32> to vector<8x8xf32>
    %cst_90 = arith.constant dense<0.000000e+00> : vector<8x128xf32>
    %117 = tpu.matmul %116, %91, %cst_90 {dimension_numbers = #tpu.dot_dimension_numbers<[1], [0], [0], [1], [0, 0, 1, 1], [], []>} : vector<8x8xf32>, vector<8x128xf32>, vector<8x128xf32> -> vector<8x128xf32>
    %118 = arith.index_cast %113 : i32 to index
    %c0_91 = arith.constant 0 : index
    %c0_92 = arith.constant 0 : index
    %119 = vector.load %arg9[%118, %c0_91, %c0_92] : memref<8x8x128xf32, #tpu.memory_space<vmem>>, vector<1x8x128xf32>
    %120 = vector.shape_cast %119 : vector<1x8x128xf32> to vector<8x128xf32>
    %121 = arith.addf %117, %120 : vector<8x128xf32>
    %122 = arith.index_cast %113 : i32 to index
    %c0_93 = arith.constant 0 : index
    %c0_94 = arith.constant 0 : index
    %123 = vector.load %arg7[%122, %c0_93, %c0_94] : memref<8x8x128xf32, #tpu.memory_space<vmem>>, vector<1x8x128xf32>
    %124 = vector.shape_cast %123 : vector<1x8x128xf32> to vector<8x128xf32>
    %125 = vector.shape_cast %121 : vector<8x128xf32> to vector<1x8x128xf32>
    tpu.vector_store %arg7[%122, %c0_93, %c0_94], %125 {strides = array<i32>} : memref<8x8x128xf32, #tpu.memory_space<vmem>>, vector<1x8x128xf32>,
    %c1_i32_95 = arith.constant 1 : i32
    %c6_i32_96 = arith.constant 6 : i32
    %126 = arith.subi %c6_i32_96, %c1_i32_95 : i32
    %127 = arith.index_cast %126 : i32 to index
    %c0_97 = arith.constant 0 : index
    %c0_98 = arith.constant 0 : index
    %128 = vector.load %arg3[%127, %c0_97, %c0_98] : memref<7x8x8xf32, #tpu.memory_space<vmem>>, vector<1x8x8xf32>
    %129 = vector.shape_cast %128 : vector<1x8x8xf32> to vector<8x8xf32>
    %cst_99 = arith.constant dense<0.000000e+00> : vector<8x128xf32>
    %130 = tpu.matmul %129, %121, %cst_99 {dimension_numbers = #tpu.dot_dimension_numbers<[1], [0], [0], [1], [0, 0, 1, 1], [], []>} : vector<8x8xf32>, vector<8x128xf32>, vector<8x128xf32> -> vector<8x128xf32>
    %131 = arith.index_cast %126 : i32 to index
    %c0_100 = arith.constant 0 : index
    %c0_101 = arith.constant 0 : index
    %132 = vector.load %arg9[%131, %c0_100, %c0_101] : memref<8x8x128xf32, #tpu.memory_space<vmem>>, vector<1x8x128xf32>
    %133 = vector.shape_cast %132 : vector<1x8x128xf32> to vector<8x128xf32>
    %134 = arith.addf %130, %133 : vector<8x128xf32>
    %135 = arith.index_cast %126 : i32 to index
    %c0_102 = arith.constant 0 : index
    %c0_103 = arith.constant 0 : index
    %136 = vector.load %arg7[%135, %c0_102, %c0_103] : memref<8x8x128xf32, #tpu.memory_space<vmem>>, vector<1x8x128xf32>
    %137 = vector.shape_cast %136 : vector<1x8x128xf32> to vector<8x128xf32>
    %138 = vector.shape_cast %134 : vector<8x128xf32> to vector<1x8x128xf32>
    tpu.vector_store %arg7[%135, %c0_102, %c0_103], %138 {strides = array<i32>} : memref<8x8x128xf32, #tpu.memory_space<vmem>>, vector<1x8x128xf32>,
    %c2_i32_104 = arith.constant 2 : i32
    %c6_i32_105 = arith.constant 6 : i32
    %139 = arith.subi %c6_i32_105, %c2_i32_104 : i32
    %140 = arith.index_cast %139 : i32 to index
    %c0_106 = arith.constant 0 : index
    %c0_107 = arith.constant 0 : index
    %141 = vector.load %arg3[%140, %c0_106, %c0_107] : memref<7x8x8xf32, #tpu.memory_space<vmem>>, vector<1x8x8xf32>
    %142 = vector.shape_cast %141 : vector<1x8x8xf32> to vector<8x8xf32>
    %cst_108 = arith.constant dense<0.000000e+00> : vector<8x128xf32>
    %143 = tpu.matmul %142, %134, %cst_108 {dimension_numbers = #tpu.dot_dimension_numbers<[1], [0], [0], [1], [0, 0, 1, 1], [], []>} : vector<8x8xf32>, vector<8x128xf32>, vector<8x128xf32> -> vector<8x128xf32>
    %144 = arith.index_cast %139 : i32 to index
    %c0_109 = arith.constant 0 : index
    %c0_110 = arith.constant 0 : index
    %145 = vector.load %arg9[%144, %c0_109, %c0_110] : memref<8x8x128xf32, #tpu.memory_space<vmem>>, vector<1x8x128xf32>
    %146 = vector.shape_cast %145 : vector<1x8x128xf32> to vector<8x128xf32>
    %147 = arith.addf %143, %146 : vector<8x128xf32>
    %148 = arith.index_cast %139 : i32 to index
    %c0_111 = arith.constant 0 : index
    %c0_112 = arith.constant 0 : index
    %149 = vector.load %arg7[%148, %c0_111, %c0_112] : memref<8x8x128xf32, #tpu.memory_space<vmem>>, vector<1x8x128xf32>
    %150 = vector.shape_cast %149 : vector<1x8x128xf32> to vector<8x128xf32>
    %151 = vector.shape_cast %147 : vector<8x128xf32> to vector<1x8x128xf32>
    tpu.vector_store %arg7[%148, %c0_111, %c0_112], %151 {strides = array<i32>} : memref<8x8x128xf32, #tpu.memory_space<vmem>>, vector<1x8x128xf32>,
    %c3_i32_113 = arith.constant 3 : i32
    %c6_i32_114 = arith.constant 6 : i32
    %152 = arith.subi %c6_i32_114, %c3_i32_113 : i32
    %153 = arith.index_cast %152 : i32 to index
    %c0_115 = arith.constant 0 : index
    %c0_116 = arith.constant 0 : index
    %154 = vector.load %arg3[%153, %c0_115, %c0_116] : memref<7x8x8xf32, #tpu.memory_space<vmem>>, vector<1x8x8xf32>
    %155 = vector.shape_cast %154 : vector<1x8x8xf32> to vector<8x8xf32>
    %cst_117 = arith.constant dense<0.000000e+00> : vector<8x128xf32>
    %156 = tpu.matmul %155, %147, %cst_117 {dimension_numbers = #tpu.dot_dimension_numbers<[1], [0], [0], [1], [0, 0, 1, 1], [], []>} : vector<8x8xf32>, vector<8x128xf32>, vector<8x128xf32> -> vector<8x128xf32>
    %157 = arith.index_cast %152 : i32 to index
    %c0_118 = arith.constant 0 : index
    %c0_119 = arith.constant 0 : index
    %158 = vector.load %arg9[%157, %c0_118, %c0_119] : memref<8x8x128xf32, #tpu.memory_space<vmem>>, vector<1x8x128xf32>
    %159 = vector.shape_cast %158 : vector<1x8x128xf32> to vector<8x128xf32>
    %160 = arith.addf %156, %159 : vector<8x128xf32>
    %161 = arith.index_cast %152 : i32 to index
    %c0_120 = arith.constant 0 : index
    %c0_121 = arith.constant 0 : index
    %162 = vector.load %arg7[%161, %c0_120, %c0_121] : memref<8x8x128xf32, #tpu.memory_space<vmem>>, vector<1x8x128xf32>
    %163 = vector.shape_cast %162 : vector<1x8x128xf32> to vector<8x128xf32>
    %164 = vector.shape_cast %160 : vector<8x128xf32> to vector<1x8x128xf32>
    tpu.vector_store %arg7[%161, %c0_120, %c0_121], %164 {strides = array<i32>} : memref<8x8x128xf32, #tpu.memory_space<vmem>>, vector<1x8x128xf32>,
    %c4_i32_122 = arith.constant 4 : i32
    %c6_i32_123 = arith.constant 6 : i32
    %165 = arith.subi %c6_i32_123, %c4_i32_122 : i32
    %166 = arith.index_cast %165 : i32 to index
    %c0_124 = arith.constant 0 : index
    %c0_125 = arith.constant 0 : index
    %167 = vector.load %arg3[%166, %c0_124, %c0_125] : memref<7x8x8xf32, #tpu.memory_space<vmem>>, vector<1x8x8xf32>
    %168 = vector.shape_cast %167 : vector<1x8x8xf32> to vector<8x8xf32>
    %cst_126 = arith.constant dense<0.000000e+00> : vector<8x128xf32>
    %169 = tpu.matmul %168, %160, %cst_126 {dimension_numbers = #tpu.dot_dimension_numbers<[1], [0], [0], [1], [0, 0, 1, 1], [], []>} : vector<8x8xf32>, vector<8x128xf32>, vector<8x128xf32> -> vector<8x128xf32>
    %170 = arith.index_cast %165 : i32 to index
    %c0_127 = arith.constant 0 : index
    %c0_128 = arith.constant 0 : index
    %171 = vector.load %arg9[%170, %c0_127, %c0_128] : memref<8x8x128xf32, #tpu.memory_space<vmem>>, vector<1x8x128xf32>
    %172 = vector.shape_cast %171 : vector<1x8x128xf32> to vector<8x128xf32>
    %173 = arith.addf %169, %172 : vector<8x128xf32>
    %174 = arith.index_cast %165 : i32 to index
    %c0_129 = arith.constant 0 : index
    %c0_130 = arith.constant 0 : index
    %175 = vector.load %arg7[%174, %c0_129, %c0_130] : memref<8x8x128xf32, #tpu.memory_space<vmem>>, vector<1x8x128xf32>
    %176 = vector.shape_cast %175 : vector<1x8x128xf32> to vector<8x128xf32>
    %177 = vector.shape_cast %173 : vector<8x128xf32> to vector<1x8x128xf32>
    tpu.vector_store %arg7[%174, %c0_129, %c0_130], %177 {strides = array<i32>} : memref<8x8x128xf32, #tpu.memory_space<vmem>>, vector<1x8x128xf32>,
    %c5_i32_131 = arith.constant 5 : i32
    %c6_i32_132 = arith.constant 6 : i32
    %178 = arith.subi %c6_i32_132, %c5_i32_131 : i32
    %179 = arith.index_cast %178 : i32 to index
    %c0_133 = arith.constant 0 : index
    %c0_134 = arith.constant 0 : index
    %180 = vector.load %arg3[%179, %c0_133, %c0_134] : memref<7x8x8xf32, #tpu.memory_space<vmem>>, vector<1x8x8xf32>
    %181 = vector.shape_cast %180 : vector<1x8x8xf32> to vector<8x8xf32>
    %cst_135 = arith.constant dense<0.000000e+00> : vector<8x128xf32>
    %182 = tpu.matmul %181, %173, %cst_135 {dimension_numbers = #tpu.dot_dimension_numbers<[1], [0], [0], [1], [0, 0, 1, 1], [], []>} : vector<8x8xf32>, vector<8x128xf32>, vector<8x128xf32> -> vector<8x128xf32>
    %183 = arith.index_cast %178 : i32 to index
    %c0_136 = arith.constant 0 : index
    %c0_137 = arith.constant 0 : index
    %184 = vector.load %arg9[%183, %c0_136, %c0_137] : memref<8x8x128xf32, #tpu.memory_space<vmem>>, vector<1x8x128xf32>
    %185 = vector.shape_cast %184 : vector<1x8x128xf32> to vector<8x128xf32>
    %186 = arith.addf %182, %185 : vector<8x128xf32>
    %187 = arith.index_cast %178 : i32 to index
    %c0_138 = arith.constant 0 : index
    %c0_139 = arith.constant 0 : index
    %188 = vector.load %arg7[%187, %c0_138, %c0_139] : memref<8x8x128xf32, #tpu.memory_space<vmem>>, vector<1x8x128xf32>
    %189 = vector.shape_cast %188 : vector<1x8x128xf32> to vector<8x128xf32>
    %190 = vector.shape_cast %186 : vector<8x128xf32> to vector<1x8x128xf32>
    tpu.vector_store %arg7[%187, %c0_138, %c0_139], %190 {strides = array<i32>} : memref<8x8x128xf32, #tpu.memory_space<vmem>>, vector<1x8x128xf32>,
    %c6_i32_140 = arith.constant 6 : i32
    %c6_i32_141 = arith.constant 6 : i32
    %191 = arith.subi %c6_i32_141, %c6_i32_140 : i32
    %192 = arith.index_cast %191 : i32 to index
    %c0_142 = arith.constant 0 : index
    %c0_143 = arith.constant 0 : index
    %193 = vector.load %arg3[%192, %c0_142, %c0_143] : memref<7x8x8xf32, #tpu.memory_space<vmem>>, vector<1x8x8xf32>
    %194 = vector.shape_cast %193 : vector<1x8x8xf32> to vector<8x8xf32>
    %cst_144 = arith.constant dense<0.000000e+00> : vector<8x128xf32>
    %195 = tpu.matmul %194, %186, %cst_144 {dimension_numbers = #tpu.dot_dimension_numbers<[1], [0], [0], [1], [0, 0, 1, 1], [], []>} : vector<8x8xf32>, vector<8x128xf32>, vector<8x128xf32> -> vector<8x128xf32>
    %196 = arith.index_cast %191 : i32 to index
    %c0_145 = arith.constant 0 : index
    %c0_146 = arith.constant 0 : index
    %197 = vector.load %arg9[%196, %c0_145, %c0_146] : memref<8x8x128xf32, #tpu.memory_space<vmem>>, vector<1x8x128xf32>
    %198 = vector.shape_cast %197 : vector<1x8x128xf32> to vector<8x128xf32>
    %199 = arith.addf %195, %198 : vector<8x128xf32>
    %200 = arith.index_cast %191 : i32 to index
    %c0_147 = arith.constant 0 : index
    %c0_148 = arith.constant 0 : index
    %201 = vector.load %arg7[%200, %c0_147, %c0_148] : memref<8x8x128xf32, #tpu.memory_space<vmem>>, vector<1x8x128xf32>
    %202 = vector.shape_cast %201 : vector<1x8x128xf32> to vector<8x128xf32>
    %203 = vector.shape_cast %199 : vector<8x128xf32> to vector<1x8x128xf32>
    tpu.vector_store %arg7[%200, %c0_147, %c0_148], %203 {strides = array<i32>} : memref<8x8x128xf32, #tpu.memory_space<vmem>>, vector<1x8x128xf32>,
    %c7_i32_149 = arith.constant 7 : i32
    return
  }
  func.func @transform_0(%arg0: i32) -> (i32, i32, i32) {
    %c0_i32 = arith.constant 0 : i32
    %c0_i32_0 = arith.constant 0 : i32
    %c0_i32_1 = arith.constant 0 : i32
    return %c0_i32, %c0_i32_0, %arg0 : i32, i32, i32
  }
  func.func @transform_1(%arg0: i32) -> (i32, i32, i32) {
    %c0_i32 = arith.constant 0 : i32
    %c0_i32_0 = arith.constant 0 : i32
    %c0_i32_1 = arith.constant 0 : i32
    %c0_i32_2 = arith.constant 0 : i32
    return %c0_i32, %c0_i32_0, %c0_i32_1 : i32, i32, i32
  }
  func.func @transform_2(%arg0: i32) -> (i32, i32, i32) {
    %c0_i32 = arith.constant 0 : i32
    %c0_i32_0 = arith.constant 0 : i32
    %c0_i32_1 = arith.constant 0 : i32
    %c0_i32_2 = arith.constant 0 : i32
    return %c0_i32, %c0_i32_0, %c0_i32_1 : i32, i32, i32
  }
  func.func @transform_3(%arg0: i32) -> (i32, i32, i32) {
    %c0_i32 = arith.constant 0 : i32
    %c0_i32_0 = arith.constant 0 : i32
    %c0_i32_1 = arith.constant 0 : i32
    %c0_i32_2 = arith.constant 0 : i32
    return %c0_i32, %c0_i32_0, %c0_i32_1 : i32, i32, i32
  }
  func.func @transform_4(%arg0: i32) -> (i32, i32, i32) {
    %c0_i32 = arith.constant 0 : i32
    %c0_i32_0 = arith.constant 0 : i32
    %c0_i32_1 = arith.constant 0 : i32
    %c0_i32_2 = arith.constant 0 : i32
    return %c0_i32, %c0_i32_0, %c0_i32_1 : i32, i32, i32
  }
  func.func @transform_5(%arg0: i32) -> (i32, i32) {
    %c0_i32 = arith.constant 0 : i32
    %c0_i32_0 = arith.constant 0 : i32
    %c0_i32_1 = arith.constant 0 : i32
    return %c0_i32, %c0_i32_0 : i32, i32
  }
  func.func @transform_6(%arg0: i32) -> (i32, i32, i32) {
    %c0_i32 = arith.constant 0 : i32
    %c0_i32_0 = arith.constant 0 : i32
    %c0_i32_1 = arith.constant 0 : i32
    return %c0_i32, %c0_i32_0, %arg0 : i32, i32, i32
  }
  func.func @transform_7(%arg0: i32) -> (i32, i32, i32) {
    %c0_i32 = arith.constant 0 : i32
    %c0_i32_0 = arith.constant 0 : i32
    %c0_i32_1 = arith.constant 0 : i32
    return %c0_i32, %c0_i32_0, %arg0 : i32, i32, i32
  }
}

</mosaic_0001>

<llo_original>
// kernel: custom-call.11
$region0: #{custom-call.11}
  %s0 = inlined_call_operand.vmem [shape: f32[2,2], index: 0, kind: input, shape index: {}]
  %s1 = inlined_call_operand.vmem [shape: f32[2,2], index: 1, kind: input, shape index: {}]
  %s2 = inlined_call_operand.vmem [shape: f32[2,2], index: 2, kind: input, shape index: {}]
  %s3 = inlined_call_operand.vmem [shape: f32[2,2], index: 3, kind: input, shape index: {}]
  %s4 = inlined_call_operand.vmem [shape: f32[2], index: 4, kind: output, shape index: {0}]
  %s5 = inlined_call_operand.vmem [shape: f32[2], index: 5, kind: output, shape index: {1}]
  %s6 = inlined_call_operand.vmem [shape: f32[2,2], index: 6, kind: output, shape index: {2}]
  %s7 = inlined_call_operand.vmem [shape: f32[2,2], index: 7, kind: output, shape index: {3}]
  %s8 = inlined_call_operand.vmem [shape: f32[2,2], index: 8, kind: output, shape index: {4}]
  %s9 = inlined_call_operand.vmem [shape: f32[2,2], index: 9, kind: output, shape index: {5}]
  %10 = xla_tuple %s4, %s5, %s6, %s7, %s8, %s9
  $region1: #{custom-call.11} parent=0
    #allocation0 [shape = 'u8[4096]{0}', space=vmem, size = 0x1000, scoped, tag = 'operand span for operand 0']
    #allocation1 [shape = 'u8[1024]{0}', space=vmem, size = 0x400, scoped, tag = 'packed  for operand 0']
    #allocation2 [shape = 'u8[4096]{0}', space=vmem, size = 0x1000, scoped, tag = 'operand span for operand 1']
    #allocation3 [shape = 'u8[1024]{0}', space=vmem, size = 0x400, scoped, tag = 'packed  for operand 1']
    #allocation4 [shape = 'u8[4096]{0}', space=vmem, size = 0x1000, scoped, tag = 'operand span for operand 2']
    #allocation5 [shape = 'u8[1024]{0}', space=vmem, size = 0x400, scoped, tag = 'packed  for operand 2']
    #allocation6 [shape = 'u8[4096]{0}', space=vmem, size = 0x1000, scoped, tag = 'operand span for operand 3']
    #allocation7 [shape = 'u8[1024]{0}', space=vmem, size = 0x400, scoped, tag = 'packed  for operand 3']
    #allocation8 [shape = 'u8[4096]{0}', space=vmem, size = 0x1000, scoped, tag = 'operand span for operand 4']
    #allocation9 [shape = 'u8[512]{0}', space=vmem, size = 0x400, scoped, tag = 'packed  for operand 4']
    #allocation10 [shape = 'u8[4096]{0}', space=vmem, size = 0x1000, scoped, tag = 'operand span for operand 5']
    #allocation11 [shape = 'u8[512]{0}', space=vmem, size = 0x400, scoped, tag = 'packed  for operand 5']
    #allocation12 [shape = 'u8[4096]{0}', space=vmem, size = 0x1000, scoped, tag = 'operand span for operand 6']
    #allocation13 [shape = 'u8[1024]{0}', space=vmem, size = 0x400, scoped, tag = 'packed  for operand 6']
    #allocation14 [shape = 'u8[4096]{0}', space=vmem, size = 0x1000, scoped, tag = 'operand span for operand 7']
    #allocation15 [shape = 'u8[1024]{0}', space=vmem, size = 0x400, scoped, tag = 'packed  for operand 7']
    #allocation16 [shape = 'u8[4096]{0}', space=vmem, size = 0x1000, scoped, tag = 'operand span for operand 8']
    #allocation17 [shape = 'u8[1024]{0}', space=vmem, size = 0x400, scoped, tag = 'packed  for operand 8']
    #allocation18 [shape = 'u8[4096]{0}', space=vmem, size = 0x1000, scoped, tag = 'operand span for operand 9']
    #allocation19 [shape = 'u8[1024]{0}', space=vmem, size = 0x400, scoped, tag = 'packed  for operand 9']
    #allocation20 [shape = 'f32[2,2]{1,0}', space=vmem, size = 0x1000, scoped, tag = 'a top-left matrix']
    #allocation21 [shape = 'f32[2,2]{1,0}', space=vmem, size = 0x1000, scoped, tag = 'a top-right matrix']
    #allocation22 [shape = 'f32[2,2]{1,0}', space=vmem, size = 0x1000, scoped, tag = 'a bottom-left matrix']
    #allocation23 [shape = 'f32[2,2]{1,0}', space=vmem, size = 0x1000, scoped, tag = 'a bottom-right matrix']
    %p12 = scmp.gt.s32.totalorder 2, 0
    // Predicated region
    $region2: #{custom-call.11} parent=1 // pred_check
      %p13 = pneg %p12
    $region3: #{custom-call.11} parent=1 // pred_check_branch
      %15 = sbr.rel (%p13) target = $region5
    $region4: #{custom-call.11} parent=1 // pred_region
      %s16 = sshra.s32 2, 3
      %p17 = scmp.gt.s32.totalorder %s16, 0
      // Predicated region
      $region6: #{custom-call.11} parent=4 // pred_check
        %p18 = pneg %p17
      $region7: #{custom-call.11} parent=4 // pred_check_branch
        %20 = sbr.rel (%p18) target = $region9
      $region8: #{custom-call.11} parent=4 // pred_region
        %s21 = ssub.s32 %s16, 1
        %s22 = smul.u32 %s21, 128
        %s23 = sshra.s32 %s22, 4
        %s24 = scalar_lea.vmem %s0, %s23
        %v25 = vld [vmem:[%s0] sm:$0xff]
        // While loop
        $region10: #{custom-call.11} parent=8 // loop_pre_header
          _
        $region11: #{custom-call.11} parent=8 // loop_header
          %s26 = sphi %s0, %s48
          %s27 = sphi [#allocation1], %s49
          %v28 = vphi %v25, %v50
          %s29 = ssub.s32 %s24, 64
          %p30 = scmp.gt.s32.totalorder %s26, %s29
        $region12: #{custom-call.11} parent=8 // loop_header_branch
          %32 = sbr.rel (%p30) target = $region16
        $region13: #{custom-call.11} parent=8 // loop_body
          %33 = vst [vmem:[%s27] sm:$0xff] %v28
          %v34 = vld [vmem:[%s26 + $0x8] sm:$0xff]
          %35 = vst [vmem:[%s27 + $0x8] sm:$0xff] %v34
          %v36 = vld [vmem:[%s26 + $0x10] sm:$0xff]
          %37 = vst [vmem:[%s27 + $0x10] sm:$0xff] %v36
          %v38 = vld [vmem:[%s26 + $0x18] sm:$0xff]
          %39 = vst [vmem:[%s27 + $0x18] sm:$0xff] %v38
          %v40 = vld [vmem:[%s26 + $0x20] sm:$0xff]
          %41 = vst [vmem:[%s27 + $0x20] sm:$0xff] %v40
          %v42 = vld [vmem:[%s26 + $0x28] sm:$0xff]
          %43 = vst [vmem:[%s27 + $0x28] sm:$0xff] %v42
          %v44 = vld [vmem:[%s26 + $0x30] sm:$0xff]
          %45 = vst [vmem:[%s27 + $0x30] sm:$0xff] %v44
          %v46 = vld [vmem:[%s26 + $0x38] sm:$0xff]
          %47 = vst [vmem:[%s27 + $0x38] sm:$0xff] %v46
        $region14: #{custom-call.11} parent=8 // loop_footer
          %s48 = scalar_lea.vmem %s26, 64
          %s49 = scalar_lea.vmem %s27, 64
          %v50 = vld [vmem:[%s26 + $0x40] sm:$0xff]
        $region15: #{custom-call.11} parent=8 // loop_footer_branch
          %51 = sbr.rel target = $region11
        $region16: #{custom-call.11} parent=8 // loop_exit
          _
        // While loop
        $region17: #{custom-call.11} parent=8 // loop_pre_header
          _
        $region18: #{custom-call.11} parent=8 // loop_header
          %s52 = sphi %s26, %s60
          %s53 = sphi %s27, %s61
          %v54 = vphi %v28, %v54
          %p55 = scmp.gt.s32.totalorder %s52, %s24
        $region19: #{custom-call.11} parent=8 // loop_header_branch
          %57 = sbr.rel (%p55) target = $region23
        $region20: #{custom-call.11} parent=8 // loop_body
          %v58 = vld [vmem:[%s52] sm:$0xff]
          %59 = vst [vmem:[%s53] sm:$0xff] %v58
        $region21: #{custom-call.11} parent=8 // loop_footer
          %s60 = scalar_lea.vmem %s52, 8
          %s61 = scalar_lea.vmem %s53, 8
        $region22: #{custom-call.11} parent=8 // loop_footer_branch
          %62 = sbr.rel target = $region18
        $region23: #{custom-call.11} parent=8 // loop_exit
          _
      $region9: #{custom-call.11} parent=4 // pred_fallthru
        _
      %s63 = sand.u32 2, 7
      %s64 = sshllo.u32 0, %s63
      %s65 = smul.u32 %s16, 128
      %s66 = sshra.s32 %s65, 4
      %s67 = scalar_lea.vmem [#allocation1], %s66
      %s68 = smul.u32 %s16, 128
      %s69 = sshra.s32 %s68, 4
      %s70 = scalar_lea.vmem %s0, %s69
      %v71 = vld [vmem:[%s70] sm:%s64]
      %72 = vst [vmem:[%s67] sm:%s64] %v71
    $region5: #{custom-call.11} parent=1 // pred_fallthru
      _
    %p74 = scmp.gt.s32.totalorder 2, 0
    // Predicated region
    $region24: #{custom-call.11} parent=1 // pred_check
      %p75 = pneg %p74
    $region25: #{custom-call.11} parent=1 // pred_check_branch
      %77 = sbr.rel (%p75) target = $region27
    $region26: #{custom-call.11} parent=1 // pred_region
      %s78 = sshra.s32 2, 3
      %p79 = scmp.gt.s32.totalorder %s78, 0
      // Predicated region
      $region28: #{custom-call.11} parent=26 // pred_check
        %p80 = pneg %p79
      $region29: #{custom-call.11} parent=26 // pred_check_branch
        %82 = sbr.rel (%p80) target = $region31
      $region30: #{custom-call.11} parent=26 // pred_region
        %s83 = ssub.s32 %s78, 1
        %s84 = smul.u32 %s83, 128
        %s85 = sshra.s32 %s84, 4
        %s86 = scalar_lea.vmem %s1, %s85
        %v87 = vld [vmem:[%s1] sm:$0xff]
        // While loop
        $region32: #{custom-call.11} parent=30 // loop_pre_header
          _
        $region33: #{custom-call.11} parent=30 // loop_header
          %s88 = sphi %s1, %s110
          %s89 = sphi [#allocation3], %s111
          %v90 = vphi %v87, %v112
          %s91 = ssub.s32 %s86, 64
          %p92 = scmp.gt.s32.totalorder %s88, %s91
        $region34: #{custom-call.11} parent=30 // loop_header_branch
          %94 = sbr.rel (%p92) target = $region38
        $region35: #{custom-call.11} parent=30 // loop_body
          %95 = vst [vmem:[%s89] sm:$0xff] %v90
          %v96 = vld [vmem:[%s88 + $0x8] sm:$0xff]
          %97 = vst [vmem:[%s89 + $0x8] sm:$0xff] %v96
          %v98 = vld [vmem:[%s88 + $0x10] sm:$0xff]
          %99 = vst [vmem:[%s89 + $0x10] sm:$0xff] %v98
          %v100 = vld [vmem:[%s88 + $0x18] sm:$0xff]
          %101 = vst [vmem:[%s89 + $0x18] sm:$0xff] %v100
          %v102 = vld [vmem:[%s88 + $0x20] sm:$0xff]
          %103 = vst [vmem:[%s89 + $0x20] sm:$0xff] %v102
          %v104 = vld [vmem:[%s88 + $0x28] sm:$0xff]
          %105 = vst [vmem:[%s89 + $0x28] sm:$0xff] %v104
          %v106 = vld [vmem:[%s88 + $0x30] sm:$0xff]
          %107 = vst [vmem:[%s89 + $0x30] sm:$0xff] %v106
          %v108 = vld [vmem:[%s88 + $0x38] sm:$0xff]
          %109 = vst [vmem:[%s89 + $0x38] sm:$0xff] %v108
        $region36: #{custom-call.11} parent=30 // loop_footer
          %s110 = scalar_lea.vmem %s88, 64
          %s111 = scalar_lea.vmem %s89, 64
          %v112 = vld [vmem:[%s88 + $0x40] sm:$0xff]
        $region37: #{custom-call.11} parent=30 // loop_footer_branch
          %113 = sbr.rel target = $region33
        $region38: #{custom-call.11} parent=30 // loop_exit
          _
        // While loop
        $region39: #{custom-call.11} parent=30 // loop_pre_header
          _
        $region40: #{custom-call.11} parent=30 // loop_header
          %s114 = sphi %s88, %s122
          %s115 = sphi %s89, %s123
          %v116 = vphi %v90, %v116
          %p117 = scmp.gt.s32.totalorder %s114, %s86
        $region41: #{custom-call.11} parent=30 // loop_header_branch
          %119 = sbr.rel (%p117) target = $region45
        $region42: #{custom-call.11} parent=30 // loop_body
          %v120 = vld [vmem:[%s114] sm:$0xff]
          %121 = vst [vmem:[%s115] sm:$0xff] %v120
        $region43: #{custom-call.11} parent=30 // loop_footer
          %s122 = scalar_lea.vmem %s114, 8
          %s123 = scalar_lea.vmem %s115, 8
        $region44: #{custom-call.11} parent=30 // loop_footer_branch
          %124 = sbr.rel target = $region40
        $region45: #{custom-call.11} parent=30 // loop_exit
          _
      $region31: #{custom-call.11} parent=26 // pred_fallthru
        _
      %s125 = sand.u32 2, 7
      %s126 = sshllo.u32 0, %s125
      %s127 = smul.u32 %s78, 128
      %s128 = sshra.s32 %s127, 4
      %s129 = scalar_lea.vmem [#allocation3], %s128
      %s130 = smul.u32 %s78, 128
      %s131 = sshra.s32 %s130, 4
      %s132 = scalar_lea.vmem %s1, %s131
      %v133 = vld [vmem:[%s132] sm:%s126]
      %134 = vst [vmem:[%s129] sm:%s126] %v133
    $region27: #{custom-call.11} parent=1 // pred_fallthru
      _
    %p136 = scmp.gt.s32.totalorder 2, 0
    // Predicated region
    $region46: #{custom-call.11} parent=1 // pred_check
      %p137 = pneg %p136
    $region47: #{custom-call.11} parent=1 // pred_check_branch
      %139 = sbr.rel (%p137) target = $region49
    $region48: #{custom-call.11} parent=1 // pred_region
      %s140 = sshra.s32 2, 3
      %p141 = scmp.gt.s32.totalorder %s140, 0
      // Predicated region
      $region50: #{custom-call.11} parent=48 // pred_check
        %p142 = pneg %p141
      $region51: #{custom-call.11} parent=48 // pred_check_branch
        %144 = sbr.rel (%p142) target = $region53
      $region52: #{custom-call.11} parent=48 // pred_region
        %s145 = ssub.s32 %s140, 1
        %s146 = smul.u32 %s145, 128
        %s147 = sshra.s32 %s146, 4
        %s148 = scalar_lea.vmem %s2, %s147
        %v149 = vld [vmem:[%s2] sm:$0xff]
        // While loop
        $region54: #{custom-call.11} parent=52 // loop_pre_header
          _
        $region55: #{custom-call.11} parent=52 // loop_header
          %s150 = sphi %s2, %s172
          %s151 = sphi [#allocation5], %s173
          %v152 = vphi %v149, %v174
          %s153 = ssub.s32 %s148, 64
          %p154 = scmp.gt.s32.totalorder %s150, %s153
        $region56: #{custom-call.11} parent=52 // loop_header_branch
          %156 = sbr.rel (%p154) target = $region60
        $region57: #{custom-call.11} parent=52 // loop_body
          %157 = vst [vmem:[%s151] sm:$0xff] %v152
          %v158 = vld [vmem:[%s150 + $0x8] sm:$0xff]
          %159 = vst [vmem:[%s151 + $0x8] sm:$0xff] %v158
          %v160 = vld [vmem:[%s150 + $0x10] sm:$0xff]
          %161 = vst [vmem:[%s151 + $0x10] sm:$0xff] %v160
          %v162 = vld [vmem:[%s150 + $0x18] sm:$0xff]
          %163 = vst [vmem:[%s151 + $0x18] sm:$0xff] %v162
          %v164 = vld [vmem:[%s150 + $0x20] sm:$0xff]
          %165 = vst [vmem:[%s151 + $0x20] sm:$0xff] %v164
          %v166 = vld [vmem:[%s150 + $0x28] sm:$0xff]
          %167 = vst [vmem:[%s151 + $0x28] sm:$0xff] %v166
          %v168 = vld [vmem:[%s150 + $0x30] sm:$0xff]
          %169 = vst [vmem:[%s151 + $0x30] sm:$0xff] %v168
          %v170 = vld [vmem:[%s150 + $0x38] sm:$0xff]
          %171 = vst [vmem:[%s151 + $0x38] sm:$0xff] %v170
        $region58: #{custom-call.11} parent=52 // loop_footer
          %s172 = scalar_lea.vmem %s150, 64
          %s173 = scalar_lea.vmem %s151, 64
          %v174 = vld [vmem:[%s150 + $0x40] sm:$0xff]
        $region59: #{custom-call.11} parent=52 // loop_footer_branch
          %175 = sbr.rel target = $region55
        $region60: #{custom-call.11} parent=52 // loop_exit
          _
        // While loop
        $region61: #{custom-call.11} parent=52 // loop_pre_header
          _
        $region62: #{custom-call.11} parent=52 // loop_header
          %s176 = sphi %s150, %s184
          %s177 = sphi %s151, %s185
          %v178 = vphi %v152, %v178
          %p179 = scmp.gt.s32.totalorder %s176, %s148
        $region63: #{custom-call.11} parent=52 // loop_header_branch
          %181 = sbr.rel (%p179) target = $region67
        $region64: #{custom-call.11} parent=52 // loop_body
          %v182 = vld [vmem:[%s176] sm:$0xff]
          %183 = vst [vmem:[%s177] sm:$0xff] %v182
        $region65: #{custom-call.11} parent=52 // loop_footer
          %s184 = scalar_lea.vmem %s176, 8
          %s185 = scalar_lea.vmem %s177, 8
        $region66: #{custom-call.11} parent=52 // loop_footer_branch
          %186 = sbr.rel target = $region62
        $region67: #{custom-call.11} parent=52 // loop_exit
          _
      $region53: #{custom-call.11} parent=48 // pred_fallthru
        _
      %s187 = sand.u32 2, 7
      %s188 = sshllo.u32 0, %s187
      %s189 = smul.u32 %s140, 128
      %s190 = sshra.s32 %s189, 4
      %s191 = scalar_lea.vmem [#allocation5], %s190
      %s192 = smul.u32 %s140, 128
      %s193 = sshra.s32 %s192, 4
      %s194 = scalar_lea.vmem %s2, %s193
      %v195 = vld [vmem:[%s194] sm:%s188]
      %196 = vst [vmem:[%s191] sm:%s188] %v195
    $region49: #{custom-call.11} parent=1 // pred_fallthru
      _
    %p198 = scmp.gt.s32.totalorder 2, 0
    // Predicated region
    $region68: #{custom-call.11} parent=1 // pred_check
      %p199 = pneg %p198
    $region69: #{custom-call.11} parent=1 // pred_check_branch
      %201 = sbr.rel (%p199) target = $region71
    $region70: #{custom-call.11} parent=1 // pred_region
      %s202 = sshra.s32 2, 3
      %p203 = scmp.gt.s32.totalorder %s202, 0
      // Predicated region
      $region72: #{custom-call.11} parent=70 // pred_check
        %p204 = pneg %p203
      $region73: #{custom-call.11} parent=70 // pred_check_branch
        %206 = sbr.rel (%p204) target = $region75
      $region74: #{custom-call.11} parent=70 // pred_region
        %s207 = ssub.s32 %s202, 1
        %s208 = smul.u32 %s207, 128
        %s209 = sshra.s32 %s208, 4
        %s210 = scalar_lea.vmem %s3, %s209
        %v211 = vld [vmem:[%s3] sm:$0xff]
        // While loop
        $region76: #{custom-call.11} parent=74 // loop_pre_header
          _
        $region77: #{custom-call.11} parent=74 // loop_header
          %s212 = sphi %s3, %s234
          %s213 = sphi [#allocation7], %s235
          %v214 = vphi %v211, %v236
          %s215 = ssub.s32 %s210, 64
          %p216 = scmp.gt.s32.totalorder %s212, %s215
        $region78: #{custom-call.11} parent=74 // loop_header_branch
          %218 = sbr.rel (%p216) target = $region82
        $region79: #{custom-call.11} parent=74 // loop_body
          %219 = vst [vmem:[%s213] sm:$0xff] %v214
          %v220 = vld [vmem:[%s212 + $0x8] sm:$0xff]
          %221 = vst [vmem:[%s213 + $0x8] sm:$0xff] %v220
          %v222 = vld [vmem:[%s212 + $0x10] sm:$0xff]
          %223 = vst [vmem:[%s213 + $0x10] sm:$0xff] %v222
          %v224 = vld [vmem:[%s212 + $0x18] sm:$0xff]
          %225 = vst [vmem:[%s213 + $0x18] sm:$0xff] %v224
          %v226 = vld [vmem:[%s212 + $0x20] sm:$0xff]
          %227 = vst [vmem:[%s213 + $0x20] sm:$0xff] %v226
          %v228 = vld [vmem:[%s212 + $0x28] sm:$0xff]
          %229 = vst [vmem:[%s213 + $0x28] sm:$0xff] %v228
          %v230 = vld [vmem:[%s212 + $0x30] sm:$0xff]
          %231 = vst [vmem:[%s213 + $0x30] sm:$0xff] %v230
          %v232 = vld [vmem:[%s212 + $0x38] sm:$0xff]
          %233 = vst [vmem:[%s213 + $0x38] sm:$0xff] %v232
        $region80: #{custom-call.11} parent=74 // loop_footer
          %s234 = scalar_lea.vmem %s212, 64
          %s235 = scalar_lea.vmem %s213, 64
          %v236 = vld [vmem:[%s212 + $0x40] sm:$0xff]
        $region81: #{custom-call.11} parent=74 // loop_footer_branch
          %237 = sbr.rel target = $region77
        $region82: #{custom-call.11} parent=74 // loop_exit
          _
        // While loop
        $region83: #{custom-call.11} parent=74 // loop_pre_header
          _
        $region84: #{custom-call.11} parent=74 // loop_header
          %s238 = sphi %s212, %s246
          %s239 = sphi %s213, %s247
          %v240 = vphi %v214, %v240
          %p241 = scmp.gt.s32.totalorder %s238, %s210
        $region85: #{custom-call.11} parent=74 // loop_header_branch
          %243 = sbr.rel (%p241) target = $region89
        $region86: #{custom-call.11} parent=74 // loop_body
          %v244 = vld [vmem:[%s238] sm:$0xff]
          %245 = vst [vmem:[%s239] sm:$0xff] %v244
        $region87: #{custom-call.11} parent=74 // loop_footer
          %s246 = scalar_lea.vmem %s238, 8
          %s247 = scalar_lea.vmem %s239, 8
        $region88: #{custom-call.11} parent=74 // loop_footer_branch
          %248 = sbr.rel target = $region84
        $region89: #{custom-call.11} parent=74 // loop_exit
          _
      $region75: #{custom-call.11} parent=70 // pred_fallthru
        _
      %s249 = sand.u32 2, 7
      %s250 = sshllo.u32 0, %s249
      %s251 = smul.u32 %s202, 128
      %s252 = sshra.s32 %s251, 4
      %s253 = scalar_lea.vmem [#allocation7], %s252
      %s254 = smul.u32 %s202, 128
      %s255 = sshra.s32 %s254, 4
      %s256 = scalar_lea.vmem %s3, %s255
      %v257 = vld [vmem:[%s256] sm:%s250]
      %258 = vst [vmem:[%s253] sm:%s250] %v257
    $region71: #{custom-call.11} parent=1 // pred_fallthru
      _
    %s260 = sshllo.u32 0, 2
    %v261 = vld [vmem:[#allocation1] sm:%s260]
    %262 = vst [vmem:[#allocation0] sm:%s260] %v261
    %s264 = sshllo.u32 0, 2
    %v265 = vld [vmem:[#allocation3] sm:%s264]
    %266 = vst [vmem:[#allocation2] sm:%s264] %v265
    %s268 = sshllo.u32 0, 2
    %v269 = vld [vmem:[#allocation5] sm:%s268]
    %270 = vst [vmem:[#allocation4] sm:%s268] %v269
    %s272 = sshllo.u32 0, 2
    %v273 = vld [vmem:[#allocation7] sm:%s272]
    %274 = vst [vmem:[#allocation6] sm:%s272] %v273
    %s275 = smov [#allocation20]
    %v276 = vld [vmem:[#allocation0] sm:$0xff]
    %277 = vst [vmem:[%s275] sm:$0xff] %v276
    %s278 = smov [#allocation21]
    %v279 = vld [vmem:[#allocation2] sm:$0xff]
    %280 = vst [vmem:[%s278] sm:$0xff] %v279
    %s281 = smov [#allocation22]
    %v282 = vld [vmem:[#allocation4] sm:$0xff]
    %283 = vst [vmem:[%s281] sm:$0xff] %v282
    %s284 = smov [#allocation23]
    %v285 = vld [vmem:[#allocation6] sm:$0xff]
    %286 = vst [vmem:[%s284] sm:$0xff] %v285
    %287 = vst [vmem:[#allocation12] sm:$0xff] 0.0
    %288 = vst [vmem:[#allocation14] sm:$0xff] 0.0
    %289 = vst [vmem:[#allocation16] sm:$0xff] 0.0
    %290 = vst [vmem:[#allocation18] sm:$0xff] 0.0
    %s291 = smov [#allocation12]
    %v292 = vlaneseq
    %v293 = vand.u32 %v292, 127
    %v294 = vmov %v293
    %v295 = vlaneseq
    %v296 = vshrl.u32 %v295, 7
    %v297 = vmov %v296
    %v298 = vld [vmem:[%s291] sm:$0x3]
    %vm301 = vcmp.eq.s32.totalorder %v297, %v294
    %v302 = vsel %vm301, 1.0, %v298
    %303 = vst [vmem:[%s291] sm:$0x3] %v302
    %s304 = smov [#allocation18]
    %v305 = vlaneseq
    %v306 = vand.u32 %v305, 127
    %v307 = vmov %v306
    %v308 = vlaneseq
    %v309 = vshrl.u32 %v308, 7
    %v310 = vmov %v309
    %v311 = vld [vmem:[%s304] sm:$0x3]
    %vm314 = vcmp.eq.s32.totalorder %v310, %v307
    %v315 = vsel %vm314, 1.0, %v311
    %316 = vst [vmem:[%s304] sm:$0x3] %v315
    // While loop
    $region90: #{custom-call.11} parent=1 // loop_pre_header
      _
    $region91: #{custom-call.11} parent=1 // loop_header
      %s318 = sphi 0, %s860
      %v319 = vlaneseq
      %v320 = vand.u32 %v319, 127
      %v321 = vmov %v320
      %v322 = vlaneseq
      %v323 = vshrl.u32 %v322, 7
      %v324 = vmov %v323
      %s325 = smov [#allocation20]
      %v326 = vlaneseq
      %v327 = vand.u32 %v326, 127
      %vm328 = vcmp.ge.s32.totalorder %v327, 0
      %vm329 = vcmp.lt.s32.totalorder %v327, 2
      %vm330 = vmand %vm328, %vm329
      %v331 = vld [vmem:[%s325] sm:$0x3]
      %v332 = vsel %vm330, %v331, 0.0
      %v333 = vmul.f32 %v332, %v332
      %vm336 = vcmp.eq.s32.totalorder %v324, %v321
      %v337 = vsel %vm336, 0.0, %v333
      %v338 = vlaneseq
      %v339 = vand.u32 %v338, 127
      %v340 = vmov %v339
      %v341 = vlaneseq
      %v342 = vshrl.u32 %v341, 7
      %v343 = vmov %v342
      %s344 = smov [#allocation21]
      %v345 = vlaneseq
      %v346 = vand.u32 %v345, 127
      %vm347 = vcmp.ge.s32.totalorder %v346, 0
      %vm348 = vcmp.lt.s32.totalorder %v346, 2
      %vm349 = vmand %vm347, %vm348
      %v350 = vld [vmem:[%s344] sm:$0x3]
      %v351 = vsel %vm349, %v350, 0.0
      %v352 = vmul.f32 %v351, %v351
      %v353 = vadd.f32 %v337, %v352
      %v354 = vadd.f32 %v333, %v352
      %v355 = vlaneseq
      %v356 = vand.u32 %v355, 127
      %v357 = vmov %v356
      %v358 = vlaneseq
      %v359 = vshrl.u32 %v358, 7
      %v360 = vmov %v359
      %s361 = smov [#allocation22]
      %v362 = vlaneseq
      %v363 = vand.u32 %v362, 127
      %vm364 = vcmp.ge.s32.totalorder %v363, 0
      %vm365 = vcmp.lt.s32.totalorder %v363, 2
      %vm366 = vmand %vm364, %vm365
      %v367 = vld [vmem:[%s361] sm:$0x3]
      %v368 = vsel %vm366, %v367, 0.0
      %v369 = vmul.f32 %v368, %v368
      %v370 = vadd.f32 %v353, %v369
      %v371 = vadd.f32 %v354, %v369
      %v372 = vlaneseq
      %v373 = vand.u32 %v372, 127
      %v374 = vmov %v373
      %v375 = vlaneseq
      %v376 = vshrl.u32 %v375, 7
      %v377 = vmov %v376
      %s378 = smov [#allocation23]
      %v379 = vlaneseq
      %v380 = vand.u32 %v379, 127
      %vm381 = vcmp.ge.s32.totalorder %v380, 0
      %vm382 = vcmp.lt.s32.totalorder %v380, 2
      %vm383 = vmand %vm381, %vm382
      %v384 = vld [vmem:[%s378] sm:$0x3]
      %v385 = vsel %vm383, %v384, 0.0
      %v386 = vmul.f32 %v385, %v385
      %vm389 = vcmp.eq.s32.totalorder %v377, %v374
      %v390 = vsel %vm389, 0.0, %v386
      %v391 = vadd.f32 %v370, %v390
      %v392 = vadd.f32 %v371, %v386
      %393 = vadd.xlane.f32.xlu0 %v392
      %v394 = vpop.xlane.xlu0 %393
      %v395 = vrot.slane %v394, 4
      %v396 = vadd.f32 %v394, %v395
      %v397 = vrot.slane %v396, 2
      %v398 = vadd.f32 %v396, %v397
      %v399 = vrot.slane %v398, 1
      %v400 = vadd.f32 %v398, %v399
      %401 = vadd.xlane.f32.xlu0 %v391
      %v402 = vpop.xlane.xlu0 %401
      %v403 = vrot.slane %v402, 4
      %v404 = vadd.f32 %v402, %v403
      %v405 = vrot.slane %v404, 2
      %v406 = vadd.f32 %v404, %v405
      %v407 = vrot.slane %v406, 1
      %v408 = vadd.f32 %v406, %v407
      %s409 = vtos %v408
      %s410 = vtos %v400
      %s411 = smul.f32 1e-10, %s410
      %p412 = scmp.le.f32.partialorder %s409, %s411
      %p413 = scmp.ge.s32.totalorder %s318, 15
      %p414 = por %p412, %p413
    $region92: #{custom-call.11} parent=1 // loop_header_branch
      %862 = sbr.rel (%p414) target = $region96
    $region93: #{custom-call.11} parent=1 // loop_body
      loop: start=0, step=1, limit=3
      $region97: #{custom-call.11} parent=93 // loop_pre_header
        _
      $region98: #{custom-call.11} parent=93 // loop_header
        %s416 = sphi 0, %s420
        %p417 = scmp.ge.s32.totalorder %s416, 3
      $region99: #{custom-call.11} parent=93 // loop_header_branch
        %419 = sbr.rel (%p417) target = $region103
      $region100: #{custom-call.11} parent=93 // loop_body
        #allocation24 [shape = 'f32[1024]{0}', space=vmem, size = 0x1000, scoped, tag = 'a_tl_diag vmem']
        #allocation25 [shape = 'f32[1024]{0}', space=vmem, size = 0x1000, scoped, tag = 'a_tr_diag vmem']
        #allocation26 [shape = 'f32[1024]{0}', space=vmem, size = 0x1000, scoped, tag = 'a_br_diag vmem']
        #allocation27 [shape = 'f32[1024]{0}', space=vmem, size = 0x1000, scoped, tag = 'rt1 vmem']
        #allocation28 [shape = 'f32[1024]{0}', space=vmem, size = 0x1000, scoped, tag = 'rt2 vmem']
        #allocation29 [shape = 'f32[1024]{0}', space=vmem, size = 0x1000, scoped, tag = 'c vmem']
        #allocation30 [shape = 'f32[1024]{0}', space=vmem, size = 0x1000, scoped, tag = 's vmem']
        #allocation31 [shape = 'f32[4096]{0}', space=vmem, size = 0x4000, scoped, tag = 'c broadcast']
        #allocation32 [shape = 'f32[4096]{0}', space=vmem, size = 0x4000, scoped, tag = 's broadcast']
        %s421 = smov [#allocation20]
        %s422 = smov [#allocation24]
        %v423 = vlaneseq
        %v424 = vand.u32 %v423, 127
        %v425 = vmov %v424
        %v426 = vlaneseq
        %v427 = vshrl.u32 %v426, 7
        %v428 = vmov %v427
        %v429 = vld [vmem:[%s421] sm:$0x3]
        %vm432 = vcmp.eq.s32.totalorder %v428, %v425
        %v433 = vsel %vm432, %v429, 0.0
        %v434 = vrot.slane %v433, 4
        %v435 = vadd.f32 %v433, %v434
        %v436 = vrot.slane %v435, 2
        %v437 = vadd.f32 %v435, %v436
        %v438 = vrot.slane %v437, 1
        %v439 = vadd.f32 %v437, %v438
        %440 = vst [vmem:[%s422] sm:$0x1] %v439
        %s441 = smov [#allocation21]
        %s442 = smov [#allocation25]
        %v443 = vlaneseq
        %v444 = vand.u32 %v443, 127
        %v445 = vmov %v444
        %v446 = vlaneseq
        %v447 = vshrl.u32 %v446, 7
        %v448 = vmov %v447
        %v449 = vld [vmem:[%s441] sm:$0x3]
        %vm452 = vcmp.eq.s32.totalorder %v448, %v445
        %v453 = vsel %vm452, %v449, 0.0
        %v454 = vrot.slane %v453, 4
        %v455 = vadd.f32 %v453, %v454
        %v456 = vrot.slane %v455, 2
        %v457 = vadd.f32 %v455, %v456
        %v458 = vrot.slane %v457, 1
        %v459 = vadd.f32 %v457, %v458
        %460 = vst [vmem:[%s442] sm:$0x1] %v459
        %s461 = smov [#allocation23]
        %s462 = smov [#allocation26]
        %v463 = vlaneseq
        %v464 = vand.u32 %v463, 127
        %v465 = vmov %v464
        %v466 = vlaneseq
        %v467 = vshrl.u32 %v466, 7
        %v468 = vmov %v467
        %v469 = vld [vmem:[%s461] sm:$0x3]
        %vm472 = vcmp.eq.s32.totalorder %v468, %v465
        %v473 = vsel %vm472, %v469, 0.0
        %v474 = vrot.slane %v473, 4
        %v475 = vadd.f32 %v473, %v474
        %v476 = vrot.slane %v475, 2
        %v477 = vadd.f32 %v475, %v476
        %v478 = vrot.slane %v477, 1
        %v479 = vadd.f32 %v477, %v478
        %480 = vst [vmem:[%s462] sm:$0x1] %v479
        %s481 = smov [#allocation29]
        %s482 = smov [#allocation30]
        %s483 = smov [#allocation24]
        %v484 = vld [vmem:[%s483] sm:$0xff]
        %s485 = smov [#allocation25]
        %v486 = vld [vmem:[%s485] sm:$0xff]
        %s487 = smov [#allocation26]
        %v488 = vld [vmem:[%s487] sm:$0xff]
        %v489 = vsub.f32 %v488, %v484
        %v490 = vmul.f32 2.0, %v486
        %v491 = vrcp.pop %v490
        %v492 = vmul.f32 %v489, %v491
        %vm493 = vcmp.ge.f32.partialorder %v492, 0.0
        %v494 = vmul.f32 %v492, %v492
        %v495 = vadd.f32 1.0, %v494
        %v496 = vrsqrt.pop %v495
        %v497 = vmul.f32 %v495, %v496
        %vm498 = vcmp.eq.f32.partialorder %v495, inf
        %v499 = vsel %vm498, %v495, %v497
        %vm500 = vcmp.eq.f32.partialorder %v495, 0.0
        %v501 = vand.u32 %v495, 2147483648
        %v502 = vsel %vm500, %v501, %v499
        %v503 = vxor.u32 %v502, 2147483648
        %v504 = vsel %vm493, %v502, %v503
        %v505 = vadd.f32 %v492, %v504
        %v506 = vrcp.pop %v505
        %v507 = vand.u32 2147483647, %v484
        %v508 = vand.u32 2147483647, %v486
        %v509 = vand.u32 2147483647, %v488
        %v510 = vmin.f32 %v507, %v509
        %v511 = vmul.f32 1.1920929e-08, %v510
        %vm512 = vcmp.le.f32.partialorder %v508, %v511
        %v513 = vsel %vm512, 0.0, %v506
        %v514 = vmul.f32 %v513, %v513
        %v515 = vadd.f32 1.0, %v514
        %v516 = vrsqrt.pop %v515
        %v517 = vmul.f32 %v513, %v516
        %v518 = vmul.f32 %v513, %v486
        %v519 = vsub.f32 %v484, %v518
        %v520 = vmul.f32 %v513, %v486
        %v521 = vadd.f32 %v488, %v520
        %s522 = smov [#allocation27]
        %523 = vst [vmem:[%s522] sm:$0xff] %v519
        %s524 = smov [#allocation28]
        %525 = vst [vmem:[%s524] sm:$0xff] %v521
        %s526 = smov %s481
        %527 = vst [vmem:[%s526] sm:$0xff] %v516
        %s528 = smov %s482
        %529 = vst [vmem:[%s528] sm:$0xff] %v517
        %s530 = smov [#allocation29]
        %v531 = vld [vmem:[%s530] ss:$0 sm:$0xff]
        %v532 = vlaneseq
        %v533 = vand.u32 %v532, 127
        %v534 = vmov %v533
        %v535 = vlaneseq
        %v536 = vshrl.u32 %v535, 7
        %v537 = vmov %v536
        %vm539 = vcmp.eq.s32.totalorder %v537, %v534
        %v540 = vsel %vm539, %v531, 0.0
        %541 = vadd.xlane.f32.xlu0 %v540
        %v542 = vpop.xlane.xlu0 %541
        %s543 = smov [#allocation31]
        %544 = vst [vmem:[%s543] sm:$0xff] %v542
        %s545 = smov [#allocation30]
        %v546 = vld [vmem:[%s545] ss:$0 sm:$0xff]
        %v547 = vlaneseq
        %v548 = vand.u32 %v547, 127
        %v549 = vmov %v548
        %v550 = vlaneseq
        %v551 = vshrl.u32 %v550, 7
        %v552 = vmov %v551
        %vm554 = vcmp.eq.s32.totalorder %v552, %v549
        %v555 = vsel %vm554, %v546, 0.0
        %556 = vadd.xlane.f32.xlu0 %v555
        %v557 = vpop.xlane.xlu0 %556
        %s558 = smov [#allocation32]
        %559 = vst [vmem:[%s558] sm:$0xff] %v557
        %s560 = smov [#allocation31]
        %v561 = vld [vmem:[%s560] sm:$0xff]
        %s562 = smov [#allocation32]
        %v563 = vld [vmem:[%s562] sm:$0xff]
        %s564 = smov [#allocation20]
        %s565 = smov [#allocation21]
        %s566 = smov [#allocation22]
        %s567 = smov [#allocation23]
        %v568 = vld [vmem:[%s564] sm:$0x3]
        %v569 = vld [vmem:[%s565] sm:$0x3]
        %v570 = vld [vmem:[%s566] sm:$0x3]
        %v571 = vld [vmem:[%s567] sm:$0x3]
        %v572 = vmul.f32 %v561, %v568
        %v573 = vmul.f32 %v563, %v570
        %v574 = vsub.f32 %v572, %v573
        %v575 = vmul.f32 %v561, %v569
        %v576 = vmul.f32 %v563, %v571
        %v577 = vsub.f32 %v575, %v576
        %v578 = vmul.f32 %v563, %v568
        %v579 = vmul.f32 %v561, %v570
        %v580 = vadd.f32 %v578, %v579
        %v581 = vmul.f32 %v563, %v569
        %v582 = vmul.f32 %v561, %v571
        %v583 = vadd.f32 %v581, %v582
        %584 = vst [vmem:[%s564] sm:$0x3] %v574
        %585 = vst [vmem:[%s565] sm:$0x3] %v577
        %586 = vst [vmem:[%s566] sm:$0x3] %v580
        %587 = vst [vmem:[%s567] sm:$0x3] %v583
        %s588 = smov [#allocation29]
        %v589 = vld [vmem:[%s588] ss:$0 sm:$0xff]
        %s590 = smov [#allocation30]
        %v591 = vld [vmem:[%s590] ss:$0 sm:$0xff]
        %s592 = smov [#allocation20]
        %s593 = smov [#allocation21]
        %s594 = smov [#allocation22]
        %s595 = smov [#allocation23]
        %v596 = vld [vmem:[%s592] sm:$0x3]
        %v597 = vld [vmem:[%s593] sm:$0x3]
        %v598 = vld [vmem:[%s594] sm:$0x3]
        %v599 = vld [vmem:[%s595] sm:$0x3]
        %v600 = vmul.f32 %v589, %v596
        %v601 = vmul.f32 %v591, %v597
        %v602 = vsub.f32 %v600, %v601
        %v603 = vmul.f32 %v591, %v596
        %v604 = vmul.f32 %v589, %v597
        %v605 = vadd.f32 %v603, %v604
        %v606 = vmul.f32 %v589, %v598
        %v607 = vmul.f32 %v591, %v599
        %v608 = vsub.f32 %v606, %v607
        %v609 = vmul.f32 %v591, %v598
        %v610 = vmul.f32 %v589, %v599
        %v611 = vadd.f32 %v609, %v610
        %612 = vst [vmem:[%s592] sm:$0x3] %v602
        %613 = vst [vmem:[%s593] sm:$0x3] %v605
        %614 = vst [vmem:[%s594] sm:$0x3] %v608
        %615 = vst [vmem:[%s595] sm:$0x3] %v611
        %s616 = smov [#allocation20]
        %s617 = smov [#allocation27]
        %v618 = vlaneseq
        %v619 = vand.u32 %v618, 127
        %v620 = vmov %v619
        %v621 = vlaneseq
        %v622 = vshrl.u32 %v621, 7
        %v623 = vmov %v622
        %v624 = vld [vmem:[%s617] ss:$0 sm:$0xff]
        %v625 = vld [vmem:[%s616] sm:$0x3]
        %vm628 = vcmp.eq.s32.totalorder %v623, %v620
        %v629 = vsel %vm628, %v624, %v625
        %630 = vst [vmem:[%s616] sm:$0x3] %v629
        %s631 = smov [#allocation21]
        %v632 = vlaneseq
        %v633 = vand.u32 %v632, 127
        %v634 = vmov %v633
        %v635 = vlaneseq
        %v636 = vshrl.u32 %v635, 7
        %v637 = vmov %v636
        %v638 = vld [vmem:[%s631] sm:$0x3]
        %vm641 = vcmp.eq.s32.totalorder %v637, %v634
        %v642 = vsel %vm641, 0.0, %v638
        %643 = vst [vmem:[%s631] sm:$0x3] %v642
        %s644 = smov [#allocation22]
        %v645 = vlaneseq
        %v646 = vand.u32 %v645, 127
        %v647 = vmov %v646
        %v648 = vlaneseq
        %v649 = vshrl.u32 %v648, 7
        %v650 = vmov %v649
        %v651 = vld [vmem:[%s644] sm:$0x3]
        %vm654 = vcmp.eq.s32.totalorder %v650, %v647
        %v655 = vsel %vm654, 0.0, %v651
        %656 = vst [vmem:[%s644] sm:$0x3] %v655
        %s657 = smov [#allocation23]
        %s658 = smov [#allocation28]
        %v659 = vlaneseq
        %v660 = vand.u32 %v659, 127
        %v661 = vmov %v660
        %v662 = vlaneseq
        %v663 = vshrl.u32 %v662, 7
        %v664 = vmov %v663
        %v665 = vld [vmem:[%s658] ss:$0 sm:$0xff]
        %v666 = vld [vmem:[%s657] sm:$0x3]
        %vm669 = vcmp.eq.s32.totalorder %v664, %v661
        %v670 = vsel %vm669, %v665, %v666
        %671 = vst [vmem:[%s657] sm:$0x3] %v670
        %s672 = smov [#allocation20]
        %s673 = smov [#allocation21]
        %v674 = vld [vmem:[%s673] sm:$0x3]
        %675 = vrot.lane.b32.xlu0 %v674, 1
        %v676 = vpop.permute.xlu0 %675
        %v677 = vld [vmem:[%s672] sm:$0x3]
        %v678 = vld [vmem:[%s672] sm:$0x3]
        %679 = vrot.lane.b32.xlu0 %v678, 1
        %v680 = vpop.permute.xlu0 %679
        %v681 = vlaneseq
        %v682 = vand.u32 %v681, 127
        %vm683 = vcmp.eq.s32.totalorder %v682, 0
        %v684 = vsel %vm683, %v678, %v680
        %v685 = vlaneseq
        %v686 = vand.u32 %v685, 127
        %vm687 = vcmp.eq.s32.totalorder %v686, 1
        %v688 = vsel %vm687, %v676, %v684
        %v689 = vlaneseq
        %v690 = vand.u32 %v689, 127
        %vm691 = vcmp.ge.s32.totalorder %v690, 0
        %vm692 = vcmp.lt.s32.totalorder %v690, 2
        %vm693 = vmand %vm691, %vm692
        %v694 = vsel %vm693, %v688, 0.0
        %v695 = vld [vmem:[%s673] sm:$0x3]
        %696 = vrot.lane.b32.xlu0 %v695, 127
        %v697 = vpop.permute.xlu0 %696
        %v698 = vlaneseq
        %v699 = vand.u32 %v698, 127
        %vm700 = vcmp.eq.s32.totalorder %v699, 1
        %v701 = vsel %vm700, %v677, %v697
        %702 = vst [vmem:[%s672] sm:$0x3] %v694
        %703 = vst [vmem:[%s673] sm:$0x3] %v701
        %s704 = smov [#allocation22]
        %s705 = smov [#allocation23]
        %v706 = vld [vmem:[%s705] sm:$0x3]
        %707 = vrot.lane.b32.xlu0 %v706, 1
        %v708 = vpop.permute.xlu0 %707
        %v709 = vld [vmem:[%s704] sm:$0x3]
        %v710 = vld [vmem:[%s704] sm:$0x3]
        %711 = vrot.lane.b32.xlu0 %v710, 1
        %v712 = vpop.permute.xlu0 %711
        %v713 = vlaneseq
        %v714 = vand.u32 %v713, 127
        %vm715 = vcmp.eq.s32.totalorder %v714, 0
        %v716 = vsel %vm715, %v710, %v712
        %v717 = vlaneseq
        %v718 = vand.u32 %v717, 127
        %vm719 = vcmp.eq.s32.totalorder %v718, 1
        %v720 = vsel %vm719, %v708, %v716
        %v721 = vlaneseq
        %v722 = vand.u32 %v721, 127
        %vm723 = vcmp.ge.s32.totalorder %v722, 0
        %vm724 = vcmp.lt.s32.totalorder %v722, 2
        %vm725 = vmand %vm723, %vm724
        %v726 = vsel %vm725, %v720, 0.0
        %v727 = vld [vmem:[%s705] sm:$0x3]
        %728 = vrot.lane.b32.xlu0 %v727, 127
        %v729 = vpop.permute.xlu0 %728
        %v730 = vlaneseq
        %v731 = vand.u32 %v730, 127
        %vm732 = vcmp.eq.s32.totalorder %v731, 1
        %v733 = vsel %vm732, %v709, %v729
        %734 = vst [vmem:[%s704] sm:$0x3] %v726
        %735 = vst [vmem:[%s705] sm:$0x3] %v733
        %s736 = smov [#allocation20]
        %s737 = smov [#allocation22]
        %v738 = vld [vmem:[%s736] ss:$0 sm:$0xff]
        %s740 = scalar_lea.vmem %s736, 4294967295
        %v741 = vld [vmem:[%s740] sm:$0x2]
        %v742 = vlaneseq
        %v743 = vshrl.u32 %v742, 7
        %vm744 = vcmp.eq.s32.totalorder %v743, 0
        %v745 = vsel %vm744, %v738, %v741
        %s746 = scalar_lea.vmem %s736, 1
        %v747 = vld [vmem:[%s746] ss:$0 sm:$0xff]
        %748 = vst [vmem:[%s736] sm:$0x3] %v745
        %v749 = vld [vmem:[%s737] ss:$0 sm:$0xff]
        %s750 = scalar_lea.vmem %s736, 1
        %751 = vst [vmem:[%s750] sm:$0x1] %v749
        %s752 = scalar_lea.vmem %s737, 1
        %v753 = vld [vmem:[%s752] sm:$0x1]
        %v754 = vlaneseq
        %v755 = vshrl.u32 %v754, 7
        %vm756 = vcmp.eq.s32.totalorder %v755, 1
        %v757 = vsel %vm756, %v747, %v753
        %v758 = vld [vmem:[%s737] ss:$0 sm:$0xff]
        %759 = vst [vmem:[%s737] sm:$0x3] %v757
        %s760 = smov [#allocation21]
        %s761 = smov [#allocation23]
        %v762 = vld [vmem:[%s760] ss:$0 sm:$0xff]
        %s764 = scalar_lea.vmem %s760, 4294967295
        %v765 = vld [vmem:[%s764] sm:$0x2]
        %v766 = vlaneseq
        %v767 = vshrl.u32 %v766, 7
        %vm768 = vcmp.eq.s32.totalorder %v767, 0
        %v769 = vsel %vm768, %v762, %v765
        %s770 = scalar_lea.vmem %s760, 1
        %v771 = vld [vmem:[%s770] ss:$0 sm:$0xff]
        %772 = vst [vmem:[%s760] sm:$0x3] %v769
        %v773 = vld [vmem:[%s761] ss:$0 sm:$0xff]
        %s774 = scalar_lea.vmem %s760, 1
        %775 = vst [vmem:[%s774] sm:$0x1] %v773
        %s776 = scalar_lea.vmem %s761, 1
        %v777 = vld [vmem:[%s776] sm:$0x1]
        %v778 = vlaneseq
        %v779 = vshrl.u32 %v778, 7
        %vm780 = vcmp.eq.s32.totalorder %v779, 1
        %v781 = vsel %vm780, %v771, %v777
        %v782 = vld [vmem:[%s761] ss:$0 sm:$0xff]
        %783 = vst [vmem:[%s761] sm:$0x3] %v781
        %s784 = smov [#allocation31]
        %v785 = vld [vmem:[%s784] sm:$0xff]
        %s786 = smov [#allocation32]
        %v787 = vld [vmem:[%s786] sm:$0xff]
        %s788 = smov [#allocation12]
        %s789 = smov [#allocation14]
        %s790 = smov [#allocation16]
        %s791 = smov [#allocation18]
        %v792 = vld [vmem:[%s788] sm:$0x3]
        %v793 = vld [vmem:[%s789] sm:$0x3]
        %v794 = vld [vmem:[%s790] sm:$0x3]
        %v795 = vld [vmem:[%s791] sm:$0x3]
        %v796 = vmul.f32 %v785, %v792
        %v797 = vmul.f32 %v787, %v794
        %v798 = vsub.f32 %v796, %v797
        %v799 = vmul.f32 %v785, %v793
        %v800 = vmul.f32 %v787, %v795
        %v801 = vsub.f32 %v799, %v800
        %v802 = vmul.f32 %v787, %v792
        %v803 = vmul.f32 %v785, %v794
        %v804 = vadd.f32 %v802, %v803
        %v805 = vmul.f32 %v787, %v793
        %v806 = vmul.f32 %v785, %v795
        %v807 = vadd.f32 %v805, %v806
        %808 = vst [vmem:[%s788] sm:$0x3] %v798
        %809 = vst [vmem:[%s789] sm:$0x3] %v801
        %810 = vst [vmem:[%s790] sm:$0x3] %v804
        %811 = vst [vmem:[%s791] sm:$0x3] %v807
        %s812 = smov [#allocation12]
        %s813 = smov [#allocation16]
        %v814 = vld [vmem:[%s812] ss:$0 sm:$0xff]
        %s816 = scalar_lea.vmem %s812, 4294967295
        %v817 = vld [vmem:[%s816] sm:$0x2]
        %v818 = vlaneseq
        %v819 = vshrl.u32 %v818, 7
        %vm820 = vcmp.eq.s32.totalorder %v819, 0
        %v821 = vsel %vm820, %v814, %v817
        %s822 = scalar_lea.vmem %s812, 1
        %v823 = vld [vmem:[%s822] ss:$0 sm:$0xff]
        %824 = vst [vmem:[%s812] sm:$0x3] %v821
        %v825 = vld [vmem:[%s813] ss:$0 sm:$0xff]
        %s826 = scalar_lea.vmem %s812, 1
        %827 = vst [vmem:[%s826] sm:$0x1] %v825
        %s828 = scalar_lea.vmem %s813, 1
        %v829 = vld [vmem:[%s828] sm:$0x1]
        %v830 = vlaneseq
        %v831 = vshrl.u32 %v830, 7
        %vm832 = vcmp.eq.s32.totalorder %v831, 1
        %v833 = vsel %vm832, %v823, %v829
        %v834 = vld [vmem:[%s813] ss:$0 sm:$0xff]
        %835 = vst [vmem:[%s813] sm:$0x3] %v833
        %s836 = smov [#allocation14]
        %s837 = smov [#allocation18]
        %v838 = vld [vmem:[%s836] ss:$0 sm:$0xff]
        %s840 = scalar_lea.vmem %s836, 4294967295
        %v841 = vld [vmem:[%s840] sm:$0x2]
        %v842 = vlaneseq
        %v843 = vshrl.u32 %v842, 7
        %vm844 = vcmp.eq.s32.totalorder %v843, 0
        %v845 = vsel %vm844, %v838, %v841
        %s846 = scalar_lea.vmem %s836, 1
        %v847 = vld [vmem:[%s846] ss:$0 sm:$0xff]
        %848 = vst [vmem:[%s836] sm:$0x3] %v845
        %v849 = vld [vmem:[%s837] ss:$0 sm:$0xff]
        %s850 = scalar_lea.vmem %s836, 1
        %851 = vst [vmem:[%s850] sm:$0x1] %v849
        %s852 = scalar_lea.vmem %s837, 1
        %v853 = vld [vmem:[%s852] sm:$0x1]
        %v854 = vlaneseq
        %v855 = vshrl.u32 %v854, 7
        %vm856 = vcmp.eq.s32.totalorder %v855, 1
        %v857 = vsel %vm856, %v847, %v853
        %v858 = vld [vmem:[%s837] ss:$0 sm:$0xff]
        %859 = vst [vmem:[%s837] sm:$0x3] %v857
      $region101: #{custom-call.11} parent=93 // loop_footer
        %s420 = sadd.s32 1, %s416
      $region102: #{custom-call.11} parent=93 // loop_footer_branch
        %415 = sbr.rel target = $region98
      $region103: #{custom-call.11} parent=93 // loop_exit
        _
      %s860 = sadd.s32 %s318, 1
    $region94: #{custom-call.11} parent=1 // loop_footer
      _
    $region95: #{custom-call.11} parent=1 // loop_footer_branch
      %317 = sbr.rel target = $region91
    $region96: #{custom-call.11} parent=1 // loop_exit
      _
    %s863 = smov [#allocation20]
    %s864 = smov [#allocation8]
    %v865 = vlaneseq
    %v866 = vand.u32 %v865, 127
    %v867 = vmov %v866
    %v868 = vlaneseq
    %v869 = vshrl.u32 %v868, 7
    %v870 = vmov %v869
    %v871 = vld [vmem:[%s863] sm:$0x3]
    %vm874 = vcmp.eq.s32.totalorder %v870, %v867
    %v875 = vsel %vm874, %v871, 0.0
    %v876 = vrot.slane %v875, 4
    %v877 = vadd.f32 %v875, %v876
    %v878 = vrot.slane %v877, 2
    %v879 = vadd.f32 %v877, %v878
    %v880 = vrot.slane %v879, 1
    %v881 = vadd.f32 %v879, %v880
    %882 = vst [vmem:[%s864] sm:$0x1] %v881
    %s883 = smov [#allocation23]
    %s884 = smov [#allocation10]
    %v885 = vlaneseq
    %v886 = vand.u32 %v885, 127
    %v887 = vmov %v886
    %v888 = vlaneseq
    %v889 = vshrl.u32 %v888, 7
    %v890 = vmov %v889
    %v891 = vld [vmem:[%s883] sm:$0x3]
    %vm894 = vcmp.eq.s32.totalorder %v890, %v887
    %v895 = vsel %vm894, %v891, 0.0
    %v896 = vrot.slane %v895, 4
    %v897 = vadd.f32 %v895, %v896
    %v898 = vrot.slane %v897, 2
    %v899 = vadd.f32 %v897, %v898
    %v900 = vrot.slane %v899, 1
    %v901 = vadd.f32 %v899, %v900
    %902 = vst [vmem:[%s884] sm:$0x1] %v901
    %s904 = sshllo.u32 0, 1
    %v906 = vld [vmem:[#allocation8] sm:%s904]
    %s907 = sshllo.u32 0, 1
    %908 = vst [vmem:[#allocation9] sm:%s907] %v906
    %s910 = sshllo.u32 0, 1
    %v912 = vld [vmem:[#allocation10] sm:%s910]
    %s913 = sshllo.u32 0, 1
    %914 = vst [vmem:[#allocation11] sm:%s913] %v912
    %s916 = sshllo.u32 0, 2
    %v918 = vld [vmem:[#allocation12] sm:%s916]
    %s919 = sshllo.u32 0, 2
    %920 = vst [vmem:[#allocation13] sm:%s919] %v918
    %s922 = sshllo.u32 0, 2
    %v924 = vld [vmem:[#allocation14] sm:%s922]
    %s925 = sshllo.u32 0, 2
    %926 = vst [vmem:[#allocation15] sm:%s925] %v924
    %s928 = sshllo.u32 0, 2
    %v930 = vld [vmem:[#allocation16] sm:%s928]
    %s931 = sshllo.u32 0, 2
    %932 = vst [vmem:[#allocation17] sm:%s931] %v930
    %s934 = sshllo.u32 0, 2
    %v936 = vld [vmem:[#allocation18] sm:%s934]
    %s937 = sshllo.u32 0, 2
    %938 = vst [vmem:[#allocation19] sm:%s937] %v936
    // Predicated region
    $region104: #{custom-call.11} parent=1 // pred_check
      _
    $region105: #{custom-call.11} parent=1 // pred_check_branch
      %940 = sbr.rel (0) target = $region107
    $region106: #{custom-call.11} parent=1 // pred_region
      %p942 = scmp.gt.s32.totalorder 1, 0
      // Predicated region
      $region108: #{custom-call.11} parent=106 // pred_check
        %p943 = pneg %p942
      $region109: #{custom-call.11} parent=106 // pred_check_branch
        %945 = sbr.rel (%p943) target = $region111
      $region110: #{custom-call.11} parent=106 // pred_region
        %s946 = sshra.s32 1, 3
        %p947 = scmp.gt.s32.totalorder %s946, 0
        // Predicated region
        $region112: #{custom-call.11} parent=110 // pred_check
          %p948 = pneg %p947
        $region113: #{custom-call.11} parent=110 // pred_check_branch
          %950 = sbr.rel (%p948) target = $region115
        $region114: #{custom-call.11} parent=110 // pred_region
          %s951 = ssub.s32 %s946, 1
          %s952 = smul.u32 %s951, 128
          %s953 = sshra.s32 %s952, 4
          %s954 = scalar_lea.vmem [#allocation9], %s953
          %v955 = vld [vmem:[#allocation9] sm:$0xff]
          // While loop
          $region116: #{custom-call.11} parent=114 // loop_pre_header
            _
          $region117: #{custom-call.11} parent=114 // loop_header
            %s956 = sphi [#allocation9], %s978
            %s957 = sphi %s4, %s979
            %v958 = vphi %v955, %v980
            %s959 = ssub.s32 %s954, 64
            %p960 = scmp.gt.s32.totalorder %s956, %s959
          $region118: #{custom-call.11} parent=114 // loop_header_branch
            %962 = sbr.rel (%p960) target = $region122
          $region119: #{custom-call.11} parent=114 // loop_body
            %963 = vst [vmem:[%s957] sm:$0xff] %v958
            %v964 = vld [vmem:[%s956 + $0x8] sm:$0xff]
            %965 = vst [vmem:[%s957 + $0x8] sm:$0xff] %v964
            %v966 = vld [vmem:[%s956 + $0x10] sm:$0xff]
            %967 = vst [vmem:[%s957 + $0x10] sm:$0xff] %v966
            %v968 = vld [vmem:[%s956 + $0x18] sm:$0xff]
            %969 = vst [vmem:[%s957 + $0x18] sm:$0xff] %v968
            %v970 = vld [vmem:[%s956 + $0x20] sm:$0xff]
            %971 = vst [vmem:[%s957 + $0x20] sm:$0xff] %v970
            %v972 = vld [vmem:[%s956 + $0x28] sm:$0xff]
            %973 = vst [vmem:[%s957 + $0x28] sm:$0xff] %v972
            %v974 = vld [vmem:[%s956 + $0x30] sm:$0xff]
            %975 = vst [vmem:[%s957 + $0x30] sm:$0xff] %v974
            %v976 = vld [vmem:[%s956 + $0x38] sm:$0xff]
            %977 = vst [vmem:[%s957 + $0x38] sm:$0xff] %v976
          $region120: #{custom-call.11} parent=114 // loop_footer
            %s978 = scalar_lea.vmem %s956, 64
            %s979 = scalar_lea.vmem %s957, 64
            %v980 = vld [vmem:[%s956 + $0x40] sm:$0xff]
          $region121: #{custom-call.11} parent=114 // loop_footer_branch
            %981 = sbr.rel target = $region117
          $region122: #{custom-call.11} parent=114 // loop_exit
            _
          // While loop
          $region123: #{custom-call.11} parent=114 // loop_pre_header
            _
          $region124: #{custom-call.11} parent=114 // loop_header
            %s982 = sphi %s956, %s990
            %s983 = sphi %s957, %s991
            %v984 = vphi %v958, %v984
            %p985 = scmp.gt.s32.totalorder %s982, %s954
          $region125: #{custom-call.11} parent=114 // loop_header_branch
            %987 = sbr.rel (%p985) target = $region129
          $region126: #{custom-call.11} parent=114 // loop_body
            %v988 = vld [vmem:[%s982] sm:$0xff]
            %989 = vst [vmem:[%s983] sm:$0xff] %v988
          $region127: #{custom-call.11} parent=114 // loop_footer
            %s990 = scalar_lea.vmem %s982, 8
            %s991 = scalar_lea.vmem %s983, 8
          $region128: #{custom-call.11} parent=114 // loop_footer_branch
            %992 = sbr.rel target = $region124
          $region129: #{custom-call.11} parent=114 // loop_exit
            _
        $region115: #{custom-call.11} parent=110 // pred_fallthru
          _
        %s993 = sand.u32 1, 7
        %s994 = sshllo.u32 0, %s993
        %s995 = smul.u32 %s946, 128
        %s996 = sshra.s32 %s995, 4
        %s997 = scalar_lea.vmem %s4, %s996
        %s998 = smul.u32 %s946, 128
        %s999 = sshra.s32 %s998, 4
        %s1000 = scalar_lea.vmem [#allocation9], %s999
        %v1001 = vld [vmem:[%s1000] sm:%s994]
        %1002 = vst [vmem:[%s997] sm:%s994] %v1001
      $region111: #{custom-call.11} parent=106 // pred_fallthru
        _
    $region107: #{custom-call.11} parent=1 // pred_fallthru
      _
    // Predicated region
    $region130: #{custom-call.11} parent=1 // pred_check
      _
    $region131: #{custom-call.11} parent=1 // pred_check_branch
      %1004 = sbr.rel (0) target = $region133
    $region132: #{custom-call.11} parent=1 // pred_region
      %p1006 = scmp.gt.s32.totalorder 1, 0
      // Predicated region
      $region134: #{custom-call.11} parent=132 // pred_check
        %p1007 = pneg %p1006
      $region135: #{custom-call.11} parent=132 // pred_check_branch
        %1009 = sbr.rel (%p1007) target = $region137
      $region136: #{custom-call.11} parent=132 // pred_region
        %s1010 = sshra.s32 1, 3
        %p1011 = scmp.gt.s32.totalorder %s1010, 0
        // Predicated region
        $region138: #{custom-call.11} parent=136 // pred_check
          %p1012 = pneg %p1011
        $region139: #{custom-call.11} parent=136 // pred_check_branch
          %1014 = sbr.rel (%p1012) target = $region141
        $region140: #{custom-call.11} parent=136 // pred_region
          %s1015 = ssub.s32 %s1010, 1
          %s1016 = smul.u32 %s1015, 128
          %s1017 = sshra.s32 %s1016, 4
          %s1018 = scalar_lea.vmem [#allocation11], %s1017
          %v1019 = vld [vmem:[#allocation11] sm:$0xff]
          // While loop
          $region142: #{custom-call.11} parent=140 // loop_pre_header
            _
          $region143: #{custom-call.11} parent=140 // loop_header
            %s1020 = sphi [#allocation11], %s1042
            %s1021 = sphi %s5, %s1043
            %v1022 = vphi %v1019, %v1044
            %s1023 = ssub.s32 %s1018, 64
            %p1024 = scmp.gt.s32.totalorder %s1020, %s1023
          $region144: #{custom-call.11} parent=140 // loop_header_branch
            %1026 = sbr.rel (%p1024) target = $region148
          $region145: #{custom-call.11} parent=140 // loop_body
            %1027 = vst [vmem:[%s1021] sm:$0xff] %v1022
            %v1028 = vld [vmem:[%s1020 + $0x8] sm:$0xff]
            %1029 = vst [vmem:[%s1021 + $0x8] sm:$0xff] %v1028
            %v1030 = vld [vmem:[%s1020 + $0x10] sm:$0xff]
            %1031 = vst [vmem:[%s1021 + $0x10] sm:$0xff] %v1030
            %v1032 = vld [vmem:[%s1020 + $0x18] sm:$0xff]
            %1033 = vst [vmem:[%s1021 + $0x18] sm:$0xff] %v1032
            %v1034 = vld [vmem:[%s1020 + $0x20] sm:$0xff]
            %1035 = vst [vmem:[%s1021 + $0x20] sm:$0xff] %v1034
            %v1036 = vld [vmem:[%s1020 + $0x28] sm:$0xff]
            %1037 = vst [vmem:[%s1021 + $0x28] sm:$0xff] %v1036
            %v1038 = vld [vmem:[%s1020 + $0x30] sm:$0xff]
            %1039 = vst [vmem:[%s1021 + $0x30] sm:$0xff] %v1038
            %v1040 = vld [vmem:[%s1020 + $0x38] sm:$0xff]
            %1041 = vst [vmem:[%s1021 + $0x38] sm:$0xff] %v1040
          $region146: #{custom-call.11} parent=140 // loop_footer
            %s1042 = scalar_lea.vmem %s1020, 64
            %s1043 = scalar_lea.vmem %s1021, 64
            %v1044 = vld [vmem:[%s1020 + $0x40] sm:$0xff]
          $region147: #{custom-call.11} parent=140 // loop_footer_branch
            %1045 = sbr.rel target = $region143
          $region148: #{custom-call.11} parent=140 // loop_exit
            _
          // While loop
          $region149: #{custom-call.11} parent=140 // loop_pre_header
            _
          $region150: #{custom-call.11} parent=140 // loop_header
            %s1046 = sphi %s1020, %s1054
            %s1047 = sphi %s1021, %s1055
            %v1048 = vphi %v1022, %v1048
            %p1049 = scmp.gt.s32.totalorder %s1046, %s1018
          $region151: #{custom-call.11} parent=140 // loop_header_branch
            %1051 = sbr.rel (%p1049) target = $region155
          $region152: #{custom-call.11} parent=140 // loop_body
            %v1052 = vld [vmem:[%s1046] sm:$0xff]
            %1053 = vst [vmem:[%s1047] sm:$0xff] %v1052
          $region153: #{custom-call.11} parent=140 // loop_footer
            %s1054 = scalar_lea.vmem %s1046, 8
            %s1055 = scalar_lea.vmem %s1047, 8
          $region154: #{custom-call.11} parent=140 // loop_footer_branch
            %1056 = sbr.rel target = $region150
          $region155: #{custom-call.11} parent=140 // loop_exit
            _
        $region141: #{custom-call.11} parent=136 // pred_fallthru
          _
        %s1057 = sand.u32 1, 7
        %s1058 = sshllo.u32 0, %s1057
        %s1059 = smul.u32 %s1010, 128
        %s1060 = sshra.s32 %s1059, 4
        %s1061 = scalar_lea.vmem %s5, %s1060
        %s1062 = smul.u32 %s1010, 128
        %s1063 = sshra.s32 %s1062, 4
        %s1064 = scalar_lea.vmem [#allocation11], %s1063
        %v1065 = vld [vmem:[%s1064] sm:%s1058]
        %1066 = vst [vmem:[%s1061] sm:%s1058] %v1065
      $region137: #{custom-call.11} parent=132 // pred_fallthru
        _
    $region133: #{custom-call.11} parent=1 // pred_fallthru
      _
    %p1068 = scmp.gt.s32.totalorder 2, 0
    // Predicated region
    $region156: #{custom-call.11} parent=1 // pred_check
      %p1069 = pneg %p1068
    $region157: #{custom-call.11} parent=1 // pred_check_branch
      %1071 = sbr.rel (%p1069) target = $region159
    $region158: #{custom-call.11} parent=1 // pred_region
      %s1072 = sshra.s32 2, 3
      %p1073 = scmp.gt.s32.totalorder %s1072, 0
      // Predicated region
      $region160: #{custom-call.11} parent=158 // pred_check
        %p1074 = pneg %p1073
      $region161: #{custom-call.11} parent=158 // pred_check_branch
        %1076 = sbr.rel (%p1074) target = $region163
      $region162: #{custom-call.11} parent=158 // pred_region
        %s1077 = ssub.s32 %s1072, 1
        %s1078 = smul.u32 %s1077, 128
        %s1079 = sshra.s32 %s1078, 4
        %s1080 = scalar_lea.vmem [#allocation13], %s1079
        %v1081 = vld [vmem:[#allocation13] sm:$0xff]
        // While loop
        $region164: #{custom-call.11} parent=162 // loop_pre_header
          _
        $region165: #{custom-call.11} parent=162 // loop_header
          %s1082 = sphi [#allocation13], %s1104
          %s1083 = sphi %s6, %s1105
          %v1084 = vphi %v1081, %v1106
          %s1085 = ssub.s32 %s1080, 64
          %p1086 = scmp.gt.s32.totalorder %s1082, %s1085
        $region166: #{custom-call.11} parent=162 // loop_header_branch
          %1088 = sbr.rel (%p1086) target = $region170
        $region167: #{custom-call.11} parent=162 // loop_body
          %1089 = vst [vmem:[%s1083] sm:$0xff] %v1084
          %v1090 = vld [vmem:[%s1082 + $0x8] sm:$0xff]
          %1091 = vst [vmem:[%s1083 + $0x8] sm:$0xff] %v1090
          %v1092 = vld [vmem:[%s1082 + $0x10] sm:$0xff]
          %1093 = vst [vmem:[%s1083 + $0x10] sm:$0xff] %v1092
          %v1094 = vld [vmem:[%s1082 + $0x18] sm:$0xff]
          %1095 = vst [vmem:[%s1083 + $0x18] sm:$0xff] %v1094
          %v1096 = vld [vmem:[%s1082 + $0x20] sm:$0xff]
          %1097 = vst [vmem:[%s1083 + $0x20] sm:$0xff] %v1096
          %v1098 = vld [vmem:[%s1082 + $0x28] sm:$0xff]
          %1099 = vst [vmem:[%s1083 + $0x28] sm:$0xff] %v1098
          %v1100 = vld [vmem:[%s1082 + $0x30] sm:$0xff]
          %1101 = vst [vmem:[%s1083 + $0x30] sm:$0xff] %v1100
          %v1102 = vld [vmem:[%s1082 + $0x38] sm:$0xff]
          %1103 = vst [vmem:[%s1083 + $0x38] sm:$0xff] %v1102
        $region168: #{custom-call.11} parent=162 // loop_footer
          %s1104 = scalar_lea.vmem %s1082, 64
          %s1105 = scalar_lea.vmem %s1083, 64
          %v1106 = vld [vmem:[%s1082 + $0x40] sm:$0xff]
        $region169: #{custom-call.11} parent=162 // loop_footer_branch
          %1107 = sbr.rel target = $region165
        $region170: #{custom-call.11} parent=162 // loop_exit
          _
        // While loop
        $region171: #{custom-call.11} parent=162 // loop_pre_header
          _
        $region172: #{custom-call.11} parent=162 // loop_header
          %s1108 = sphi %s1082, %s1116
          %s1109 = sphi %s1083, %s1117
          %v1110 = vphi %v1084, %v1110
          %p1111 = scmp.gt.s32.totalorder %s1108, %s1080
        $region173: #{custom-call.11} parent=162 // loop_header_branch
          %1113 = sbr.rel (%p1111) target = $region177
        $region174: #{custom-call.11} parent=162 // loop_body
          %v1114 = vld [vmem:[%s1108] sm:$0xff]
          %1115 = vst [vmem:[%s1109] sm:$0xff] %v1114
        $region175: #{custom-call.11} parent=162 // loop_footer
          %s1116 = scalar_lea.vmem %s1108, 8
          %s1117 = scalar_lea.vmem %s1109, 8
        $region176: #{custom-call.11} parent=162 // loop_footer_branch
          %1118 = sbr.rel target = $region172
        $region177: #{custom-call.11} parent=162 // loop_exit
          _
      $region163: #{custom-call.11} parent=158 // pred_fallthru
        _
      %s1119 = sand.u32 2, 7
      %s1120 = sshllo.u32 0, %s1119
      %s1121 = smul.u32 %s1072, 128
      %s1122 = sshra.s32 %s1121, 4
      %s1123 = scalar_lea.vmem %s6, %s1122
      %s1124 = smul.u32 %s1072, 128
      %s1125 = sshra.s32 %s1124, 4
      %s1126 = scalar_lea.vmem [#allocation13], %s1125
      %v1127 = vld [vmem:[%s1126] sm:%s1120]
      %1128 = vst [vmem:[%s1123] sm:%s1120] %v1127
    $region159: #{custom-call.11} parent=1 // pred_fallthru
      _
    %p1130 = scmp.gt.s32.totalorder 2, 0
    // Predicated region
    $region178: #{custom-call.11} parent=1 // pred_check
      %p1131 = pneg %p1130
    $region179: #{custom-call.11} parent=1 // pred_check_branch
      %1133 = sbr.rel (%p1131) target = $region181
    $region180: #{custom-call.11} parent=1 // pred_region
      %s1134 = sshra.s32 2, 3
      %p1135 = scmp.gt.s32.totalorder %s1134, 0
      // Predicated region
      $region182: #{custom-call.11} parent=180 // pred_check
        %p1136 = pneg %p1135
      $region183: #{custom-call.11} parent=180 // pred_check_branch
        %1138 = sbr.rel (%p1136) target = $region185
      $region184: #{custom-call.11} parent=180 // pred_region
        %s1139 = ssub.s32 %s1134, 1
        %s1140 = smul.u32 %s1139, 128
        %s1141 = sshra.s32 %s1140, 4
        %s1142 = scalar_lea.vmem [#allocation15], %s1141
        %v1143 = vld [vmem:[#allocation15] sm:$0xff]
        // While loop
        $region186: #{custom-call.11} parent=184 // loop_pre_header
          _
        $region187: #{custom-call.11} parent=184 // loop_header
          %s1144 = sphi [#allocation15], %s1166
          %s1145 = sphi %s7, %s1167
          %v1146 = vphi %v1143, %v1168
          %s1147 = ssub.s32 %s1142, 64
          %p1148 = scmp.gt.s32.totalorder %s1144, %s1147
        $region188: #{custom-call.11} parent=184 // loop_header_branch
          %1150 = sbr.rel (%p1148) target = $region192
        $region189: #{custom-call.11} parent=184 // loop_body
          %1151 = vst [vmem:[%s1145] sm:$0xff] %v1146
          %v1152 = vld [vmem:[%s1144 + $0x8] sm:$0xff]
          %1153 = vst [vmem:[%s1145 + $0x8] sm:$0xff] %v1152
          %v1154 = vld [vmem:[%s1144 + $0x10] sm:$0xff]
          %1155 = vst [vmem:[%s1145 + $0x10] sm:$0xff] %v1154
          %v1156 = vld [vmem:[%s1144 + $0x18] sm:$0xff]
          %1157 = vst [vmem:[%s1145 + $0x18] sm:$0xff] %v1156
          %v1158 = vld [vmem:[%s1144 + $0x20] sm:$0xff]
          %1159 = vst [vmem:[%s1145 + $0x20] sm:$0xff] %v1158
          %v1160 = vld [vmem:[%s1144 + $0x28] sm:$0xff]
          %1161 = vst [vmem:[%s1145 + $0x28] sm:$0xff] %v1160
          %v1162 = vld [vmem:[%s1144 + $0x30] sm:$0xff]
          %1163 = vst [vmem:[%s1145 + $0x30] sm:$0xff] %v1162
          %v1164 = vld [vmem:[%s1144 + $0x38] sm:$0xff]
          %1165 = vst [vmem:[%s1145 + $0x38] sm:$0xff] %v1164
        $region190: #{custom-call.11} parent=184 // loop_footer
          %s1166 = scalar_lea.vmem %s1144, 64
          %s1167 = scalar_lea.vmem %s1145, 64
          %v1168 = vld [vmem:[%s1144 + $0x40] sm:$0xff]
        $region191: #{custom-call.11} parent=184 // loop_footer_branch
          %1169 = sbr.rel target = $region187
        $region192: #{custom-call.11} parent=184 // loop_exit
          _
        // While loop
        $region193: #{custom-call.11} parent=184 // loop_pre_header
          _
        $region194: #{custom-call.11} parent=184 // loop_header
          %s1170 = sphi %s1144, %s1178
          %s1171 = sphi %s1145, %s1179
          %v1172 = vphi %v1146, %v1172
          %p1173 = scmp.gt.s32.totalorder %s1170, %s1142
        $region195: #{custom-call.11} parent=184 // loop_header_branch
          %1175 = sbr.rel (%p1173) target = $region199
        $region196: #{custom-call.11} parent=184 // loop_body
          %v1176 = vld [vmem:[%s1170] sm:$0xff]
          %1177 = vst [vmem:[%s1171] sm:$0xff] %v1176
        $region197: #{custom-call.11} parent=184 // loop_footer
          %s1178 = scalar_lea.vmem %s1170, 8
          %s1179 = scalar_lea.vmem %s1171, 8
        $region198: #{custom-call.11} parent=184 // loop_footer_branch
          %1180 = sbr.rel target = $region194
        $region199: #{custom-call.11} parent=184 // loop_exit
          _
      $region185: #{custom-call.11} parent=180 // pred_fallthru
        _
      %s1181 = sand.u32 2, 7
      %s1182 = sshllo.u32 0, %s1181
      %s1183 = smul.u32 %s1134, 128
      %s1184 = sshra.s32 %s1183, 4
      %s1185 = scalar_lea.vmem %s7, %s1184
      %s1186 = smul.u32 %s1134, 128
      %s1187 = sshra.s32 %s1186, 4
      %s1188 = scalar_lea.vmem [#allocation15], %s1187
      %v1189 = vld [vmem:[%s1188] sm:%s1182]
      %1190 = vst [vmem:[%s1185] sm:%s1182] %v1189
    $region181: #{custom-call.11} parent=1 // pred_fallthru
      _
    %p1192 = scmp.gt.s32.totalorder 2, 0
    // Predicated region
    $region200: #{custom-call.11} parent=1 // pred_check
      %p1193 = pneg %p1192
    $region201: #{custom-call.11} parent=1 // pred_check_branch
      %1195 = sbr.rel (%p1193) target = $region203
    $region202: #{custom-call.11} parent=1 // pred_region
      %s1196 = sshra.s32 2, 3
      %p1197 = scmp.gt.s32.totalorder %s1196, 0
      // Predicated region
      $region204: #{custom-call.11} parent=202 // pred_check
        %p1198 = pneg %p1197
      $region205: #{custom-call.11} parent=202 // pred_check_branch
        %1200 = sbr.rel (%p1198) target = $region207
      $region206: #{custom-call.11} parent=202 // pred_region
        %s1201 = ssub.s32 %s1196, 1
        %s1202 = smul.u32 %s1201, 128
        %s1203 = sshra.s32 %s1202, 4
        %s1204 = scalar_lea.vmem [#allocation17], %s1203
        %v1205 = vld [vmem:[#allocation17] sm:$0xff]
        // While loop
        $region208: #{custom-call.11} parent=206 // loop_pre_header
          _
        $region209: #{custom-call.11} parent=206 // loop_header
          %s1206 = sphi [#allocation17], %s1228
          %s1207 = sphi %s8, %s1229
          %v1208 = vphi %v1205, %v1230
          %s1209 = ssub.s32 %s1204, 64
          %p1210 = scmp.gt.s32.totalorder %s1206, %s1209
        $region210: #{custom-call.11} parent=206 // loop_header_branch
          %1212 = sbr.rel (%p1210) target = $region214
        $region211: #{custom-call.11} parent=206 // loop_body
          %1213 = vst [vmem:[%s1207] sm:$0xff] %v1208
          %v1214 = vld [vmem:[%s1206 + $0x8] sm:$0xff]
          %1215 = vst [vmem:[%s1207 + $0x8] sm:$0xff] %v1214
          %v1216 = vld [vmem:[%s1206 + $0x10] sm:$0xff]
          %1217 = vst [vmem:[%s1207 + $0x10] sm:$0xff] %v1216
          %v1218 = vld [vmem:[%s1206 + $0x18] sm:$0xff]
          %1219 = vst [vmem:[%s1207 + $0x18] sm:$0xff] %v1218
          %v1220 = vld [vmem:[%s1206 + $0x20] sm:$0xff]
          %1221 = vst [vmem:[%s1207 + $0x20] sm:$0xff] %v1220
          %v1222 = vld [vmem:[%s1206 + $0x28] sm:$0xff]
          %1223 = vst [vmem:[%s1207 + $0x28] sm:$0xff] %v1222
          %v1224 = vld [vmem:[%s1206 + $0x30] sm:$0xff]
          %1225 = vst [vmem:[%s1207 + $0x30] sm:$0xff] %v1224
          %v1226 = vld [vmem:[%s1206 + $0x38] sm:$0xff]
          %1227 = vst [vmem:[%s1207 + $0x38] sm:$0xff] %v1226
        $region212: #{custom-call.11} parent=206 // loop_footer
          %s1228 = scalar_lea.vmem %s1206, 64
          %s1229 = scalar_lea.vmem %s1207, 64
          %v1230 = vld [vmem:[%s1206 + $0x40] sm:$0xff]
        $region213: #{custom-call.11} parent=206 // loop_footer_branch
          %1231 = sbr.rel target = $region209
        $region214: #{custom-call.11} parent=206 // loop_exit
          _
        // While loop
        $region215: #{custom-call.11} parent=206 // loop_pre_header
          _
        $region216: #{custom-call.11} parent=206 // loop_header
          %s1232 = sphi %s1206, %s1240
          %s1233 = sphi %s1207, %s1241
          %v1234 = vphi %v1208, %v1234
          %p1235 = scmp.gt.s32.totalorder %s1232, %s1204
        $region217: #{custom-call.11} parent=206 // loop_header_branch
          %1237 = sbr.rel (%p1235) target = $region221
        $region218: #{custom-call.11} parent=206 // loop_body
          %v1238 = vld [vmem:[%s1232] sm:$0xff]
          %1239 = vst [vmem:[%s1233] sm:$0xff] %v1238
        $region219: #{custom-call.11} parent=206 // loop_footer
          %s1240 = scalar_lea.vmem %s1232, 8
          %s1241 = scalar_lea.vmem %s1233, 8
        $region220: #{custom-call.11} parent=206 // loop_footer_branch
          %1242 = sbr.rel target = $region216
        $region221: #{custom-call.11} parent=206 // loop_exit
          _
      $region207: #{custom-call.11} parent=202 // pred_fallthru
        _
      %s1243 = sand.u32 2, 7
      %s1244 = sshllo.u32 0, %s1243
      %s1245 = smul.u32 %s1196, 128
      %s1246 = sshra.s32 %s1245, 4
      %s1247 = scalar_lea.vmem %s8, %s1246
      %s1248 = smul.u32 %s1196, 128
      %s1249 = sshra.s32 %s1248, 4
      %s1250 = scalar_lea.vmem [#allocation17], %s1249
      %v1251 = vld [vmem:[%s1250] sm:%s1244]
      %1252 = vst [vmem:[%s1247] sm:%s1244] %v1251
    $region203: #{custom-call.11} parent=1 // pred_fallthru
      _
    %p1254 = scmp.gt.s32.totalorder 2, 0
    // Predicated region
    $region222: #{custom-call.11} parent=1 // pred_check
      %p1255 = pneg %p1254
    $region223: #{custom-call.11} parent=1 // pred_check_branch
      %1257 = sbr.rel (%p1255) target = $region225
    $region224: #{custom-call.11} parent=1 // pred_region
      %s1258 = sshra.s32 2, 3
      %p1259 = scmp.gt.s32.totalorder %s1258, 0
      // Predicated region
      $region226: #{custom-call.11} parent=224 // pred_check
        %p1260 = pneg %p1259
      $region227: #{custom-call.11} parent=224 // pred_check_branch
        %1262 = sbr.rel (%p1260) target = $region229
      $region228: #{custom-call.11} parent=224 // pred_region
        %s1263 = ssub.s32 %s1258, 1
        %s1264 = smul.u32 %s1263, 128
        %s1265 = sshra.s32 %s1264, 4
        %s1266 = scalar_lea.vmem [#allocation19], %s1265
        %v1267 = vld [vmem:[#allocation19] sm:$0xff]
        // While loop
        $region230: #{custom-call.11} parent=228 // loop_pre_header
          _
        $region231: #{custom-call.11} parent=228 // loop_header
          %s1268 = sphi [#allocation19], %s1290
          %s1269 = sphi %s9, %s1291
          %v1270 = vphi %v1267, %v1292
          %s1271 = ssub.s32 %s1266, 64
          %p1272 = scmp.gt.s32.totalorder %s1268, %s1271
        $region232: #{custom-call.11} parent=228 // loop_header_branch
          %1274 = sbr.rel (%p1272) target = $region236
        $region233: #{custom-call.11} parent=228 // loop_body
          %1275 = vst [vmem:[%s1269] sm:$0xff] %v1270
          %v1276 = vld [vmem:[%s1268 + $0x8] sm:$0xff]
          %1277 = vst [vmem:[%s1269 + $0x8] sm:$0xff] %v1276
          %v1278 = vld [vmem:[%s1268 + $0x10] sm:$0xff]
          %1279 = vst [vmem:[%s1269 + $0x10] sm:$0xff] %v1278
          %v1280 = vld [vmem:[%s1268 + $0x18] sm:$0xff]
          %1281 = vst [vmem:[%s1269 + $0x18] sm:$0xff] %v1280
          %v1282 = vld [vmem:[%s1268 + $0x20] sm:$0xff]
          %1283 = vst [vmem:[%s1269 + $0x20] sm:$0xff] %v1282
          %v1284 = vld [vmem:[%s1268 + $0x28] sm:$0xff]
          %1285 = vst [vmem:[%s1269 + $0x28] sm:$0xff] %v1284
          %v1286 = vld [vmem:[%s1268 + $0x30] sm:$0xff]
          %1287 = vst [vmem:[%s1269 + $0x30] sm:$0xff] %v1286
          %v1288 = vld [vmem:[%s1268 + $0x38] sm:$0xff]
          %1289 = vst [vmem:[%s1269 + $0x38] sm:$0xff] %v1288
        $region234: #{custom-call.11} parent=228 // loop_footer
          %s1290 = scalar_lea.vmem %s1268, 64
          %s1291 = scalar_lea.vmem %s1269, 64
          %v1292 = vld [vmem:[%s1268 + $0x40] sm:$0xff]
        $region235: #{custom-call.11} parent=228 // loop_footer_branch
          %1293 = sbr.rel target = $region231
        $region236: #{custom-call.11} parent=228 // loop_exit
          _
        // While loop
        $region237: #{custom-call.11} parent=228 // loop_pre_header
          _
        $region238: #{custom-call.11} parent=228 // loop_header
          %s1294 = sphi %s1268, %s1302
          %s1295 = sphi %s1269, %s1303
          %v1296 = vphi %v1270, %v1296
          %p1297 = scmp.gt.s32.totalorder %s1294, %s1266
        $region239: #{custom-call.11} parent=228 // loop_header_branch
          %1299 = sbr.rel (%p1297) target = $region243
        $region240: #{custom-call.11} parent=228 // loop_body
          %v1300 = vld [vmem:[%s1294] sm:$0xff]
          %1301 = vst [vmem:[%s1295] sm:$0xff] %v1300
        $region241: #{custom-call.11} parent=228 // loop_footer
          %s1302 = scalar_lea.vmem %s1294, 8
          %s1303 = scalar_lea.vmem %s1295, 8
        $region242: #{custom-call.11} parent=228 // loop_footer_branch
          %1304 = sbr.rel target = $region238
        $region243: #{custom-call.11} parent=228 // loop_exit
          _
      $region229: #{custom-call.11} parent=224 // pred_fallthru
        _
      %s1305 = sand.u32 2, 7
      %s1306 = sshllo.u32 0, %s1305
      %s1307 = smul.u32 %s1258, 128
      %s1308 = sshra.s32 %s1307, 4
      %s1309 = scalar_lea.vmem %s9, %s1308
      %s1310 = smul.u32 %s1258, 128
      %s1311 = sshra.s32 %s1310, 4
      %s1312 = scalar_lea.vmem [#allocation19], %s1311
      %v1313 = vld [vmem:[%s1312] sm:%s1306]
      %1314 = vst [vmem:[%s1309] sm:%s1306] %v1313
    $region225: #{custom-call.11} parent=1 // pred_fallthru
      _
    // Predicated region
    $region244: #{custom-call.11} parent=1 // pred_check
      _
    $region245: #{custom-call.11} parent=1 // pred_check_branch
      %1316 = sbr.rel (0) target = $region247
    $region246: #{custom-call.11} parent=1 // pred_region
      _
    $region247: #{custom-call.11} parent=1 // pred_fallthru
      _
    // Predicated region
    $region248: #{custom-call.11} parent=1 // pred_check
      _
    $region249: #{custom-call.11} parent=1 // pred_check_branch
      %1318 = sbr.rel (0) target = $region251
    $region250: #{custom-call.11} parent=1 // pred_region
      _
    $region251: #{custom-call.11} parent=1 // pred_fallthru
      _

// kernel: custom-call.17
$region0: #{custom-call.17}
  %s0 = inlined_call_operand.vmem [shape: f32[7,4,4], index: 0, kind: output, shape index: {}]

// kernel: custom-call.16
$region0: #{custom-call.16}
  %s0 = inlined_call_operand.vmem [shape: bf16[7,8,4], index: 0, kind: output, shape index: {}]

// kernel: custom-call.6
$region0: #{custom-call.6}
  %s0 = inlined_call_operand.vmem [shape: f32[8,4,4], index: 0, kind: input, shape index: {}]
  %s1 = inlined_call_operand.vmem [shape: f32[8,4,4], index: 1, kind: input, shape index: {}]
  %s2 = inlined_call_operand.vmem [shape: f32[8,4,4], index: 2, kind: input, shape index: {}]
  %s3 = inlined_call_operand.vmem [shape: f32[8,4,4], index: 3, kind: input, shape index: {}]
  %s4 = inlined_call_operand.vmem [shape: f32[8,4], index: 4, kind: output, shape index: {0}]
  %s5 = inlined_call_operand.vmem [shape: f32[8,4], index: 5, kind: output, shape index: {1}]
  %s6 = inlined_call_operand.vmem [shape: f32[8,4,4], index: 6, kind: output, shape index: {2}]
  %s7 = inlined_call_operand.vmem [shape: f32[8,4,4], index: 7, kind: output, shape index: {3}]
  %s8 = inlined_call_operand.vmem [shape: f32[8,4,4], index: 8, kind: output, shape index: {4}]
  %s9 = inlined_call_operand.vmem [shape: f32[8,4,4], index: 9, kind: output, shape index: {5}]
  %10 = xla_tuple %s4, %s5, %s6, %s7, %s8, %s9
  $region1: #{custom-call.6} parent=0
    #allocation0 [shape = 'u8[4096]{0}', space=vmem, size = 0x1000, scoped, tag = 'operand span for operand 0']
    #allocation1 [shape = 'u8[4096]{0}', space=vmem, size = 0x1000, scoped, tag = 'packed  for operand 0']
    #allocation2 [shape = 'u8[4096]{0}', space=vmem, size = 0x1000, scoped, tag = 'operand span for operand 1']
    #allocation3 [shape = 'u8[4096]{0}', space=vmem, size = 0x1000, scoped, tag = 'packed  for operand 1']
    #allocation4 [shape = 'u8[4096]{0}', space=vmem, size = 0x1000, scoped, tag = 'operand span for operand 2']
    #allocation5 [shape = 'u8[4096]{0}', space=vmem, size = 0x1000, scoped, tag = 'packed  for operand 2']
    #allocation6 [shape = 'u8[4096]{0}', space=vmem, size = 0x1000, scoped, tag = 'operand span for operand 3']
    #allocation7 [shape = 'u8[4096]{0}', space=vmem, size = 0x1000, scoped, tag = 'packed  for operand 3']
    #allocation8 [shape = 'u8[8192]{0}', space=vmem, size = 0x2000, scoped, tag = 'operand span for operand 4']
    #allocation9 [shape = 'u8[8192]{0}', space=vmem, size = 0x2000, scoped, tag = 'operand span for operand 5']
    #allocation10 [shape = 'u8[4096]{0}', space=vmem, size = 0x1000, scoped, tag = 'operand span for operand 6']
    #allocation11 [shape = 'u8[4096]{0}', space=vmem, size = 0x1000, scoped, tag = 'packed  for operand 6']
    #allocation12 [shape = 'u8[4096]{0}', space=vmem, size = 0x1000, scoped, tag = 'operand span for operand 7']
    #allocation13 [shape = 'u8[4096]{0}', space=vmem, size = 0x1000, scoped, tag = 'packed  for operand 7']
    #allocation14 [shape = 'u8[4096]{0}', space=vmem, size = 0x1000, scoped, tag = 'operand span for operand 8']
    #allocation15 [shape = 'u8[4096]{0}', space=vmem, size = 0x1000, scoped, tag = 'packed  for operand 8']
    #allocation16 [shape = 'u8[4096]{0}', space=vmem, size = 0x1000, scoped, tag = 'operand span for operand 9']
    #allocation17 [shape = 'u8[4096]{0}', space=vmem, size = 0x1000, scoped, tag = 'packed  for operand 9']
    loop: start=0, step=1, limit=10
    $region2: #{custom-call.6} parent=1 // loop_pre_header
      _
    $region3: #{custom-call.6} parent=1 // loop_header
      %s12 = sphi 0, %s16
      %p13 = scmp.ge.s32.totalorder %s12, 10
      %s24 = sphi 0, %s26
      %s27 = sphi 0, %s24
      %s28 = sphi 0, %s27
      %s44 = sphi 0, %s28
      %s52 = sphi 0, %s54
      %s55 = sphi 0, %s52
      %s56 = sphi 0, %s55
      %s72 = sphi 0, %s56
    $region4: #{custom-call.6} parent=1 // loop_header_branch
      %15 = sbr.rel (%p13) target = $region8
    $region5: #{custom-call.6} parent=1 // loop_body
      %s17 = ssub.s32 %s12, 1
      %s18 = ssub.s32 %s12, 2
      %s19 = sadd.s32 %s12, 1
      %s20 = sshrl.u32 %s12, 3
      %s21 = sshrl.u32 %s19, 3
      %s22 = ssub.s32 %s20, %s21
      %p23 = scmp.eq.s32.totalorder %s22, 0
      %s25 = sadd.s32 %s24, 1
      %s26 = scalar_select %p23, %s24, %s25
      %p29 = pneg %p23
      %p30 = scmp.eq.s32.totalorder %s12, 7
      %p31 = por %p29, %p30
      %p32 = scmp.ne.s32.totalorder %s24, %s27
      %p33 = scmp.eq.s32.totalorder %s12, 0
      %p34 = por %p32, %p33
      %p35 = scmp.ne.s32.totalorder %s24, %s27
      %p36 = scmp.eq.s32.totalorder %s17, 7
      %p37 = por %p35, %p36
      %p38 = scmp.ne.s32.totalorder %s27, %s28
      %p39 = scmp.eq.s32.totalorder %s17, 0
      %p40 = por %p38, %p39
      %p41 = scmp.ne.s32.totalorder %s27, %s28
      %p42 = scmp.eq.s32.totalorder %s18, 7
      %p43 = por %p41, %p42
      %p45 = scmp.ne.s32.totalorder %s28, %s44
      %p46 = scmp.eq.s32.totalorder %s18, 0
      %p47 = por %p45, %p46
      %s48 = sshrl.u32 %s12, 3
      %s49 = sshrl.u32 %s19, 3
      %s50 = ssub.s32 %s48, %s49
      %p51 = scmp.eq.s32.totalorder %s50, 0
      %s53 = sadd.s32 %s52, 1
      %s54 = scalar_select %p51, %s52, %s53
      %p57 = pneg %p51
      %p58 = scmp.eq.s32.totalorder %s12, 7
      %p59 = por %p57, %p58
      %p60 = scmp.ne.s32.totalorder %s52, %s55
      %p61 = scmp.eq.s32.totalorder %s12, 0
      %p62 = por %p60, %p61
      %p63 = scmp.ne.s32.totalorder %s52, %s55
      %p64 = scmp.eq.s32.totalorder %s17, 7
      %p65 = por %p63, %p64
      %p66 = scmp.ne.s32.totalorder %s55, %s56
      %p67 = scmp.eq.s32.totalorder %s17, 0
      %p68 = por %p66, %p67
      %p69 = scmp.ne.s32.totalorder %s55, %s56
      %p70 = scmp.eq.s32.totalorder %s18, 7
      %p71 = por %p69, %p70
      %p73 = scmp.ne.s32.totalorder %s56, %s72
      %p74 = scmp.eq.s32.totalorder %s18, 0
      %p75 = por %p73, %p74
      %p76 = scmp.le.s32.totalorder 1, %s12
      %p77 = scmp.lt.s32.totalorder %s12, 9
      %p78 = pnand %p76, %p77
      %p79 = pneg %p78
      // Predicated region
      $region9: #{custom-call.6} parent=5 // pred_check
        _
      $region10: #{custom-call.6} parent=5 // pred_check_branch
        %81 = sbr.rel (%p78) target = $region12
      $region11: #{custom-call.6} parent=5 // pred_region
        %s82 = ssub.s32 %s12, 1
      $region12: #{custom-call.6} parent=5 // pred_fallthru
        _
      %p83 = scmp.lt.s32.totalorder %s12, 8
      // Predicated region
      $region13: #{custom-call.6} parent=5 // pred_check
        %p84 = pneg %p83
      $region14: #{custom-call.6} parent=5 // pred_check_branch
        %86 = sbr.rel (%p84) target = $region16
      $region15: #{custom-call.6} parent=5 // pred_region
        %s87 = sand.u32 %s12, 1
        %s88 = sand.u32 %s12, 1
        %s89 = smul.addr %s88, 4
        %s90 = scalar_lea.vmem [#allocation1], %s89
        %s91 = smul.addr %s12, 4
        %s92 = scalar_lea.vmem %s0, %s91
        // Predicated region
        $region17: #{custom-call.6} parent=15 // pred_check
          _
        $region18: #{custom-call.6} parent=15 // pred_check_branch
          %94 = sbr.rel (0) target = $region20
        $region19: #{custom-call.6} parent=15 // pred_region
          // Predicated region
          $region21: #{custom-call.6} parent=19 // pred_check
            _
          $region22: #{custom-call.6} parent=19 // pred_check_branch
            %96 = sbr.rel target = $region24
          $region23: #{custom-call.6} parent=19 // pred_region
            // Predicated region
            $region36: #{custom-call.6} parent=23 // pred_check
              _
            $region37: #{custom-call.6} parent=23 // pred_check_branch
              %111 = sbr.rel (0) target = $region39
            $region38: #{custom-call.6} parent=23 // pred_region
              loop: start=0, step=1, limit=1
              $region40: #{custom-call.6} parent=38 // loop_pre_header
                _
              $region41: #{custom-call.6} parent=38 // loop_header
                %s114 = sphi 0, %s118
                %p115 = scmp.ge.s32.totalorder %s114, 1
                %s119 = sphi %s92, %s92
                %s120 = sphi %s90, %s90
              $region42: #{custom-call.6} parent=38 // loop_header_branch
                %117 = sbr.rel (%p115) target = $region46
              $region43: #{custom-call.6} parent=38 // loop_body
                %v121 = vld [vmem:[%s119] sm:$0xf]
                %122 = vst [vmem:[%s120] sm:$0xf] %v121
              $region44: #{custom-call.6} parent=38 // loop_footer
                %s118 = sadd.s32 1, %s114
              $region45: #{custom-call.6} parent=38 // loop_footer_branch
                %113 = sbr.rel target = $region41
              $region46: #{custom-call.6} parent=38 // loop_exit
                _
            $region39: #{custom-call.6} parent=23 // pred_fallthru
              _
          $region24: #{custom-call.6} parent=19 // pred_fallthru
            _
          // Predicated region
          $region25: #{custom-call.6} parent=19 // pred_check
            _
          $region26: #{custom-call.6} parent=19 // pred_check_branch
            %98 = sbr.rel (0) target = $region28
          $region27: #{custom-call.6} parent=19 // pred_region
            loop: start=0, step=1, limit=1
            $region29: #{custom-call.6} parent=27 // loop_pre_header
              _
            $region30: #{custom-call.6} parent=27 // loop_header
              %s101 = sphi 0, %s105
              %p102 = scmp.ge.s32.totalorder %s101, 1
              %s106 = sphi %s92, %s92
              %s107 = sphi %s90, %s90
            $region31: #{custom-call.6} parent=27 // loop_header_branch
              %104 = sbr.rel (%p102) target = $region35
            $region32: #{custom-call.6} parent=27 // loop_body
              %v108 = vld [vmem:[%s106] sm:$0xf]
              %109 = vst [vmem:[%s107] sm:$0xf] %v108
            $region33: #{custom-call.6} parent=27 // loop_footer
              %s105 = sadd.s32 1, %s101
            $region34: #{custom-call.6} parent=27 // loop_footer_branch
              %100 = sbr.rel target = $region30
            $region35: #{custom-call.6} parent=27 // loop_exit
              _
          $region28: #{custom-call.6} parent=19 // pred_fallthru
            _
        $region20: #{custom-call.6} parent=15 // pred_fallthru
          _
        %123 = vnop
        %s124 = sand.u32 %s12, 1
        %s125 = sand.u32 %s12, 1
        %s126 = smul.addr %s125, 4
        %s127 = scalar_lea.vmem [#allocation3], %s126
        %s128 = smul.addr %s12, 4
        %s129 = scalar_lea.vmem %s1, %s128
        // Predicated region
        $region47: #{custom-call.6} parent=15 // pred_check
          _
        $region48: #{custom-call.6} parent=15 // pred_check_branch
          %131 = sbr.rel (0) target = $region50
        $region49: #{custom-call.6} parent=15 // pred_region
          // Predicated region
          $region51: #{custom-call.6} parent=49 // pred_check
            _
          $region52: #{custom-call.6} parent=49 // pred_check_branch
            %133 = sbr.rel target = $region54
          $region53: #{custom-call.6} parent=49 // pred_region
            // Predicated region
            $region66: #{custom-call.6} parent=53 // pred_check
              _
            $region67: #{custom-call.6} parent=53 // pred_check_branch
              %148 = sbr.rel (0) target = $region69
            $region68: #{custom-call.6} parent=53 // pred_region
              loop: start=0, step=1, limit=1
              $region70: #{custom-call.6} parent=68 // loop_pre_header
                _
              $region71: #{custom-call.6} parent=68 // loop_header
                %s151 = sphi 0, %s155
                %p152 = scmp.ge.s32.totalorder %s151, 1
                %s156 = sphi %s129, %s129
                %s157 = sphi %s127, %s127
              $region72: #{custom-call.6} parent=68 // loop_header_branch
                %154 = sbr.rel (%p152) target = $region76
              $region73: #{custom-call.6} parent=68 // loop_body
                %v158 = vld [vmem:[%s156] sm:$0xf]
                %159 = vst [vmem:[%s157] sm:$0xf] %v158
              $region74: #{custom-call.6} parent=68 // loop_footer
                %s155 = sadd.s32 1, %s151
              $region75: #{custom-call.6} parent=68 // loop_footer_branch
                %150 = sbr.rel target = $region71
              $region76: #{custom-call.6} parent=68 // loop_exit
                _
            $region69: #{custom-call.6} parent=53 // pred_fallthru
              _
          $region54: #{custom-call.6} parent=49 // pred_fallthru
            _
          // Predicated region
          $region55: #{custom-call.6} parent=49 // pred_check
            _
          $region56: #{custom-call.6} parent=49 // pred_check_branch
            %135 = sbr.rel (0) target = $region58
          $region57: #{custom-call.6} parent=49 // pred_region
            loop: start=0, step=1, limit=1
            $region59: #{custom-call.6} parent=57 // loop_pre_header
              _
            $region60: #{custom-call.6} parent=57 // loop_header
              %s138 = sphi 0, %s142
              %p139 = scmp.ge.s32.totalorder %s138, 1
              %s143 = sphi %s129, %s129
              %s144 = sphi %s127, %s127
            $region61: #{custom-call.6} parent=57 // loop_header_branch
              %141 = sbr.rel (%p139) target = $region65
            $region62: #{custom-call.6} parent=57 // loop_body
              %v145 = vld [vmem:[%s143] sm:$0xf]
              %146 = vst [vmem:[%s144] sm:$0xf] %v145
            $region63: #{custom-call.6} parent=57 // loop_footer
              %s142 = sadd.s32 1, %s138
            $region64: #{custom-call.6} parent=57 // loop_footer_branch
              %137 = sbr.rel target = $region60
            $region65: #{custom-call.6} parent=57 // loop_exit
              _
          $region58: #{custom-call.6} parent=49 // pred_fallthru
            _
        $region50: #{custom-call.6} parent=15 // pred_fallthru
          _
        %160 = vnop
        %s161 = sand.u32 %s12, 1
        %s162 = sand.u32 %s12, 1
        %s163 = smul.addr %s162, 4
        %s164 = scalar_lea.vmem [#allocation5], %s163
        %s165 = smul.addr %s12, 4
        %s166 = scalar_lea.vmem %s2, %s165
        // Predicated region
        $region77: #{custom-call.6} parent=15 // pred_check
          _
        $region78: #{custom-call.6} parent=15 // pred_check_branch
          %168 = sbr.rel (0) target = $region80
        $region79: #{custom-call.6} parent=15 // pred_region
          // Predicated region
          $region81: #{custom-call.6} parent=79 // pred_check
            _
          $region82: #{custom-call.6} parent=79 // pred_check_branch
            %170 = sbr.rel target = $region84
          $region83: #{custom-call.6} parent=79 // pred_region
            // Predicated region
            $region96: #{custom-call.6} parent=83 // pred_check
              _
            $region97: #{custom-call.6} parent=83 // pred_check_branch
              %185 = sbr.rel (0) target = $region99
            $region98: #{custom-call.6} parent=83 // pred_region
              loop: start=0, step=1, limit=1
              $region100: #{custom-call.6} parent=98 // loop_pre_header
                _
              $region101: #{custom-call.6} parent=98 // loop_header
                %s188 = sphi 0, %s192
                %p189 = scmp.ge.s32.totalorder %s188, 1
                %s193 = sphi %s166, %s166
                %s194 = sphi %s164, %s164
              $region102: #{custom-call.6} parent=98 // loop_header_branch
                %191 = sbr.rel (%p189) target = $region106
              $region103: #{custom-call.6} parent=98 // loop_body
                %v195 = vld [vmem:[%s193] sm:$0xf]
                %196 = vst [vmem:[%s194] sm:$0xf] %v195
              $region104: #{custom-call.6} parent=98 // loop_footer
                %s192 = sadd.s32 1, %s188
              $region105: #{custom-call.6} parent=98 // loop_footer_branch
                %187 = sbr.rel target = $region101
              $region106: #{custom-call.6} parent=98 // loop_exit
                _
            $region99: #{custom-call.6} parent=83 // pred_fallthru
              _
          $region84: #{custom-call.6} parent=79 // pred_fallthru
            _
          // Predicated region
          $region85: #{custom-call.6} parent=79 // pred_check
            _
          $region86: #{custom-call.6} parent=79 // pred_check_branch
            %172 = sbr.rel (0) target = $region88
          $region87: #{custom-call.6} parent=79 // pred_region
            loop: start=0, step=1, limit=1
            $region89: #{custom-call.6} parent=87 // loop_pre_header
              _
            $region90: #{custom-call.6} parent=87 // loop_header
              %s175 = sphi 0, %s179
              %p176 = scmp.ge.s32.totalorder %s175, 1
              %s180 = sphi %s166, %s166
              %s181 = sphi %s164, %s164
            $region91: #{custom-call.6} parent=87 // loop_header_branch
              %178 = sbr.rel (%p176) target = $region95
            $region92: #{custom-call.6} parent=87 // loop_body
              %v182 = vld [vmem:[%s180] sm:$0xf]
              %183 = vst [vmem:[%s181] sm:$0xf] %v182
            $region93: #{custom-call.6} parent=87 // loop_footer
              %s179 = sadd.s32 1, %s175
            $region94: #{custom-call.6} parent=87 // loop_footer_branch
              %174 = sbr.rel target = $region90
            $region95: #{custom-call.6} parent=87 // loop_exit
              _
          $region88: #{custom-call.6} parent=79 // pred_fallthru
            _
        $region80: #{custom-call.6} parent=15 // pred_fallthru
          _
        %197 = vnop
        %s198 = sand.u32 %s12, 1
        %s199 = sand.u32 %s12, 1
        %s200 = smul.addr %s199, 4
        %s201 = scalar_lea.vmem [#allocation7], %s200
        %s202 = smul.addr %s12, 4
        %s203 = scalar_lea.vmem %s3, %s202
        // Predicated region
        $region107: #{custom-call.6} parent=15 // pred_check
          _
        $region108: #{custom-call.6} parent=15 // pred_check_branch
          %205 = sbr.rel (0) target = $region110
        $region109: #{custom-call.6} parent=15 // pred_region
          // Predicated region
          $region111: #{custom-call.6} parent=109 // pred_check
            _
          $region112: #{custom-call.6} parent=109 // pred_check_branch
            %207 = sbr.rel target = $region114
          $region113: #{custom-call.6} parent=109 // pred_region
            // Predicated region
            $region126: #{custom-call.6} parent=113 // pred_check
              _
            $region127: #{custom-call.6} parent=113 // pred_check_branch
              %222 = sbr.rel (0) target = $region129
            $region128: #{custom-call.6} parent=113 // pred_region
              loop: start=0, step=1, limit=1
              $region130: #{custom-call.6} parent=128 // loop_pre_header
                _
              $region131: #{custom-call.6} parent=128 // loop_header
                %s225 = sphi 0, %s229
                %p226 = scmp.ge.s32.totalorder %s225, 1
                %s230 = sphi %s203, %s203
                %s231 = sphi %s201, %s201
              $region132: #{custom-call.6} parent=128 // loop_header_branch
                %228 = sbr.rel (%p226) target = $region136
              $region133: #{custom-call.6} parent=128 // loop_body
                %v232 = vld [vmem:[%s230] sm:$0xf]
                %233 = vst [vmem:[%s231] sm:$0xf] %v232
              $region134: #{custom-call.6} parent=128 // loop_footer
                %s229 = sadd.s32 1, %s225
              $region135: #{custom-call.6} parent=128 // loop_footer_branch
                %224 = sbr.rel target = $region131
              $region136: #{custom-call.6} parent=128 // loop_exit
                _
            $region129: #{custom-call.6} parent=113 // pred_fallthru
              _
          $region114: #{custom-call.6} parent=109 // pred_fallthru
            _
          // Predicated region
          $region115: #{custom-call.6} parent=109 // pred_check
            _
          $region116: #{custom-call.6} parent=109 // pred_check_branch
            %209 = sbr.rel (0) target = $region118
          $region117: #{custom-call.6} parent=109 // pred_region
            loop: start=0, step=1, limit=1
            $region119: #{custom-call.6} parent=117 // loop_pre_header
              _
            $region120: #{custom-call.6} parent=117 // loop_header
              %s212 = sphi 0, %s216
              %p213 = scmp.ge.s32.totalorder %s212, 1
              %s217 = sphi %s203, %s203
              %s218 = sphi %s201, %s201
            $region121: #{custom-call.6} parent=117 // loop_header_branch
              %215 = sbr.rel (%p213) target = $region125
            $region122: #{custom-call.6} parent=117 // loop_body
              %v219 = vld [vmem:[%s217] sm:$0xf]
              %220 = vst [vmem:[%s218] sm:$0xf] %v219
            $region123: #{custom-call.6} parent=117 // loop_footer
              %s216 = sadd.s32 1, %s212
            $region124: #{custom-call.6} parent=117 // loop_footer_branch
              %211 = sbr.rel target = $region120
            $region125: #{custom-call.6} parent=117 // loop_exit
              _
          $region118: #{custom-call.6} parent=109 // pred_fallthru
            _
        $region110: #{custom-call.6} parent=15 // pred_fallthru
          _
        %234 = vnop
      $region16: #{custom-call.6} parent=5 // pred_fallthru
        _
      %p235 = scmp.le.s32.totalorder 1, %s12
      %p236 = scmp.lt.s32.totalorder %s12, 9
      %p237 = pnand %p235, %p236
      %p238 = pneg %p237
      // Predicated region
      $region137: #{custom-call.6} parent=5 // pred_check
        _
      $region138: #{custom-call.6} parent=5 // pred_check_branch
        %240 = sbr.rel (%p237) target = $region140
      $region139: #{custom-call.6} parent=5 // pred_region
        #allocation18 [shape = 'f32[4,4]{1,0}', space=vmem, size = 0x1000, scoped, tag = 'a top-left matrix']
        #allocation19 [shape = 'f32[4,4]{1,0}', space=vmem, size = 0x1000, scoped, tag = 'a top-right matrix']
        #allocation20 [shape = 'f32[4,4]{1,0}', space=vmem, size = 0x1000, scoped, tag = 'a bottom-left matrix']
        #allocation21 [shape = 'f32[4,4]{1,0}', space=vmem, size = 0x1000, scoped, tag = 'a bottom-right matrix']
        %s241 = ssub.s32 %s12, 1
        %s242 = sand.u32 %s17, 1
        %s243 = sand.u32 %s17, 1
        %s244 = smul.addr %s243, 4
        %s245 = scalar_lea.vmem [#allocation1], %s244
        %s246 = sand.u32 %s17, 1
        %s247 = sand.u32 %s17, 1
        %s248 = smul.addr %s247, 4
        %s249 = scalar_lea.vmem [#allocation3], %s248
        %s250 = sand.u32 %s17, 1
        %s251 = sand.u32 %s17, 1
        %s252 = smul.addr %s251, 4
        %s253 = scalar_lea.vmem [#allocation5], %s252
        %s254 = sand.u32 %s17, 1
        %s255 = sand.u32 %s17, 1
        %s256 = smul.addr %s255, 4
        %s257 = scalar_lea.vmem [#allocation7], %s256
        %s258 = sand.u32 %s17, 1
        %s259 = sand.u32 %s17, 1
        %s260 = smul.addr %s259, 4
        %s261 = scalar_lea.vmem [#allocation1], %s260
        %s262 = sand.u32 %s17, 1
        %s263 = sand.u32 %s17, 1
        %s264 = smul.addr %s263, 4
        %s265 = scalar_lea.vmem [#allocation3], %s264
        %s266 = sand.u32 %s17, 1
        %s267 = sand.u32 %s17, 1
        %s268 = smul.addr %s267, 4
        %s269 = scalar_lea.vmem [#allocation5], %s268
        %s270 = sand.u32 %s17, 1
        %s271 = sand.u32 %s17, 1
        %s272 = smul.addr %s271, 4
        %s273 = scalar_lea.vmem [#allocation7], %s272
        %p274 = pneg %p40
        %p275 = pneg %p37
        %s276 = sand.u32 %s27, 1
        %s277 = sand.u32 %s27, 1
        %s278 = smul.addr %s277, 8
        %s279 = scalar_lea.vmem [#allocation8], %s278
        %p280 = pneg %p68
        %p281 = pneg %p65
        %s282 = sand.u32 %s55, 1
        %s283 = sand.u32 %s55, 1
        %s284 = smul.addr %s283, 8
        %s285 = scalar_lea.vmem [#allocation9], %s284
        %s286 = sand.u32 %s17, 1
        %s287 = sand.u32 %s17, 1
        %s288 = smul.addr %s287, 4
        %s289 = scalar_lea.vmem [#allocation11], %s288
        %s290 = sand.u32 %s17, 1
        %s291 = sand.u32 %s17, 1
        %s292 = smul.addr %s291, 4
        %s293 = scalar_lea.vmem [#allocation13], %s292
        %s294 = sand.u32 %s17, 1
        %s295 = sand.u32 %s17, 1
        %s296 = smul.addr %s295, 4
        %s297 = scalar_lea.vmem [#allocation15], %s296
        %s298 = sand.u32 %s17, 1
        %s299 = sand.u32 %s17, 1
        %s300 = smul.addr %s299, 4
        %s301 = scalar_lea.vmem [#allocation17], %s300
        %s303 = sshllo.u32 0, 4
        %v304 = vld [vmem:[%s261] sm:%s303]
        %305 = vst [vmem:[#allocation0] sm:%s303] %v304
        %s307 = sshllo.u32 0, 4
        %v308 = vld [vmem:[%s265] sm:%s307]
        %309 = vst [vmem:[#allocation2] sm:%s307] %v308
        %s311 = sshllo.u32 0, 4
        %v312 = vld [vmem:[%s269] sm:%s311]
        %313 = vst [vmem:[#allocation4] sm:%s311] %v312
        %s315 = sshllo.u32 0, 4
        %v316 = vld [vmem:[%s273] sm:%s315]
        %317 = vst [vmem:[#allocation6] sm:%s315] %v316
        %s318 = sshrl.u32 %s17, 3
        %s319 = sshrl.u32 %s17, 3
        %s320 = smov [#allocation18]
        %v321 = vld [vmem:[#allocation0] sm:$0xff]
        %322 = vst [vmem:[%s320] sm:$0xff] %v321
        %s323 = smov [#allocation19]
        %v324 = vld [vmem:[#allocation2] sm:$0xff]
        %325 = vst [vmem:[%s323] sm:$0xff] %v324
        %s326 = smov [#allocation20]
        %v327 = vld [vmem:[#allocation4] sm:$0xff]
        %328 = vst [vmem:[%s326] sm:$0xff] %v327
        %s329 = smov [#allocation21]
        %v330 = vld [vmem:[#allocation6] sm:$0xff]
        %331 = vst [vmem:[%s329] sm:$0xff] %v330
        %332 = vst [vmem:[#allocation10] sm:$0xff] 0.0
        %333 = vst [vmem:[#allocation12] sm:$0xff] 0.0
        %334 = vst [vmem:[#allocation14] sm:$0xff] 0.0
        %335 = vst [vmem:[#allocation16] sm:$0xff] 0.0
        %s336 = smov [#allocation10]
        %v337 = vlaneseq
        %v338 = vand.u32 %v337, 127
        %v339 = vmov %v338
        %v340 = vlaneseq
        %v341 = vshrl.u32 %v340, 7
        %v342 = vmov %v341
        %v343 = vld [vmem:[%s336] sm:$0xf]
        %vm346 = vcmp.eq.s32.totalorder %v342, %v339
        %v347 = vsel %vm346, 1.0, %v343
        %348 = vst [vmem:[%s336] sm:$0xf] %v347
        %s349 = smov [#allocation16]
        %v350 = vlaneseq
        %v351 = vand.u32 %v350, 127
        %v352 = vmov %v351
        %v353 = vlaneseq
        %v354 = vshrl.u32 %v353, 7
        %v355 = vmov %v354
        %v356 = vld [vmem:[%s349] sm:$0xf]
        %vm359 = vcmp.eq.s32.totalorder %v355, %v352
        %v360 = vsel %vm359, 1.0, %v356
        %361 = vst [vmem:[%s349] sm:$0xf] %v360
        // While loop
        $region141: #{custom-call.6} parent=139 // loop_pre_header
          _
        $region142: #{custom-call.6} parent=139 // loop_header
          %s363 = sphi 0, %s905
          %v364 = vlaneseq
          %v365 = vand.u32 %v364, 127
          %v366 = vmov %v365
          %v367 = vlaneseq
          %v368 = vshrl.u32 %v367, 7
          %v369 = vmov %v368
          %s370 = smov [#allocation18]
          %v371 = vlaneseq
          %v372 = vand.u32 %v371, 127
          %vm373 = vcmp.ge.s32.totalorder %v372, 0
          %vm374 = vcmp.lt.s32.totalorder %v372, 4
          %vm375 = vmand %vm373, %vm374
          %v376 = vld [vmem:[%s370] sm:$0xf]
          %v377 = vsel %vm375, %v376, 0.0
          %v378 = vmul.f32 %v377, %v377
          %vm381 = vcmp.eq.s32.totalorder %v369, %v366
          %v382 = vsel %vm381, 0.0, %v378
          %v383 = vlaneseq
          %v384 = vand.u32 %v383, 127
          %v385 = vmov %v384
          %v386 = vlaneseq
          %v387 = vshrl.u32 %v386, 7
          %v388 = vmov %v387
          %s389 = smov [#allocation19]
          %v390 = vlaneseq
          %v391 = vand.u32 %v390, 127
          %vm392 = vcmp.ge.s32.totalorder %v391, 0
          %vm393 = vcmp.lt.s32.totalorder %v391, 4
          %vm394 = vmand %vm392, %vm393
          %v395 = vld [vmem:[%s389] sm:$0xf]
          %v396 = vsel %vm394, %v395, 0.0
          %v397 = vmul.f32 %v396, %v396
          %v398 = vadd.f32 %v382, %v397
          %v399 = vadd.f32 %v378, %v397
          %v400 = vlaneseq
          %v401 = vand.u32 %v400, 127
          %v402 = vmov %v401
          %v403 = vlaneseq
          %v404 = vshrl.u32 %v403, 7
          %v405 = vmov %v404
          %s406 = smov [#allocation20]
          %v407 = vlaneseq
          %v408 = vand.u32 %v407, 127
          %vm409 = vcmp.ge.s32.totalorder %v408, 0
          %vm410 = vcmp.lt.s32.totalorder %v408, 4
          %vm411 = vmand %vm409, %vm410
          %v412 = vld [vmem:[%s406] sm:$0xf]
          %v413 = vsel %vm411, %v412, 0.0
          %v414 = vmul.f32 %v413, %v413
          %v415 = vadd.f32 %v398, %v414
          %v416 = vadd.f32 %v399, %v414
          %v417 = vlaneseq
          %v418 = vand.u32 %v417, 127
          %v419 = vmov %v418
          %v420 = vlaneseq
          %v421 = vshrl.u32 %v420, 7
          %v422 = vmov %v421
          %s423 = smov [#allocation21]
          %v424 = vlaneseq
          %v425 = vand.u32 %v424, 127
          %vm426 = vcmp.ge.s32.totalorder %v425, 0
          %vm427 = vcmp.lt.s32.totalorder %v425, 4
          %vm428 = vmand %vm426, %vm427
          %v429 = vld [vmem:[%s423] sm:$0xf]
          %v430 = vsel %vm428, %v429, 0.0
          %v431 = vmul.f32 %v430, %v430
          %vm434 = vcmp.eq.s32.totalorder %v422, %v419
          %v435 = vsel %vm434, 0.0, %v431
          %v436 = vadd.f32 %v415, %v435
          %v437 = vadd.f32 %v416, %v431
          %438 = vadd.xlane.f32.xlu0 %v437
          %v439 = vpop.xlane.xlu0 %438
          %v440 = vrot.slane %v439, 4
          %v441 = vadd.f32 %v439, %v440
          %v442 = vrot.slane %v441, 2
          %v443 = vadd.f32 %v441, %v442
          %v444 = vrot.slane %v443, 1
          %v445 = vadd.f32 %v443, %v444
          %446 = vadd.xlane.f32.xlu0 %v436
          %v447 = vpop.xlane.xlu0 %446
          %v448 = vrot.slane %v447, 4
          %v449 = vadd.f32 %v447, %v448
          %v450 = vrot.slane %v449, 2
          %v451 = vadd.f32 %v449, %v450
          %v452 = vrot.slane %v451, 1
          %v453 = vadd.f32 %v451, %v452
          %s454 = vtos %v453
          %s455 = vtos %v445
          %s456 = smul.f32 1e-10, %s455
          %p457 = scmp.le.f32.partialorder %s454, %s456
          %p458 = scmp.ge.s32.totalorder %s363, 15
          %p459 = por %p457, %p458
        $region143: #{custom-call.6} parent=139 // loop_header_branch
          %907 = sbr.rel (%p459) target = $region147
        $region144: #{custom-call.6} parent=139 // loop_body
          loop: start=0, step=1, limit=7
          $region148: #{custom-call.6} parent=144 // loop_pre_header
            _
          $region149: #{custom-call.6} parent=144 // loop_header
            %s461 = sphi 0, %s465
            %p462 = scmp.ge.s32.totalorder %s461, 7
          $region150: #{custom-call.6} parent=144 // loop_header_branch
            %464 = sbr.rel (%p462) target = $region154
          $region151: #{custom-call.6} parent=144 // loop_body
            #allocation22 [shape = 'f32[1024]{0}', space=vmem, size = 0x1000, scoped, tag = 'a_tl_diag vmem']
            #allocation23 [shape = 'f32[1024]{0}', space=vmem, size = 0x1000, scoped, tag = 'a_tr_diag vmem']
            #allocation24 [shape = 'f32[1024]{0}', space=vmem, size = 0x1000, scoped, tag = 'a_br_diag vmem']
            #allocation25 [shape = 'f32[1024]{0}', space=vmem, size = 0x1000, scoped, tag = 'rt1 vmem']
            #allocation26 [shape = 'f32[1024]{0}', space=vmem, size = 0x1000, scoped, tag = 'rt2 vmem']
            #allocation27 [shape = 'f32[1024]{0}', space=vmem, size = 0x1000, scoped, tag = 'c vmem']
            #allocation28 [shape = 'f32[1024]{0}', space=vmem, size = 0x1000, scoped, tag = 's vmem']
            #allocation29 [shape = 'f32[4096]{0}', space=vmem, size = 0x4000, scoped, tag = 'c broadcast']
            #allocation30 [shape = 'f32[4096]{0}', space=vmem, size = 0x4000, scoped, tag = 's broadcast']
            %s466 = smov [#allocation18]
            %s467 = smov [#allocation22]
            %v468 = vlaneseq
            %v469 = vand.u32 %v468, 127
            %v470 = vmov %v469
            %v471 = vlaneseq
            %v472 = vshrl.u32 %v471, 7
            %v473 = vmov %v472
            %v474 = vld [vmem:[%s466] sm:$0xf]
            %vm477 = vcmp.eq.s32.totalorder %v473, %v470
            %v478 = vsel %vm477, %v474, 0.0
            %v479 = vrot.slane %v478, 4
            %v480 = vadd.f32 %v478, %v479
            %v481 = vrot.slane %v480, 2
            %v482 = vadd.f32 %v480, %v481
            %v483 = vrot.slane %v482, 1
            %v484 = vadd.f32 %v482, %v483
            %485 = vst [vmem:[%s467] sm:$0x1] %v484
            %s486 = smov [#allocation19]
            %s487 = smov [#allocation23]
            %v488 = vlaneseq
            %v489 = vand.u32 %v488, 127
            %v490 = vmov %v489
            %v491 = vlaneseq
            %v492 = vshrl.u32 %v491, 7
            %v493 = vmov %v492
            %v494 = vld [vmem:[%s486] sm:$0xf]
            %vm497 = vcmp.eq.s32.totalorder %v493, %v490
            %v498 = vsel %vm497, %v494, 0.0
            %v499 = vrot.slane %v498, 4
            %v500 = vadd.f32 %v498, %v499
            %v501 = vrot.slane %v500, 2
            %v502 = vadd.f32 %v500, %v501
            %v503 = vrot.slane %v502, 1
            %v504 = vadd.f32 %v502, %v503
            %505 = vst [vmem:[%s487] sm:$0x1] %v504
            %s506 = smov [#allocation21]
            %s507 = smov [#allocation24]
            %v508 = vlaneseq
            %v509 = vand.u32 %v508, 127
            %v510 = vmov %v509
            %v511 = vlaneseq
            %v512 = vshrl.u32 %v511, 7
            %v513 = vmov %v512
            %v514 = vld [vmem:[%s506] sm:$0xf]
            %vm517 = vcmp.eq.s32.totalorder %v513, %v510
            %v518 = vsel %vm517, %v514, 0.0
            %v519 = vrot.slane %v518, 4
            %v520 = vadd.f32 %v518, %v519
            %v521 = vrot.slane %v520, 2
            %v522 = vadd.f32 %v520, %v521
            %v523 = vrot.slane %v522, 1
            %v524 = vadd.f32 %v522, %v523
            %525 = vst [vmem:[%s507] sm:$0x1] %v524
            %s526 = smov [#allocation27]
            %s527 = smov [#allocation28]
            %s528 = smov [#allocation22]
            %v529 = vld [vmem:[%s528] sm:$0xff]
            %s530 = smov [#allocation23]
            %v531 = vld [vmem:[%s530] sm:$0xff]
            %s532 = smov [#allocation24]
            %v533 = vld [vmem:[%s532] sm:$0xff]
            %v534 = vsub.f32 %v533, %v529
            %v535 = vmul.f32 2.0, %v531
            %v536 = vrcp.pop %v535
            %v537 = vmul.f32 %v534, %v536
            %vm538 = vcmp.ge.f32.partialorder %v537, 0.0
            %v539 = vmul.f32 %v537, %v537
            %v540 = vadd.f32 1.0, %v539
            %v541 = vrsqrt.pop %v540
            %v542 = vmul.f32 %v540, %v541
            %vm543 = vcmp.eq.f32.partialorder %v540, inf
            %v544 = vsel %vm543, %v540, %v542
            %vm545 = vcmp.eq.f32.partialorder %v540, 0.0
            %v546 = vand.u32 %v540, 2147483648
            %v547 = vsel %vm545, %v546, %v544
            %v548 = vxor.u32 %v547, 2147483648
            %v549 = vsel %vm538, %v547, %v548
            %v550 = vadd.f32 %v537, %v549
            %v551 = vrcp.pop %v550
            %v552 = vand.u32 2147483647, %v529
            %v553 = vand.u32 2147483647, %v531
            %v554 = vand.u32 2147483647, %v533
            %v555 = vmin.f32 %v552, %v554
            %v556 = vmul.f32 1.1920929e-08, %v555
            %vm557 = vcmp.le.f32.partialorder %v553, %v556
            %v558 = vsel %vm557, 0.0, %v551
            %v559 = vmul.f32 %v558, %v558
            %v560 = vadd.f32 1.0, %v559
            %v561 = vrsqrt.pop %v560
            %v562 = vmul.f32 %v558, %v561
            %v563 = vmul.f32 %v558, %v531
            %v564 = vsub.f32 %v529, %v563
            %v565 = vmul.f32 %v558, %v531
            %v566 = vadd.f32 %v533, %v565
            %s567 = smov [#allocation25]
            %568 = vst [vmem:[%s567] sm:$0xff] %v564
            %s569 = smov [#allocation26]
            %570 = vst [vmem:[%s569] sm:$0xff] %v566
            %s571 = smov %s526
            %572 = vst [vmem:[%s571] sm:$0xff] %v561
            %s573 = smov %s527
            %574 = vst [vmem:[%s573] sm:$0xff] %v562
            %s575 = smov [#allocation27]
            %v576 = vld [vmem:[%s575] ss:$0 sm:$0xff]
            %v577 = vlaneseq
            %v578 = vand.u32 %v577, 127
            %v579 = vmov %v578
            %v580 = vlaneseq
            %v581 = vshrl.u32 %v580, 7
            %v582 = vmov %v581
            %vm584 = vcmp.eq.s32.totalorder %v582, %v579
            %v585 = vsel %vm584, %v576, 0.0
            %586 = vadd.xlane.f32.xlu0 %v585
            %v587 = vpop.xlane.xlu0 %586
            %s588 = smov [#allocation29]
            %589 = vst [vmem:[%s588] sm:$0xff] %v587
            %s590 = smov [#allocation28]
            %v591 = vld [vmem:[%s590] ss:$0 sm:$0xff]
            %v592 = vlaneseq
            %v593 = vand.u32 %v592, 127
            %v594 = vmov %v593
            %v595 = vlaneseq
            %v596 = vshrl.u32 %v595, 7
            %v597 = vmov %v596
            %vm599 = vcmp.eq.s32.totalorder %v597, %v594
            %v600 = vsel %vm599, %v591, 0.0
            %601 = vadd.xlane.f32.xlu0 %v600
            %v602 = vpop.xlane.xlu0 %601
            %s603 = smov [#allocation30]
            %604 = vst [vmem:[%s603] sm:$0xff] %v602
            %s605 = smov [#allocation29]
            %v606 = vld [vmem:[%s605] sm:$0xff]
            %s607 = smov [#allocation30]
            %v608 = vld [vmem:[%s607] sm:$0xff]
            %s609 = smov [#allocation18]
            %s610 = smov [#allocation19]
            %s611 = smov [#allocation20]
            %s612 = smov [#allocation21]
            %v613 = vld [vmem:[%s609] sm:$0xf]
            %v614 = vld [vmem:[%s610] sm:$0xf]
            %v615 = vld [vmem:[%s611] sm:$0xf]
            %v616 = vld [vmem:[%s612] sm:$0xf]
            %v617 = vmul.f32 %v606, %v613
            %v618 = vmul.f32 %v608, %v615
            %v619 = vsub.f32 %v617, %v618
            %v620 = vmul.f32 %v606, %v614
            %v621 = vmul.f32 %v608, %v616
            %v622 = vsub.f32 %v620, %v621
            %v623 = vmul.f32 %v608, %v613
            %v624 = vmul.f32 %v606, %v615
            %v625 = vadd.f32 %v623, %v624
            %v626 = vmul.f32 %v608, %v614
            %v627 = vmul.f32 %v606, %v616
            %v628 = vadd.f32 %v626, %v627
            %629 = vst [vmem:[%s609] sm:$0xf] %v619
            %630 = vst [vmem:[%s610] sm:$0xf] %v622
            %631 = vst [vmem:[%s611] sm:$0xf] %v625
            %632 = vst [vmem:[%s612] sm:$0xf] %v628
            %s633 = smov [#allocation27]
            %v634 = vld [vmem:[%s633] ss:$0 sm:$0xff]
            %s635 = smov [#allocation28]
            %v636 = vld [vmem:[%s635] ss:$0 sm:$0xff]
            %s637 = smov [#allocation18]
            %s638 = smov [#allocation19]
            %s639 = smov [#allocation20]
            %s640 = smov [#allocation21]
            %v641 = vld [vmem:[%s637] sm:$0xf]
            %v642 = vld [vmem:[%s638] sm:$0xf]
            %v643 = vld [vmem:[%s639] sm:$0xf]
            %v644 = vld [vmem:[%s640] sm:$0xf]
            %v645 = vmul.f32 %v634, %v641
            %v646 = vmul.f32 %v636, %v642
            %v647 = vsub.f32 %v645, %v646
            %v648 = vmul.f32 %v636, %v641
            %v649 = vmul.f32 %v634, %v642
            %v650 = vadd.f32 %v648, %v649
            %v651 = vmul.f32 %v634, %v643
            %v652 = vmul.f32 %v636, %v644
            %v653 = vsub.f32 %v651, %v652
            %v654 = vmul.f32 %v636, %v643
            %v655 = vmul.f32 %v634, %v644
            %v656 = vadd.f32 %v654, %v655
            %657 = vst [vmem:[%s637] sm:$0xf] %v647
            %658 = vst [vmem:[%s638] sm:$0xf] %v650
            %659 = vst [vmem:[%s639] sm:$0xf] %v653
            %660 = vst [vmem:[%s640] sm:$0xf] %v656
            %s661 = smov [#allocation18]
            %s662 = smov [#allocation25]
            %v663 = vlaneseq
            %v664 = vand.u32 %v663, 127
            %v665 = vmov %v664
            %v666 = vlaneseq
            %v667 = vshrl.u32 %v666, 7
            %v668 = vmov %v667
            %v669 = vld [vmem:[%s662] ss:$0 sm:$0xff]
            %v670 = vld [vmem:[%s661] sm:$0xf]
            %vm673 = vcmp.eq.s32.totalorder %v668, %v665
            %v674 = vsel %vm673, %v669, %v670
            %675 = vst [vmem:[%s661] sm:$0xf] %v674
            %s676 = smov [#allocation19]
            %v677 = vlaneseq
            %v678 = vand.u32 %v677, 127
            %v679 = vmov %v678
            %v680 = vlaneseq
            %v681 = vshrl.u32 %v680, 7
            %v682 = vmov %v681
            %v683 = vld [vmem:[%s676] sm:$0xf]
            %vm686 = vcmp.eq.s32.totalorder %v682, %v679
            %v687 = vsel %vm686, 0.0, %v683
            %688 = vst [vmem:[%s676] sm:$0xf] %v687
            %s689 = smov [#allocation20]
            %v690 = vlaneseq
            %v691 = vand.u32 %v690, 127
            %v692 = vmov %v691
            %v693 = vlaneseq
            %v694 = vshrl.u32 %v693, 7
            %v695 = vmov %v694
            %v696 = vld [vmem:[%s689] sm:$0xf]
            %vm699 = vcmp.eq.s32.totalorder %v695, %v692
            %v700 = vsel %vm699, 0.0, %v696
            %701 = vst [vmem:[%s689] sm:$0xf] %v700
            %s702 = smov [#allocation21]
            %s703 = smov [#allocation26]
            %v704 = vlaneseq
            %v705 = vand.u32 %v704, 127
            %v706 = vmov %v705
            %v707 = vlaneseq
            %v708 = vshrl.u32 %v707, 7
            %v709 = vmov %v708
            %v710 = vld [vmem:[%s703] ss:$0 sm:$0xff]
            %v711 = vld [vmem:[%s702] sm:$0xf]
            %vm714 = vcmp.eq.s32.totalorder %v709, %v706
            %v715 = vsel %vm714, %v710, %v711
            %716 = vst [vmem:[%s702] sm:$0xf] %v715
            %s717 = smov [#allocation18]
            %s718 = smov [#allocation19]
            %v719 = vld [vmem:[%s718] sm:$0xf]
            %720 = vrot.lane.b32.xlu0 %v719, 1
            %v721 = vpop.permute.xlu0 %720
            %v722 = vld [vmem:[%s717] sm:$0xf]
            %v723 = vld [vmem:[%s717] sm:$0xf]
            %724 = vrot.lane.b32.xlu0 %v723, 1
            %v725 = vpop.permute.xlu0 %724
            %v726 = vlaneseq
            %v727 = vand.u32 %v726, 127
            %vm728 = vcmp.eq.s32.totalorder %v727, 0
            %v729 = vsel %vm728, %v723, %v725
            %v730 = vlaneseq
            %v731 = vand.u32 %v730, 127
            %vm732 = vcmp.eq.s32.totalorder %v731, 1
            %v733 = vsel %vm732, %v721, %v729
            %v734 = vlaneseq
            %v735 = vand.u32 %v734, 127
            %vm736 = vcmp.ge.s32.totalorder %v735, 0
            %vm737 = vcmp.lt.s32.totalorder %v735, 4
            %vm738 = vmand %vm736, %vm737
            %v739 = vsel %vm738, %v733, 0.0
            %v740 = vld [vmem:[%s718] sm:$0xf]
            %741 = vrot.lane.b32.xlu0 %v740, 127
            %v742 = vpop.permute.xlu0 %741
            %v743 = vlaneseq
            %v744 = vand.u32 %v743, 127
            %vm745 = vcmp.eq.s32.totalorder %v744, 3
            %v746 = vsel %vm745, %v722, %v742
            %747 = vst [vmem:[%s717] sm:$0xf] %v739
            %748 = vst [vmem:[%s718] sm:$0xf] %v746
            %s749 = smov [#allocation20]
            %s750 = smov [#allocation21]
            %v751 = vld [vmem:[%s750] sm:$0xf]
            %752 = vrot.lane.b32.xlu0 %v751, 1
            %v753 = vpop.permute.xlu0 %752
            %v754 = vld [vmem:[%s749] sm:$0xf]
            %v755 = vld [vmem:[%s749] sm:$0xf]
            %756 = vrot.lane.b32.xlu0 %v755, 1
            %v757 = vpop.permute.xlu0 %756
            %v758 = vlaneseq
            %v759 = vand.u32 %v758, 127
            %vm760 = vcmp.eq.s32.totalorder %v759, 0
            %v761 = vsel %vm760, %v755, %v757
            %v762 = vlaneseq
            %v763 = vand.u32 %v762, 127
            %vm764 = vcmp.eq.s32.totalorder %v763, 1
            %v765 = vsel %vm764, %v753, %v761
            %v766 = vlaneseq
            %v767 = vand.u32 %v766, 127
            %vm768 = vcmp.ge.s32.totalorder %v767, 0
            %vm769 = vcmp.lt.s32.totalorder %v767, 4
            %vm770 = vmand %vm768, %vm769
            %v771 = vsel %vm770, %v765, 0.0
            %v772 = vld [vmem:[%s750] sm:$0xf]
            %773 = vrot.lane.b32.xlu0 %v772, 127
            %v774 = vpop.permute.xlu0 %773
            %v775 = vlaneseq
            %v776 = vand.u32 %v775, 127
            %vm777 = vcmp.eq.s32.totalorder %v776, 3
            %v778 = vsel %vm777, %v754, %v774
            %779 = vst [vmem:[%s749] sm:$0xf] %v771
            %780 = vst [vmem:[%s750] sm:$0xf] %v778
            %s781 = smov [#allocation18]
            %s782 = smov [#allocation20]
            %v783 = vld [vmem:[%s781] ss:$0 sm:$0xff]
            %s785 = scalar_lea.vmem %s781, 4294967295
            %v786 = vld [vmem:[%s785] sm:$0xe]
            %v787 = vlaneseq
            %v788 = vshrl.u32 %v787, 7
            %vm789 = vcmp.eq.s32.totalorder %v788, 0
            %v790 = vsel %vm789, %v783, %v786
            %s791 = scalar_lea.vmem %s781, 3
            %v792 = vld [vmem:[%s791] ss:$0 sm:$0xff]
            %793 = vst [vmem:[%s781] sm:$0xf] %v790
            %v794 = vld [vmem:[%s782] ss:$0 sm:$0xff]
            %s795 = scalar_lea.vmem %s781, 1
            %796 = vst [vmem:[%s795] sm:$0x1] %v794
            %s797 = scalar_lea.vmem %s782, 1
            %v798 = vld [vmem:[%s797] sm:$0x7]
            %v799 = vlaneseq
            %v800 = vshrl.u32 %v799, 7
            %vm801 = vcmp.eq.s32.totalorder %v800, 3
            %v802 = vsel %vm801, %v792, %v798
            %v803 = vld [vmem:[%s782] ss:$0 sm:$0xff]
            %804 = vst [vmem:[%s782] sm:$0xf] %v802
            %s805 = smov [#allocation19]
            %s806 = smov [#allocation21]
            %v807 = vld [vmem:[%s805] ss:$0 sm:$0xff]
            %s809 = scalar_lea.vmem %s805, 4294967295
            %v810 = vld [vmem:[%s809] sm:$0xe]
            %v811 = vlaneseq
            %v812 = vshrl.u32 %v811, 7
            %vm813 = vcmp.eq.s32.totalorder %v812, 0
            %v814 = vsel %vm813, %v807, %v810
            %s815 = scalar_lea.vmem %s805, 3
            %v816 = vld [vmem:[%s815] ss:$0 sm:$0xff]
            %817 = vst [vmem:[%s805] sm:$0xf] %v814
            %v818 = vld [vmem:[%s806] ss:$0 sm:$0xff]
            %s819 = scalar_lea.vmem %s805, 1
            %820 = vst [vmem:[%s819] sm:$0x1] %v818
            %s821 = scalar_lea.vmem %s806, 1
            %v822 = vld [vmem:[%s821] sm:$0x7]
            %v823 = vlaneseq
            %v824 = vshrl.u32 %v823, 7
            %vm825 = vcmp.eq.s32.totalorder %v824, 3
            %v826 = vsel %vm825, %v816, %v822
            %v827 = vld [vmem:[%s806] ss:$0 sm:$0xff]
            %828 = vst [vmem:[%s806] sm:$0xf] %v826
            %s829 = smov [#allocation29]
            %v830 = vld [vmem:[%s829] sm:$0xff]
            %s831 = smov [#allocation30]
            %v832 = vld [vmem:[%s831] sm:$0xff]
            %s833 = smov [#allocation10]
            %s834 = smov [#allocation12]
            %s835 = smov [#allocation14]
            %s836 = smov [#allocation16]
            %v837 = vld [vmem:[%s833] sm:$0xf]
            %v838 = vld [vmem:[%s834] sm:$0xf]
            %v839 = vld [vmem:[%s835] sm:$0xf]
            %v840 = vld [vmem:[%s836] sm:$0xf]
            %v841 = vmul.f32 %v830, %v837
            %v842 = vmul.f32 %v832, %v839
            %v843 = vsub.f32 %v841, %v842
            %v844 = vmul.f32 %v830, %v838
            %v845 = vmul.f32 %v832, %v840
            %v846 = vsub.f32 %v844, %v845
            %v847 = vmul.f32 %v832, %v837
            %v848 = vmul.f32 %v830, %v839
            %v849 = vadd.f32 %v847, %v848
            %v850 = vmul.f32 %v832, %v838
            %v851 = vmul.f32 %v830, %v840
            %v852 = vadd.f32 %v850, %v851
            %853 = vst [vmem:[%s833] sm:$0xf] %v843
            %854 = vst [vmem:[%s834] sm:$0xf] %v846
            %855 = vst [vmem:[%s835] sm:$0xf] %v849
            %856 = vst [vmem:[%s836] sm:$0xf] %v852
            %s857 = smov [#allocation10]
            %s858 = smov [#allocation14]
            %v859 = vld [vmem:[%s857] ss:$0 sm:$0xff]
            %s861 = scalar_lea.vmem %s857, 4294967295
            %v862 = vld [vmem:[%s861] sm:$0xe]
            %v863 = vlaneseq
            %v864 = vshrl.u32 %v863, 7
            %vm865 = vcmp.eq.s32.totalorder %v864, 0
            %v866 = vsel %vm865, %v859, %v862
            %s867 = scalar_lea.vmem %s857, 3
            %v868 = vld [vmem:[%s867] ss:$0 sm:$0xff]
            %869 = vst [vmem:[%s857] sm:$0xf] %v866
            %v870 = vld [vmem:[%s858] ss:$0 sm:$0xff]
            %s871 = scalar_lea.vmem %s857, 1
            %872 = vst [vmem:[%s871] sm:$0x1] %v870
            %s873 = scalar_lea.vmem %s858, 1
            %v874 = vld [vmem:[%s873] sm:$0x7]
            %v875 = vlaneseq
            %v876 = vshrl.u32 %v875, 7
            %vm877 = vcmp.eq.s32.totalorder %v876, 3
            %v878 = vsel %vm877, %v868, %v874
            %v879 = vld [vmem:[%s858] ss:$0 sm:$0xff]
            %880 = vst [vmem:[%s858] sm:$0xf] %v878
            %s881 = smov [#allocation12]
            %s882 = smov [#allocation16]
            %v883 = vld [vmem:[%s881] ss:$0 sm:$0xff]
            %s885 = scalar_lea.vmem %s881, 4294967295
            %v886 = vld [vmem:[%s885] sm:$0xe]
            %v887 = vlaneseq
            %v888 = vshrl.u32 %v887, 7
            %vm889 = vcmp.eq.s32.totalorder %v888, 0
            %v890 = vsel %vm889, %v883, %v886
            %s891 = scalar_lea.vmem %s881, 3
            %v892 = vld [vmem:[%s891] ss:$0 sm:$0xff]
            %893 = vst [vmem:[%s881] sm:$0xf] %v890
            %v894 = vld [vmem:[%s882] ss:$0 sm:$0xff]
            %s895 = scalar_lea.vmem %s881, 1
            %896 = vst [vmem:[%s895] sm:$0x1] %v894
            %s897 = scalar_lea.vmem %s882, 1
            %v898 = vld [vmem:[%s897] sm:$0x7]
            %v899 = vlaneseq
            %v900 = vshrl.u32 %v899, 7
            %vm901 = vcmp.eq.s32.totalorder %v900, 3
            %v902 = vsel %vm901, %v892, %v898
            %v903 = vld [vmem:[%s882] ss:$0 sm:$0xff]
            %904 = vst [vmem:[%s882] sm:$0xf] %v902
          $region152: #{custom-call.6} parent=144 // loop_footer
            %s465 = sadd.s32 1, %s461
          $region153: #{custom-call.6} parent=144 // loop_footer_branch
            %460 = sbr.rel target = $region149
          $region154: #{custom-call.6} parent=144 // loop_exit
            _
          %s905 = sadd.s32 %s363, 1
        $region145: #{custom-call.6} parent=139 // loop_footer
          _
        $region146: #{custom-call.6} parent=139 // loop_footer_branch
          %362 = sbr.rel target = $region142
        $region147: #{custom-call.6} parent=139 // loop_exit
          _
        %s908 = sand.u32 %s17, 7
        %s909 = scalar_lea.vmem %s279, %s908 [#allocation8]
        %s910 = sand.u32 %s17, 7
        %s911 = scalar_lea.vmem %s285, %s910 [#allocation9]
        %s912 = smov [#allocation18]
        %s913 = smov %s909
        %v914 = vlaneseq
        %v915 = vand.u32 %v914, 127
        %v916 = vmov %v915
        %v917 = vlaneseq
        %v918 = vshrl.u32 %v917, 7
        %v919 = vmov %v918
        %v920 = vld [vmem:[%s912] sm:$0xf]
        %vm923 = vcmp.eq.s32.totalorder %v919, %v916
        %v924 = vsel %vm923, %v920, 0.0
        %v925 = vrot.slane %v924, 4
        %v926 = vadd.f32 %v924, %v925
        %v927 = vrot.slane %v926, 2
        %v928 = vadd.f32 %v926, %v927
        %v929 = vrot.slane %v928, 1
        %v930 = vadd.f32 %v928, %v929
        %931 = vst [vmem:[%s913] sm:$0x1] %v930
        %s932 = smov [#allocation21]
        %s933 = smov %s911
        %v934 = vlaneseq
        %v935 = vand.u32 %v934, 127
        %v936 = vmov %v935
        %v937 = vlaneseq
        %v938 = vshrl.u32 %v937, 7
        %v939 = vmov %v938
        %v940 = vld [vmem:[%s932] sm:$0xf]
        %vm943 = vcmp.eq.s32.totalorder %v939, %v936
        %v944 = vsel %vm943, %v940, 0.0
        %v945 = vrot.slane %v944, 4
        %v946 = vadd.f32 %v944, %v945
        %v947 = vrot.slane %v946, 2
        %v948 = vadd.f32 %v946, %v947
        %v949 = vrot.slane %v948, 1
        %v950 = vadd.f32 %v948, %v949
        %951 = vst [vmem:[%s933] sm:$0x1] %v950
        %s953 = sshllo.u32 0, 4
        %v955 = vld [vmem:[#allocation10] sm:%s953]
        %s956 = sshllo.u32 0, 4
        %957 = vst [vmem:[%s289] sm:%s956] %v955
        %s959 = sshllo.u32 0, 4
        %v961 = vld [vmem:[#allocation12] sm:%s959]
        %s962 = sshllo.u32 0, 4
        %963 = vst [vmem:[%s293] sm:%s962] %v961
        %s965 = sshllo.u32 0, 4
        %v967 = vld [vmem:[#allocation14] sm:%s965]
        %s968 = sshllo.u32 0, 4
        %969 = vst [vmem:[%s297] sm:%s968] %v967
        %s971 = sshllo.u32 0, 4
        %v973 = vld [vmem:[#allocation16] sm:%s971]
        %s974 = sshllo.u32 0, 4
        %975 = vst [vmem:[%s301] sm:%s974] %v973
        %s976 = sand.u32 %s27, 1
        %s977 = sand.u32 %s27, 1
        %s978 = smul.addr %s977, 8
        %s979 = scalar_lea.vmem [#allocation8], %s978
        %s980 = sand.u32 %s55, 1
        %s981 = sand.u32 %s55, 1
        %s982 = smul.addr %s981, 8
        %s983 = scalar_lea.vmem [#allocation9], %s982
        %s984 = sand.u32 %s17, 1
        %s985 = sand.u32 %s17, 1
        %s986 = smul.addr %s985, 4
        %s987 = scalar_lea.vmem [#allocation11], %s986
        %s988 = sand.u32 %s17, 1
        %s989 = sand.u32 %s17, 1
        %s990 = smul.addr %s989, 4
        %s991 = scalar_lea.vmem [#allocation13], %s990
        %s992 = sand.u32 %s17, 1
        %s993 = sand.u32 %s17, 1
        %s994 = smul.addr %s993, 4
        %s995 = scalar_lea.vmem [#allocation15], %s994
        %s996 = sand.u32 %s17, 1
        %s997 = sand.u32 %s17, 1
        %s998 = smul.addr %s997, 4
        %s999 = scalar_lea.vmem [#allocation17], %s998
        // Predicated region
        $region155: #{custom-call.6} parent=139 // pred_check
          %p1000 = pneg %p37
        $region156: #{custom-call.6} parent=139 // pred_check_branch
          %1002 = sbr.rel (%p1000) target = $region158
        $region157: #{custom-call.6} parent=139 // pred_region
          %s1003 = sshrl.u32 %s17, 3
          %s1004 = smul.addr %s1003, 8
          %s1005 = scalar_lea.vmem %s4, %s1004
          // Predicated region
          $region159: #{custom-call.6} parent=157 // pred_check
            _
          $region160: #{custom-call.6} parent=157 // pred_check_branch
            %1007 = sbr.rel (0) target = $region162
          $region161: #{custom-call.6} parent=157 // pred_region
            // Predicated region
            $region163: #{custom-call.6} parent=161 // pred_check
              _
            $region164: #{custom-call.6} parent=161 // pred_check_branch
              %1009 = sbr.rel (0) target = $region166
            $region165: #{custom-call.6} parent=161 // pred_region
              // Predicated region
              $region178: #{custom-call.6} parent=165 // pred_check
                _
              $region179: #{custom-call.6} parent=165 // pred_check_branch
                %1024 = sbr.rel (0) target = $region181
              $region180: #{custom-call.6} parent=165 // pred_region
                loop: start=0, step=1, limit=1
                $region182: #{custom-call.6} parent=180 // loop_pre_header
                  _
                $region183: #{custom-call.6} parent=180 // loop_header
                  %s1026 = sphi 0, %s1030
                  %p1027 = scmp.ge.s32.totalorder %s1026, 1
                  %s1031 = sphi %s979, %s979
                  %s1032 = sphi %s1005, %s1005
                $region184: #{custom-call.6} parent=180 // loop_header_branch
                  %1029 = sbr.rel (%p1027) target = $region188
                $region185: #{custom-call.6} parent=180 // loop_body
                  %v1033 = vld [vmem:[%s1031] sm:$0xff]
                  %1034 = vst [vmem:[%s1032] sm:$0xff] %v1033
                $region186: #{custom-call.6} parent=180 // loop_footer
                  %s1030 = sadd.s32 1, %s1026
                $region187: #{custom-call.6} parent=180 // loop_footer_branch
                  %1025 = sbr.rel target = $region183
                $region188: #{custom-call.6} parent=180 // loop_exit
                  _
              $region181: #{custom-call.6} parent=165 // pred_fallthru
                _
              // Predicated region
              $region189: #{custom-call.6} parent=165 // pred_check
                _
              $region190: #{custom-call.6} parent=165 // pred_check_branch
                %1036 = sbr.rel target = $region192
              $region191: #{custom-call.6} parent=165 // pred_region
                _
              $region192: #{custom-call.6} parent=165 // pred_fallthru
                _
            $region166: #{custom-call.6} parent=161 // pred_fallthru
              _
            // Predicated region
            $region167: #{custom-call.6} parent=161 // pred_check
              _
            $region168: #{custom-call.6} parent=161 // pred_check_branch
              %1011 = sbr.rel target = $region170
            $region169: #{custom-call.6} parent=161 // pred_region
              loop: start=0, step=1, limit=1
              $region171: #{custom-call.6} parent=169 // loop_pre_header
                _
              $region172: #{custom-call.6} parent=169 // loop_header
                %s1014 = sphi 0, %s1018
                %p1015 = scmp.ge.s32.totalorder %s1014, 1
                %s1019 = sphi %s979, %s979
                %s1020 = sphi %s1005, %s1005
              $region173: #{custom-call.6} parent=169 // loop_header_branch
                %1017 = sbr.rel (%p1015) target = $region177
              $region174: #{custom-call.6} parent=169 // loop_body
                %v1021 = vld [vmem:[%s1019] sm:$0xff]
                %1022 = vst [vmem:[%s1020] sm:$0xff] %v1021
              $region175: #{custom-call.6} parent=169 // loop_footer
                %s1018 = sadd.s32 1, %s1014
              $region176: #{custom-call.6} parent=169 // loop_footer_branch
                %1013 = sbr.rel target = $region172
              $region177: #{custom-call.6} parent=169 // loop_exit
                _
            $region170: #{custom-call.6} parent=161 // pred_fallthru
              _
          $region162: #{custom-call.6} parent=157 // pred_fallthru
            _
          %1037 = vnop
        $region158: #{custom-call.6} parent=139 // pred_fallthru
          _
        // Predicated region
        $region193: #{custom-call.6} parent=139 // pred_check
          %p1038 = pneg %p65
        $region194: #{custom-call.6} parent=139 // pred_check_branch
          %1040 = sbr.rel (%p1038) target = $region196
        $region195: #{custom-call.6} parent=139 // pred_region
          %s1041 = sshrl.u32 %s17, 3
          %s1042 = smul.addr %s1041, 8
          %s1043 = scalar_lea.vmem %s5, %s1042
          // Predicated region
          $region197: #{custom-call.6} parent=195 // pred_check
            _
          $region198: #{custom-call.6} parent=195 // pred_check_branch
            %1045 = sbr.rel (0) target = $region200
          $region199: #{custom-call.6} parent=195 // pred_region
            // Predicated region
            $region201: #{custom-call.6} parent=199 // pred_check
              _
            $region202: #{custom-call.6} parent=199 // pred_check_branch
              %1047 = sbr.rel (0) target = $region204
            $region203: #{custom-call.6} parent=199 // pred_region
              // Predicated region
              $region216: #{custom-call.6} parent=203 // pred_check
                _
              $region217: #{custom-call.6} parent=203 // pred_check_branch
                %1062 = sbr.rel (0) target = $region219
              $region218: #{custom-call.6} parent=203 // pred_region
                loop: start=0, step=1, limit=1
                $region220: #{custom-call.6} parent=218 // loop_pre_header
                  _
                $region221: #{custom-call.6} parent=218 // loop_header
                  %s1064 = sphi 0, %s1068
                  %p1065 = scmp.ge.s32.totalorder %s1064, 1
                  %s1069 = sphi %s983, %s983
                  %s1070 = sphi %s1043, %s1043
                $region222: #{custom-call.6} parent=218 // loop_header_branch
                  %1067 = sbr.rel (%p1065) target = $region226
                $region223: #{custom-call.6} parent=218 // loop_body
                  %v1071 = vld [vmem:[%s1069] sm:$0xff]
                  %1072 = vst [vmem:[%s1070] sm:$0xff] %v1071
                $region224: #{custom-call.6} parent=218 // loop_footer
                  %s1068 = sadd.s32 1, %s1064
                $region225: #{custom-call.6} parent=218 // loop_footer_branch
                  %1063 = sbr.rel target = $region221
                $region226: #{custom-call.6} parent=218 // loop_exit
                  _
              $region219: #{custom-call.6} parent=203 // pred_fallthru
                _
              // Predicated region
              $region227: #{custom-call.6} parent=203 // pred_check
                _
              $region228: #{custom-call.6} parent=203 // pred_check_branch
                %1074 = sbr.rel target = $region230
              $region229: #{custom-call.6} parent=203 // pred_region
                _
              $region230: #{custom-call.6} parent=203 // pred_fallthru
                _
            $region204: #{custom-call.6} parent=199 // pred_fallthru
              _
            // Predicated region
            $region205: #{custom-call.6} parent=199 // pred_check
              _
            $region206: #{custom-call.6} parent=199 // pred_check_branch
              %1049 = sbr.rel target = $region208
            $region207: #{custom-call.6} parent=199 // pred_region
              loop: start=0, step=1, limit=1
              $region209: #{custom-call.6} parent=207 // loop_pre_header
                _
              $region210: #{custom-call.6} parent=207 // loop_header
                %s1052 = sphi 0, %s1056
                %p1053 = scmp.ge.s32.totalorder %s1052, 1
                %s1057 = sphi %s983, %s983
                %s1058 = sphi %s1043, %s1043
              $region211: #{custom-call.6} parent=207 // loop_header_branch
                %1055 = sbr.rel (%p1053) target = $region215
              $region212: #{custom-call.6} parent=207 // loop_body
                %v1059 = vld [vmem:[%s1057] sm:$0xff]
                %1060 = vst [vmem:[%s1058] sm:$0xff] %v1059
              $region213: #{custom-call.6} parent=207 // loop_footer
                %s1056 = sadd.s32 1, %s1052
              $region214: #{custom-call.6} parent=207 // loop_footer_branch
                %1051 = sbr.rel target = $region210
              $region215: #{custom-call.6} parent=207 // loop_exit
                _
            $region208: #{custom-call.6} parent=199 // pred_fallthru
              _
          $region200: #{custom-call.6} parent=195 // pred_fallthru
            _
          %1075 = vnop
        $region196: #{custom-call.6} parent=139 // pred_fallthru
          _
        %s1076 = smul.addr %s17, 4
        %s1077 = scalar_lea.vmem %s6, %s1076
        // Predicated region
        $region231: #{custom-call.6} parent=139 // pred_check
          _
        $region232: #{custom-call.6} parent=139 // pred_check_branch
          %1079 = sbr.rel (0) target = $region234
        $region233: #{custom-call.6} parent=139 // pred_region
          // Predicated region
          $region235: #{custom-call.6} parent=233 // pred_check
            _
          $region236: #{custom-call.6} parent=233 // pred_check_branch
            %1081 = sbr.rel target = $region238
          $region237: #{custom-call.6} parent=233 // pred_region
            // Predicated region
            $region250: #{custom-call.6} parent=237 // pred_check
              _
            $region251: #{custom-call.6} parent=237 // pred_check_branch
              %1096 = sbr.rel (0) target = $region253
            $region252: #{custom-call.6} parent=237 // pred_region
              loop: start=0, step=1, limit=1
              $region254: #{custom-call.6} parent=252 // loop_pre_header
                _
              $region255: #{custom-call.6} parent=252 // loop_header
                %s1099 = sphi 0, %s1103
                %p1100 = scmp.ge.s32.totalorder %s1099, 1
                %s1104 = sphi %s987, %s987
                %s1105 = sphi %s1077, %s1077
              $region256: #{custom-call.6} parent=252 // loop_header_branch
                %1102 = sbr.rel (%p1100) target = $region260
              $region257: #{custom-call.6} parent=252 // loop_body
                %v1106 = vld [vmem:[%s1104] sm:$0xf]
                %1107 = vst [vmem:[%s1105] sm:$0xf] %v1106
              $region258: #{custom-call.6} parent=252 // loop_footer
                %s1103 = sadd.s32 1, %s1099
              $region259: #{custom-call.6} parent=252 // loop_footer_branch
                %1098 = sbr.rel target = $region255
              $region260: #{custom-call.6} parent=252 // loop_exit
                _
            $region253: #{custom-call.6} parent=237 // pred_fallthru
              _
          $region238: #{custom-call.6} parent=233 // pred_fallthru
            _
          // Predicated region
          $region239: #{custom-call.6} parent=233 // pred_check
            _
          $region240: #{custom-call.6} parent=233 // pred_check_branch
            %1083 = sbr.rel (0) target = $region242
          $region241: #{custom-call.6} parent=233 // pred_region
            loop: start=0, step=1, limit=1
            $region243: #{custom-call.6} parent=241 // loop_pre_header
              _
            $region244: #{custom-call.6} parent=241 // loop_header
              %s1086 = sphi 0, %s1090
              %p1087 = scmp.ge.s32.totalorder %s1086, 1
              %s1091 = sphi %s987, %s987
              %s1092 = sphi %s1077, %s1077
            $region245: #{custom-call.6} parent=241 // loop_header_branch
              %1089 = sbr.rel (%p1087) target = $region249
            $region246: #{custom-call.6} parent=241 // loop_body
              %v1093 = vld [vmem:[%s1091] sm:$0xf]
              %1094 = vst [vmem:[%s1092] sm:$0xf] %v1093
            $region247: #{custom-call.6} parent=241 // loop_footer
              %s1090 = sadd.s32 1, %s1086
            $region248: #{custom-call.6} parent=241 // loop_footer_branch
              %1085 = sbr.rel target = $region244
            $region249: #{custom-call.6} parent=241 // loop_exit
              _
          $region242: #{custom-call.6} parent=233 // pred_fallthru
            _
        $region234: #{custom-call.6} parent=139 // pred_fallthru
          _
        %1108 = vnop
        %s1109 = smul.addr %s17, 4
        %s1110 = scalar_lea.vmem %s7, %s1109
        // Predicated region
        $region261: #{custom-call.6} parent=139 // pred_check
          _
        $region262: #{custom-call.6} parent=139 // pred_check_branch
          %1112 = sbr.rel (0) target = $region264
        $region263: #{custom-call.6} parent=139 // pred_region
          // Predicated region
          $region265: #{custom-call.6} parent=263 // pred_check
            _
          $region266: #{custom-call.6} parent=263 // pred_check_branch
            %1114 = sbr.rel target = $region268
          $region267: #{custom-call.6} parent=263 // pred_region
            // Predicated region
            $region280: #{custom-call.6} parent=267 // pred_check
              _
            $region281: #{custom-call.6} parent=267 // pred_check_branch
              %1129 = sbr.rel (0) target = $region283
            $region282: #{custom-call.6} parent=267 // pred_region
              loop: start=0, step=1, limit=1
              $region284: #{custom-call.6} parent=282 // loop_pre_header
                _
              $region285: #{custom-call.6} parent=282 // loop_header
                %s1132 = sphi 0, %s1136
                %p1133 = scmp.ge.s32.totalorder %s1132, 1
                %s1137 = sphi %s991, %s991
                %s1138 = sphi %s1110, %s1110
              $region286: #{custom-call.6} parent=282 // loop_header_branch
                %1135 = sbr.rel (%p1133) target = $region290
              $region287: #{custom-call.6} parent=282 // loop_body
                %v1139 = vld [vmem:[%s1137] sm:$0xf]
                %1140 = vst [vmem:[%s1138] sm:$0xf] %v1139
              $region288: #{custom-call.6} parent=282 // loop_footer
                %s1136 = sadd.s32 1, %s1132
              $region289: #{custom-call.6} parent=282 // loop_footer_branch
                %1131 = sbr.rel target = $region285
              $region290: #{custom-call.6} parent=282 // loop_exit
                _
            $region283: #{custom-call.6} parent=267 // pred_fallthru
              _
          $region268: #{custom-call.6} parent=263 // pred_fallthru
            _
          // Predicated region
          $region269: #{custom-call.6} parent=263 // pred_check
            _
          $region270: #{custom-call.6} parent=263 // pred_check_branch
            %1116 = sbr.rel (0) target = $region272
          $region271: #{custom-call.6} parent=263 // pred_region
            loop: start=0, step=1, limit=1
            $region273: #{custom-call.6} parent=271 // loop_pre_header
              _
            $region274: #{custom-call.6} parent=271 // loop_header
              %s1119 = sphi 0, %s1123
              %p1120 = scmp.ge.s32.totalorder %s1119, 1
              %s1124 = sphi %s991, %s991
              %s1125 = sphi %s1110, %s1110
            $region275: #{custom-call.6} parent=271 // loop_header_branch
              %1122 = sbr.rel (%p1120) target = $region279
            $region276: #{custom-call.6} parent=271 // loop_body
              %v1126 = vld [vmem:[%s1124] sm:$0xf]
              %1127 = vst [vmem:[%s1125] sm:$0xf] %v1126
            $region277: #{custom-call.6} parent=271 // loop_footer
              %s1123 = sadd.s32 1, %s1119
            $region278: #{custom-call.6} parent=271 // loop_footer_branch
              %1118 = sbr.rel target = $region274
            $region279: #{custom-call.6} parent=271 // loop_exit
              _
          $region272: #{custom-call.6} parent=263 // pred_fallthru
            _
        $region264: #{custom-call.6} parent=139 // pred_fallthru
          _
        %1141 = vnop
        %s1142 = smul.addr %s17, 4
        %s1143 = scalar_lea.vmem %s8, %s1142
        // Predicated region
        $region291: #{custom-call.6} parent=139 // pred_check
          _
        $region292: #{custom-call.6} parent=139 // pred_check_branch
          %1145 = sbr.rel (0) target = $region294
        $region293: #{custom-call.6} parent=139 // pred_region
          // Predicated region
          $region295: #{custom-call.6} parent=293 // pred_check
            _
          $region296: #{custom-call.6} parent=293 // pred_check_branch
            %1147 = sbr.rel target = $region298
          $region297: #{custom-call.6} parent=293 // pred_region
            // Predicated region
            $region310: #{custom-call.6} parent=297 // pred_check
              _
            $region311: #{custom-call.6} parent=297 // pred_check_branch
              %1162 = sbr.rel (0) target = $region313
            $region312: #{custom-call.6} parent=297 // pred_region
              loop: start=0, step=1, limit=1
              $region314: #{custom-call.6} parent=312 // loop_pre_header
                _
              $region315: #{custom-call.6} parent=312 // loop_header
                %s1165 = sphi 0, %s1169
                %p1166 = scmp.ge.s32.totalorder %s1165, 1
                %s1170 = sphi %s995, %s995
                %s1171 = sphi %s1143, %s1143
              $region316: #{custom-call.6} parent=312 // loop_header_branch
                %1168 = sbr.rel (%p1166) target = $region320
              $region317: #{custom-call.6} parent=312 // loop_body
                %v1172 = vld [vmem:[%s1170] sm:$0xf]
                %1173 = vst [vmem:[%s1171] sm:$0xf] %v1172
              $region318: #{custom-call.6} parent=312 // loop_footer
                %s1169 = sadd.s32 1, %s1165
              $region319: #{custom-call.6} parent=312 // loop_footer_branch
                %1164 = sbr.rel target = $region315
              $region320: #{custom-call.6} parent=312 // loop_exit
                _
            $region313: #{custom-call.6} parent=297 // pred_fallthru
              _
          $region298: #{custom-call.6} parent=293 // pred_fallthru
            _
          // Predicated region
          $region299: #{custom-call.6} parent=293 // pred_check
            _
          $region300: #{custom-call.6} parent=293 // pred_check_branch
            %1149 = sbr.rel (0) target = $region302
          $region301: #{custom-call.6} parent=293 // pred_region
            loop: start=0, step=1, limit=1
            $region303: #{custom-call.6} parent=301 // loop_pre_header
              _
            $region304: #{custom-call.6} parent=301 // loop_header
              %s1152 = sphi 0, %s1156
              %p1153 = scmp.ge.s32.totalorder %s1152, 1
              %s1157 = sphi %s995, %s995
              %s1158 = sphi %s1143, %s1143
            $region305: #{custom-call.6} parent=301 // loop_header_branch
              %1155 = sbr.rel (%p1153) target = $region309
            $region306: #{custom-call.6} parent=301 // loop_body
              %v1159 = vld [vmem:[%s1157] sm:$0xf]
              %1160 = vst [vmem:[%s1158] sm:$0xf] %v1159
            $region307: #{custom-call.6} parent=301 // loop_footer
              %s1156 = sadd.s32 1, %s1152
            $region308: #{custom-call.6} parent=301 // loop_footer_branch
              %1151 = sbr.rel target = $region304
            $region309: #{custom-call.6} parent=301 // loop_exit
              _
          $region302: #{custom-call.6} parent=293 // pred_fallthru
            _
        $region294: #{custom-call.6} parent=139 // pred_fallthru
          _
        %1174 = vnop
        %s1175 = smul.addr %s17, 4
        %s1176 = scalar_lea.vmem %s9, %s1175
        // Predicated region
        $region321: #{custom-call.6} parent=139 // pred_check
          _
        $region322: #{custom-call.6} parent=139 // pred_check_branch
          %1178 = sbr.rel (0) target = $region324
        $region323: #{custom-call.6} parent=139 // pred_region
          // Predicated region
          $region325: #{custom-call.6} parent=323 // pred_check
            _
          $region326: #{custom-call.6} parent=323 // pred_check_branch
            %1180 = sbr.rel target = $region328
          $region327: #{custom-call.6} parent=323 // pred_region
            // Predicated region
            $region340: #{custom-call.6} parent=327 // pred_check
              _
            $region341: #{custom-call.6} parent=327 // pred_check_branch
              %1195 = sbr.rel (0) target = $region343
            $region342: #{custom-call.6} parent=327 // pred_region
              loop: start=0, step=1, limit=1
              $region344: #{custom-call.6} parent=342 // loop_pre_header
                _
              $region345: #{custom-call.6} parent=342 // loop_header
                %s1198 = sphi 0, %s1202
                %p1199 = scmp.ge.s32.totalorder %s1198, 1
                %s1203 = sphi %s999, %s999
                %s1204 = sphi %s1176, %s1176
              $region346: #{custom-call.6} parent=342 // loop_header_branch
                %1201 = sbr.rel (%p1199) target = $region350
              $region347: #{custom-call.6} parent=342 // loop_body
                %v1205 = vld [vmem:[%s1203] sm:$0xf]
                %1206 = vst [vmem:[%s1204] sm:$0xf] %v1205
              $region348: #{custom-call.6} parent=342 // loop_footer
                %s1202 = sadd.s32 1, %s1198
              $region349: #{custom-call.6} parent=342 // loop_footer_branch
                %1197 = sbr.rel target = $region345
              $region350: #{custom-call.6} parent=342 // loop_exit
                _
            $region343: #{custom-call.6} parent=327 // pred_fallthru
              _
          $region328: #{custom-call.6} parent=323 // pred_fallthru
            _
          // Predicated region
          $region329: #{custom-call.6} parent=323 // pred_check
            _
          $region330: #{custom-call.6} parent=323 // pred_check_branch
            %1182 = sbr.rel (0) target = $region332
          $region331: #{custom-call.6} parent=323 // pred_region
            loop: start=0, step=1, limit=1
            $region333: #{custom-call.6} parent=331 // loop_pre_header
              _
            $region334: #{custom-call.6} parent=331 // loop_header
              %s1185 = sphi 0, %s1189
              %p1186 = scmp.ge.s32.totalorder %s1185, 1
              %s1190 = sphi %s999, %s999
              %s1191 = sphi %s1176, %s1176
            $region335: #{custom-call.6} parent=331 // loop_header_branch
              %1188 = sbr.rel (%p1186) target = $region339
            $region336: #{custom-call.6} parent=331 // loop_body
              %v1192 = vld [vmem:[%s1190] sm:$0xf]
              %1193 = vst [vmem:[%s1191] sm:$0xf] %v1192
            $region337: #{custom-call.6} parent=331 // loop_footer
              %s1189 = sadd.s32 1, %s1185
            $region338: #{custom-call.6} parent=331 // loop_footer_branch
              %1184 = sbr.rel target = $region334
            $region339: #{custom-call.6} parent=331 // loop_exit
              _
          $region332: #{custom-call.6} parent=323 // pred_fallthru
            _
        $region324: #{custom-call.6} parent=139 // pred_fallthru
          _
        %1207 = vnop
      $region140: #{custom-call.6} parent=5 // pred_fallthru
        _
      %p1208 = scmp.le.s32.totalorder 2, %s12
      // Predicated region
      $region351: #{custom-call.6} parent=5 // pred_check
        %p1209 = pneg %p1208
      $region352: #{custom-call.6} parent=5 // pred_check_branch
        %1211 = sbr.rel (%p1209) target = $region354
      $region353: #{custom-call.6} parent=5 // pred_region
        %s1212 = ssub.s32 %s12, 2
        // Predicated region
        $region355: #{custom-call.6} parent=353 // pred_check
          %p1213 = pneg %p43
        $region356: #{custom-call.6} parent=353 // pred_check_branch
          %1215 = sbr.rel (%p1213) target = $region358
        $region357: #{custom-call.6} parent=353 // pred_region
          %s1216 = sand.u32 %s28, 1
          %s1217 = sand.u32 %s28, 1
          %s1218 = smul.addr %s1217, 8
          %s1219 = scalar_lea.vmem [#allocation8], %s1218
        $region358: #{custom-call.6} parent=353 // pred_fallthru
          _
        // Predicated region
        $region359: #{custom-call.6} parent=353 // pred_check
          %p1220 = pneg %p71
        $region360: #{custom-call.6} parent=353 // pred_check_branch
          %1222 = sbr.rel (%p1220) target = $region362
        $region361: #{custom-call.6} parent=353 // pred_region
          %s1223 = sand.u32 %s56, 1
          %s1224 = sand.u32 %s56, 1
          %s1225 = smul.addr %s1224, 8
          %s1226 = scalar_lea.vmem [#allocation9], %s1225
        $region362: #{custom-call.6} parent=353 // pred_fallthru
          _
        %s1227 = sand.u32 %s18, 1
        %s1228 = sand.u32 %s18, 1
        %s1229 = smul.addr %s1228, 4
        %s1230 = scalar_lea.vmem [#allocation11], %s1229
        %s1231 = sand.u32 %s18, 1
        %s1232 = sand.u32 %s18, 1
        %s1233 = smul.addr %s1232, 4
        %s1234 = scalar_lea.vmem [#allocation13], %s1233
        %s1235 = sand.u32 %s18, 1
        %s1236 = sand.u32 %s18, 1
        %s1237 = smul.addr %s1236, 4
        %s1238 = scalar_lea.vmem [#allocation15], %s1237
        %s1239 = sand.u32 %s18, 1
        %s1240 = sand.u32 %s18, 1
        %s1241 = smul.addr %s1240, 4
        %s1242 = scalar_lea.vmem [#allocation17], %s1241
      $region354: #{custom-call.6} parent=5 // pred_fallthru
        _
    $region6: #{custom-call.6} parent=1 // loop_footer
      %s16 = sadd.s32 1, %s12
    $region7: #{custom-call.6} parent=1 // loop_footer_branch
      %11 = sbr.rel target = $region3
    $region8: #{custom-call.6} parent=1 // loop_exit
      _

// kernel: hmm_forward.1
$region0: #{hmm_forward.1}
  #allocation0 [shape = 'u32[]', space=smem, size = 0x4, offset = 0x4, fixed_abs, tag = 'smem constant byte address 0x4 - core index']
  #allocation1 [shape = 'u32[144,128]{1,0:T(1,128)}', space=vmem, size = 0x12000, scoped, tag = 'internal scratch']
  #allocation2 [shape = 'f32[8,8,128]{2,1,0:T(8,128)}', space=vmem, size = 0x8000, scoped, tag = 'scratch operand']
  %s0 = inlined_call_operand.vmem [shape: f32[8,8,128], index: 0, kind: input, shape index: {}]
  %s1 = inlined_call_operand.vmem [shape: f32[7,8,8], index: 1, kind: input, shape index: {}]
  %s2 = inlined_call_operand.vmem [shape: f32[7,8,8], index: 2, kind: input, shape index: {}]
  %s3 = inlined_call_operand.vmem [shape: f32[7,8,8], index: 3, kind: input, shape index: {}]
  %s4 = inlined_call_operand.vmem [shape: f32[7,4,8], index: 4, kind: input, shape index: {}]
  %s5 = inlined_call_operand.vmem [shape: f32[4,1], index: 5, kind: input, shape index: {}]
  %s6 = inlined_call_operand.vmem [shape: f32[8,8,128], index: 6, kind: output, shape index: {0}]
  %s7 = inlined_call_operand.vmem [shape: f32[8,4,128], index: 7, kind: output, shape index: {1}]
  %8 = xla_tuple %s6, %s7
  %s9 = sld [smem:[#allocation0]]
  $region42: #{hmm_forward.1} parent=0
    _
  %s11 = ssub.s32 1, %s9
  %s12 = scalar_select 0, %s11, %s9
  // Predicated region
  $region2: #{hmm_forward.1} parent=0 // pred_check
    _
  $region3: #{hmm_forward.1} parent=0 // pred_check_branch
    %14 = sbr.rel (0) target = $region5
  $region4: #{hmm_forward.1} parent=0 // pred_region
    _
  $region5: #{hmm_forward.1} parent=0 // pred_fallthru
    _
  // Predicated region
  $region6: #{hmm_forward.1} parent=0 // pred_check
    _
  $region7: #{hmm_forward.1} parent=0 // pred_check_branch
    %16 = sbr.rel (0) target = $region9
  $region8: #{hmm_forward.1} parent=0 // pred_region
    _
  $region9: #{hmm_forward.1} parent=0 // pred_fallthru
    _
  // Predicated region
  $region10: #{hmm_forward.1} parent=0 // pred_check
    _
  $region11: #{hmm_forward.1} parent=0 // pred_check_branch
    %18 = sbr.rel (0) target = $region13
  $region12: #{hmm_forward.1} parent=0 // pred_region
    _
  $region13: #{hmm_forward.1} parent=0 // pred_fallthru
    _
  // Predicated region
  $region14: #{hmm_forward.1} parent=0 // pred_check
    _
  $region15: #{hmm_forward.1} parent=0 // pred_check_branch
    %20 = sbr.rel (0) target = $region17
  $region16: #{hmm_forward.1} parent=0 // pred_region
    _
  $region17: #{hmm_forward.1} parent=0 // pred_fallthru
    _
  // Predicated region
  $region18: #{hmm_forward.1} parent=0 // pred_check
    _
  $region19: #{hmm_forward.1} parent=0 // pred_check_branch
    %22 = sbr.rel (0) target = $region21
  $region20: #{hmm_forward.1} parent=0 // pred_region
    _
  $region21: #{hmm_forward.1} parent=0 // pred_fallthru
    _
  // Predicated region
  $region22: #{hmm_forward.1} parent=0 // pred_check
    _
  $region23: #{hmm_forward.1} parent=0 // pred_check_branch
    %24 = sbr.rel (0) target = $region25
  $region24: #{hmm_forward.1} parent=0 // pred_region
    _
  $region25: #{hmm_forward.1} parent=0 // pred_fallthru
    _
  %v25 = vld [vmem:[%s0] sm:$0xff]
  %26 = vst [vmem:[#allocation2] sm:$0xff] %v25
  %v27 = vld [vmem:[%s1] sm:$0xff]
  %s28 = scalar_lea.vmem %s0, 8
  %v29 = vld [vmem:[%s28] sm:$0xff]
  %vm30 = vcmask 64512
  %v32 = vsel %vm30, %v27, 0
  %34 = vmatprep.subr.mxu0 0.0
  %35 = vmatpush1.msra.mxu0 %v25
  %36 = vmatprep.subr.mxu0 0.0
  %37 = vmatpush1.msra.mxu0 0.0
  %38 = vmatprep.subr.mxu0 0.0
  %39 = vmatpush1.msra.mxu0 0.0
  %40 = vmatprep.subr.mxu0 0.0
  %41 = vmatpush1.msra.mxu0 0.0
  %42 = vmatprep.subr.mxu0 0.0
  %43 = vmatpush1.msra.mxu0 0.0
  %44 = vmatprep.subr.mxu0 0.0
  %45 = vmatpush1.msra.mxu0 0.0
  %46 = vmatprep.subr.mxu0 0.0
  %47 = vmatpush1.msra.mxu0 0.0
  %48 = vmatprep.subr.mxu0 0.0
  %49 = vmatpush1.msra.mxu0 0.0
  %50 = vmatprep.subr.mxu0 0.0
  %51 = vmatpush1.msra.mxu0 0.0
  %52 = vmatprep.subr.mxu0 0.0
  %53 = vmatpush1.msra.mxu0 0.0
  %54 = vmatprep.subr.mxu0 0.0
  %55 = vmatpush1.msra.mxu0 0.0
  %56 = vmatprep.subr.mxu0 0.0
  %57 = vmatpush1.msra.mxu0 0.0
  %58 = vmatprep.subr.mxu0 0.0
  %59 = vmatpush1.msra.mxu0 0.0
  %60 = vmatprep.subr.mxu0 0.0
  %61 = vmatpush1.msra.mxu0 0.0
  %62 = vmatprep.subr.mxu0 0.0
  %63 = vmatpush1.msra.mxu0 0.0
  %64 = vmatprep.subr.mxu0 0.0
  %65 = vmatpush1.msra.mxu0 0.0
  %66 = vmatprep.subr.mxu0 0.0
  %67 = vmatpush1.msra.mxu0 0.0
  %68 = vmatprep.subr.mxu0 0.0
  %69 = vmatpush1.msra.mxu0 0.0
  %70 = vmatprep.subr.mxu0 0.0
  %71 = vmatpush1.msra.mxu0 0.0
  %72 = vmatprep.subr.mxu0 0.0
  %73 = vmatpush1.msra.mxu0 0.0
  %74 = vmatprep.subr.mxu0 0.0
  %75 = vmatpush1.msra.mxu0 0.0
  %76 = vmatprep.subr.mxu0 0.0
  %77 = vmatpush1.msra.mxu0 0.0
  %78 = vmatprep.subr.mxu0 0.0
  %79 = vmatpush1.msra.mxu0 0.0
  %80 = vmatprep.subr.mxu0 0.0
  %81 = vmatpush1.msra.mxu0 0.0
  %82 = vmatprep.subr.mxu0 0.0
  %83 = vmatpush1.msra.mxu0 0.0
  %84 = vmatprep.subr.mxu0 0.0
  %85 = vmatpush1.msra.mxu0 0.0
  %86 = vmatprep.subr.mxu0 0.0
  %87 = vmatpush1.msra.mxu0 0.0
  %88 = vmatprep.subr.mxu0 0.0
  %89 = vmatpush1.msra.mxu0 0.0
  %90 = vmatprep.subr.mxu0 0.0
  %91 = vmatpush1.msra.mxu0 0.0
  %92 = vmatprep.subr.mxu0 0.0
  %93 = vmatpush1.msra.mxu0 0.0
  %94 = vmatprep.subr.mxu0 0.0
  %95 = vmatpush1.msra.mxu0 0.0
  %96 = vmatprep.subr.mxu0 0.0
  %97 = vmatpush1.msra.mxu0 0.0
  %98 = vmatprep.mubr.f32.mxu0 0.0
  %99 = vmatmul.mubr.f32.gmra.mrb[0].mxu0 %v32
  %v100 = vpop.f32.mrb[0].mxu0
  %v101 = vadd.f32 %v29, %v100
  %v102 = vpop.f32.mrb[0].mxu0
  %103 = vdwg.mxu0
  %s104 = scalar_lea.vmem [#allocation2], 8
  %105 = vst [vmem:[%s104] sm:$0xff] %v101
  %s106 = scalar_lea.vmem %s1, 8
  %v107 = vld [vmem:[%s106] sm:$0xff]
  %s108 = scalar_lea.vmem %s0, 16
  %v109 = vld [vmem:[%s108] sm:$0xff]
  %v111 = vsel %vm30, %v107, 0
  %113 = vmatprep.subr.mxu0 0.0
  %114 = vmatpush1.msra.mxu0 %v101
  %115 = vmatprep.subr.mxu0 0.0
  %116 = vmatpush1.msra.mxu0 0.0
  %117 = vmatprep.subr.mxu0 0.0
  %118 = vmatpush1.msra.mxu0 0.0
  %119 = vmatprep.subr.mxu0 0.0
  %120 = vmatpush1.msra.mxu0 0.0
  %121 = vmatprep.subr.mxu0 0.0
  %122 = vmatpush1.msra.mxu0 0.0
  %123 = vmatprep.subr.mxu0 0.0
  %124 = vmatpush1.msra.mxu0 0.0
  %125 = vmatprep.subr.mxu0 0.0
  %126 = vmatpush1.msra.mxu0 0.0
  %127 = vmatprep.subr.mxu0 0.0
  %128 = vmatpush1.msra.mxu0 0.0
  %129 = vmatprep.subr.mxu0 0.0
  %130 = vmatpush1.msra.mxu0 0.0
  %131 = vmatprep.subr.mxu0 0.0
  %132 = vmatpush1.msra.mxu0 0.0
  %133 = vmatprep.subr.mxu0 0.0
  %134 = vmatpush1.msra.mxu0 0.0
  %135 = vmatprep.subr.mxu0 0.0
  %136 = vmatpush1.msra.mxu0 0.0
  %137 = vmatprep.subr.mxu0 0.0
  %138 = vmatpush1.msra.mxu0 0.0
  %139 = vmatprep.subr.mxu0 0.0
  %140 = vmatpush1.msra.mxu0 0.0
  %141 = vmatprep.subr.mxu0 0.0
  %142 = vmatpush1.msra.mxu0 0.0
  %143 = vmatprep.subr.mxu0 0.0
  %144 = vmatpush1.msra.mxu0 0.0
  %145 = vmatprep.subr.mxu0 0.0
  %146 = vmatpush1.msra.mxu0 0.0
  %147 = vmatprep.subr.mxu0 0.0
  %148 = vmatpush1.msra.mxu0 0.0
  %149 = vmatprep.subr.mxu0 0.0
  %150 = vmatpush1.msra.mxu0 0.0
  %151 = vmatprep.subr.mxu0 0.0
  %152 = vmatpush1.msra.mxu0 0.0
  %153 = vmatprep.subr.mxu0 0.0
  %154 = vmatpush1.msra.mxu0 0.0
  %155 = vmatprep.subr.mxu0 0.0
  %156 = vmatpush1.msra.mxu0 0.0
  %157 = vmatprep.subr.mxu0 0.0
  %158 = vmatpush1.msra.mxu0 0.0
  %159 = vmatprep.subr.mxu0 0.0
  %160 = vmatpush1.msra.mxu0 0.0
  %161 = vmatprep.subr.mxu0 0.0
  %162 = vmatpush1.msra.mxu0 0.0
  %163 = vmatprep.subr.mxu0 0.0
  %164 = vmatpush1.msra.mxu0 0.0
  %165 = vmatprep.subr.mxu0 0.0
  %166 = vmatpush1.msra.mxu0 0.0
  %167 = vmatprep.subr.mxu0 0.0
  %168 = vmatpush1.msra.mxu0 0.0
  %169 = vmatprep.subr.mxu0 0.0
  %170 = vmatpush1.msra.mxu0 0.0
  %171 = vmatprep.subr.mxu0 0.0
  %172 = vmatpush1.msra.mxu0 0.0
  %173 = vmatprep.subr.mxu0 0.0
  %174 = vmatpush1.msra.mxu0 0.0
  %175 = vmatprep.subr.mxu0 0.0
  %176 = vmatpush1.msra.mxu0 0.0
  %177 = vmatprep.mubr.f32.mxu0 0.0
  %178 = vmatmul.mubr.f32.gmra.mrb[0].mxu0 %v111
  %v179 = vpop.f32.mrb[0].mxu0
  %v180 = vadd.f32 %v109, %v179
  %v181 = vpop.f32.mrb[0].mxu0
  %182 = vdwg.mxu0
  %s183 = scalar_lea.vmem [#allocation2], 16
  %184 = vst [vmem:[%s183] sm:$0xff] %v180
  %s185 = scalar_lea.vmem %s1, 16
  %v186 = vld [vmem:[%s185] sm:$0xff]
  %s187 = scalar_lea.vmem %s0, 24
  %v188 = vld [vmem:[%s187] sm:$0xff]
  %v190 = vsel %vm30, %v186, 0
  %192 = vmatprep.subr.mxu0 0.0
  %193 = vmatpush1.msra.mxu0 %v180
  %194 = vmatprep.subr.mxu0 0.0
  %195 = vmatpush1.msra.mxu0 0.0
  %196 = vmatprep.subr.mxu0 0.0
  %197 = vmatpush1.msra.mxu0 0.0
  %198 = vmatprep.subr.mxu0 0.0
  %199 = vmatpush1.msra.mxu0 0.0
  %200 = vmatprep.subr.mxu0 0.0
  %201 = vmatpush1.msra.mxu0 0.0
  %202 = vmatprep.subr.mxu0 0.0
  %203 = vmatpush1.msra.mxu0 0.0
  %204 = vmatprep.subr.mxu0 0.0
  %205 = vmatpush1.msra.mxu0 0.0
  %206 = vmatprep.subr.mxu0 0.0
  %207 = vmatpush1.msra.mxu0 0.0
  %208 = vmatprep.subr.mxu0 0.0
  %209 = vmatpush1.msra.mxu0 0.0
  %210 = vmatprep.subr.mxu0 0.0
  %211 = vmatpush1.msra.mxu0 0.0
  %212 = vmatprep.subr.mxu0 0.0
  %213 = vmatpush1.msra.mxu0 0.0
  %214 = vmatprep.subr.mxu0 0.0
  %215 = vmatpush1.msra.mxu0 0.0
  %216 = vmatprep.subr.mxu0 0.0
  %217 = vmatpush1.msra.mxu0 0.0
  %218 = vmatprep.subr.mxu0 0.0
  %219 = vmatpush1.msra.mxu0 0.0
  %220 = vmatprep.subr.mxu0 0.0
  %221 = vmatpush1.msra.mxu0 0.0
  %222 = vmatprep.subr.mxu0 0.0
  %223 = vmatpush1.msra.mxu0 0.0
  %224 = vmatprep.subr.mxu0 0.0
  %225 = vmatpush1.msra.mxu0 0.0
  %226 = vmatprep.subr.mxu0 0.0
  %227 = vmatpush1.msra.mxu0 0.0
  %228 = vmatprep.subr.mxu0 0.0
  %229 = vmatpush1.msra.mxu0 0.0
  %230 = vmatprep.subr.mxu0 0.0
  %231 = vmatpush1.msra.mxu0 0.0
  %232 = vmatprep.subr.mxu0 0.0
  %233 = vmatpush1.msra.mxu0 0.0
  %234 = vmatprep.subr.mxu0 0.0
  %235 = vmatpush1.msra.mxu0 0.0
  %236 = vmatprep.subr.mxu0 0.0
  %237 = vmatpush1.msra.mxu0 0.0
  %238 = vmatprep.subr.mxu0 0.0
  %239 = vmatpush1.msra.mxu0 0.0
  %240 = vmatprep.subr.mxu0 0.0
  %241 = vmatpush1.msra.mxu0 0.0
  %242 = vmatprep.subr.mxu0 0.0
  %243 = vmatpush1.msra.mxu0 0.0
  %244 = vmatprep.subr.mxu0 0.0
  %245 = vmatpush1.msra.mxu0 0.0
  %246 = vmatprep.subr.mxu0 0.0
  %247 = vmatpush1.msra.mxu0 0.0
  %248 = vmatprep.subr.mxu0 0.0
  %249 = vmatpush1.msra.mxu0 0.0
  %250 = vmatprep.subr.mxu0 0.0
  %251 = vmatpush1.msra.mxu0 0.0
  %252 = vmatprep.subr.mxu0 0.0
  %253 = vmatpush1.msra.mxu0 0.0
  %254 = vmatprep.subr.mxu0 0.0
  %255 = vmatpush1.msra.mxu0 0.0
  %256 = vmatprep.mubr.f32.mxu0 0.0
  %257 = vmatmul.mubr.f32.gmra.mrb[0].mxu0 %v190
  %v258 = vpop.f32.mrb[0].mxu0
  %v259 = vadd.f32 %v188, %v258
  %v260 = vpop.f32.mrb[0].mxu0
  %261 = vdwg.mxu0
  %s262 = scalar_lea.vmem [#allocation2], 24
  %263 = vst [vmem:[%s262] sm:$0xff] %v259
  %s264 = scalar_lea.vmem %s1, 24
  %v265 = vld [vmem:[%s264] sm:$0xff]
  %s266 = scalar_lea.vmem %s0, 32
  %v267 = vld [vmem:[%s266] sm:$0xff]
  %v269 = vsel %vm30, %v265, 0
  %271 = vmatprep.subr.mxu0 0.0
  %272 = vmatpush1.msra.mxu0 %v259
  %273 = vmatprep.subr.mxu0 0.0
  %274 = vmatpush1.msra.mxu0 0.0
  %275 = vmatprep.subr.mxu0 0.0
  %276 = vmatpush1.msra.mxu0 0.0
  %277 = vmatprep.subr.mxu0 0.0
  %278 = vmatpush1.msra.mxu0 0.0
  %279 = vmatprep.subr.mxu0 0.0
  %280 = vmatpush1.msra.mxu0 0.0
  %281 = vmatprep.subr.mxu0 0.0
  %282 = vmatpush1.msra.mxu0 0.0
  %283 = vmatprep.subr.mxu0 0.0
  %284 = vmatpush1.msra.mxu0 0.0
  %285 = vmatprep.subr.mxu0 0.0
  %286 = vmatpush1.msra.mxu0 0.0
  %287 = vmatprep.subr.mxu0 0.0
  %288 = vmatpush1.msra.mxu0 0.0
  %289 = vmatprep.subr.mxu0 0.0
  %290 = vmatpush1.msra.mxu0 0.0
  %291 = vmatprep.subr.mxu0 0.0
  %292 = vmatpush1.msra.mxu0 0.0
  %293 = vmatprep.subr.mxu0 0.0
  %294 = vmatpush1.msra.mxu0 0.0
  %295 = vmatprep.subr.mxu0 0.0
  %296 = vmatpush1.msra.mxu0 0.0
  %297 = vmatprep.subr.mxu0 0.0
  %298 = vmatpush1.msra.mxu0 0.0
  %299 = vmatprep.subr.mxu0 0.0
  %300 = vmatpush1.msra.mxu0 0.0
  %301 = vmatprep.subr.mxu0 0.0
  %302 = vmatpush1.msra.mxu0 0.0
  %303 = vmatprep.subr.mxu0 0.0
  %304 = vmatpush1.msra.mxu0 0.0
  %305 = vmatprep.subr.mxu0 0.0
  %306 = vmatpush1.msra.mxu0 0.0
  %307 = vmatprep.subr.mxu0 0.0
  %308 = vmatpush1.msra.mxu0 0.0
  %309 = vmatprep.subr.mxu0 0.0
  %310 = vmatpush1.msra.mxu0 0.0
  %311 = vmatprep.subr.mxu0 0.0
  %312 = vmatpush1.msra.mxu0 0.0
  %313 = vmatprep.subr.mxu0 0.0
  %314 = vmatpush1.msra.mxu0 0.0
  %315 = vmatprep.subr.mxu0 0.0
  %316 = vmatpush1.msra.mxu0 0.0
  %317 = vmatprep.subr.mxu0 0.0
  %318 = vmatpush1.msra.mxu0 0.0
  %319 = vmatprep.subr.mxu0 0.0
  %320 = vmatpush1.msra.mxu0 0.0
  %321 = vmatprep.subr.mxu0 0.0
  %322 = vmatpush1.msra.mxu0 0.0
  %323 = vmatprep.subr.mxu0 0.0
  %324 = vmatpush1.msra.mxu0 0.0
  %325 = vmatprep.subr.mxu0 0.0
  %326 = vmatpush1.msra.mxu0 0.0
  %327 = vmatprep.subr.mxu0 0.0
  %328 = vmatpush1.msra.mxu0 0.0
  %329 = vmatprep.subr.mxu0 0.0
  %330 = vmatpush1.msra.mxu0 0.0
  %331 = vmatprep.subr.mxu0 0.0
  %332 = vmatpush1.msra.mxu0 0.0
  %333 = vmatprep.subr.mxu0 0.0
  %334 = vmatpush1.msra.mxu0 0.0
  %335 = vmatprep.mubr.f32.mxu0 0.0
  %336 = vmatmul.mubr.f32.gmra.mrb[0].mxu0 %v269
  %v337 = vpop.f32.mrb[0].mxu0
  %v338 = vadd.f32 %v267, %v337
  %v339 = vpop.f32.mrb[0].mxu0
  %340 = vdwg.mxu0
  %s341 = scalar_lea.vmem [#allocation2], 32
  %342 = vst [vmem:[%s341] sm:$0xff] %v338
  %s343 = scalar_lea.vmem %s1, 32
  %v344 = vld [vmem:[%s343] sm:$0xff]
  %s345 = scalar_lea.vmem %s0, 40
  %v346 = vld [vmem:[%s345] sm:$0xff]
  %v348 = vsel %vm30, %v344, 0
  %350 = vmatprep.subr.mxu0 0.0
  %351 = vmatpush1.msra.mxu0 %v338
  %352 = vmatprep.subr.mxu0 0.0
  %353 = vmatpush1.msra.mxu0 0.0
  %354 = vmatprep.subr.mxu0 0.0
  %355 = vmatpush1.msra.mxu0 0.0
  %356 = vmatprep.subr.mxu0 0.0
  %357 = vmatpush1.msra.mxu0 0.0
  %358 = vmatprep.subr.mxu0 0.0
  %359 = vmatpush1.msra.mxu0 0.0
  %360 = vmatprep.subr.mxu0 0.0
  %361 = vmatpush1.msra.mxu0 0.0
  %362 = vmatprep.subr.mxu0 0.0
  %363 = vmatpush1.msra.mxu0 0.0
  %364 = vmatprep.subr.mxu0 0.0
  %365 = vmatpush1.msra.mxu0 0.0
  %366 = vmatprep.subr.mxu0 0.0
  %367 = vmatpush1.msra.mxu0 0.0
  %368 = vmatprep.subr.mxu0 0.0
  %369 = vmatpush1.msra.mxu0 0.0
  %370 = vmatprep.subr.mxu0 0.0
  %371 = vmatpush1.msra.mxu0 0.0
  %372 = vmatprep.subr.mxu0 0.0
  %373 = vmatpush1.msra.mxu0 0.0
  %374 = vmatprep.subr.mxu0 0.0
  %375 = vmatpush1.msra.mxu0 0.0
  %376 = vmatprep.subr.mxu0 0.0
  %377 = vmatpush1.msra.mxu0 0.0
  %378 = vmatprep.subr.mxu0 0.0
  %379 = vmatpush1.msra.mxu0 0.0
  %380 = vmatprep.subr.mxu0 0.0
  %381 = vmatpush1.msra.mxu0 0.0
  %382 = vmatprep.subr.mxu0 0.0
  %383 = vmatpush1.msra.mxu0 0.0
  %384 = vmatprep.subr.mxu0 0.0
  %385 = vmatpush1.msra.mxu0 0.0
  %386 = vmatprep.subr.mxu0 0.0
  %387 = vmatpush1.msra.mxu0 0.0
  %388 = vmatprep.subr.mxu0 0.0
  %389 = vmatpush1.msra.mxu0 0.0
  %390 = vmatprep.subr.mxu0 0.0
  %391 = vmatpush1.msra.mxu0 0.0
  %392 = vmatprep.subr.mxu0 0.0
  %393 = vmatpush1.msra.mxu0 0.0
  %394 = vmatprep.subr.mxu0 0.0
  %395 = vmatpush1.msra.mxu0 0.0
  %396 = vmatprep.subr.mxu0 0.0
  %397 = vmatpush1.msra.mxu0 0.0
  %398 = vmatprep.subr.mxu0 0.0
  %399 = vmatpush1.msra.mxu0 0.0
  %400 = vmatprep.subr.mxu0 0.0
  %401 = vmatpush1.msra.mxu0 0.0
  %402 = vmatprep.subr.mxu0 0.0
  %403 = vmatpush1.msra.mxu0 0.0
  %404 = vmatprep.subr.mxu0 0.0
  %405 = vmatpush1.msra.mxu0 0.0
  %406 = vmatprep.subr.mxu0 0.0
  %407 = vmatpush1.msra.mxu0 0.0
  %408 = vmatprep.subr.mxu0 0.0
  %409 = vmatpush1.msra.mxu0 0.0
  %410 = vmatprep.subr.mxu0 0.0
  %411 = vmatpush1.msra.mxu0 0.0
  %412 = vmatprep.subr.mxu0 0.0
  %413 = vmatpush1.msra.mxu0 0.0
  %414 = vmatprep.mubr.f32.mxu0 0.0
  %415 = vmatmul.mubr.f32.gmra.mrb[0].mxu0 %v348
  %v416 = vpop.f32.mrb[0].mxu0
  %v417 = vadd.f32 %v346, %v416
  %v418 = vpop.f32.mrb[0].mxu0
  %419 = vdwg.mxu0
  %s420 = scalar_lea.vmem [#allocation2], 40
  %421 = vst [vmem:[%s420] sm:$0xff] %v417
  %s422 = scalar_lea.vmem %s1, 40
  %v423 = vld [vmem:[%s422] sm:$0xff]
  %s424 = scalar_lea.vmem %s0, 48
  %v425 = vld [vmem:[%s424] sm:$0xff]
  %v427 = vsel %vm30, %v423, 0
  %429 = vmatprep.subr.mxu0 0.0
  %430 = vmatpush1.msra.mxu0 %v417
  %431 = vmatprep.subr.mxu0 0.0
  %432 = vmatpush1.msra.mxu0 0.0
  %433 = vmatprep.subr.mxu0 0.0
  %434 = vmatpush1.msra.mxu0 0.0
  %435 = vmatprep.subr.mxu0 0.0
  %436 = vmatpush1.msra.mxu0 0.0
  %437 = vmatprep.subr.mxu0 0.0
  %438 = vmatpush1.msra.mxu0 0.0
  %439 = vmatprep.subr.mxu0 0.0
  %440 = vmatpush1.msra.mxu0 0.0
  %441 = vmatprep.subr.mxu0 0.0
  %442 = vmatpush1.msra.mxu0 0.0
  %443 = vmatprep.subr.mxu0 0.0
  %444 = vmatpush1.msra.mxu0 0.0
  %445 = vmatprep.subr.mxu0 0.0
  %446 = vmatpush1.msra.mxu0 0.0
  %447 = vmatprep.subr.mxu0 0.0
  %448 = vmatpush1.msra.mxu0 0.0
  %449 = vmatprep.subr.mxu0 0.0
  %450 = vmatpush1.msra.mxu0 0.0
  %451 = vmatprep.subr.mxu0 0.0
  %452 = vmatpush1.msra.mxu0 0.0
  %453 = vmatprep.subr.mxu0 0.0
  %454 = vmatpush1.msra.mxu0 0.0
  %455 = vmatprep.subr.mxu0 0.0
  %456 = vmatpush1.msra.mxu0 0.0
  %457 = vmatprep.subr.mxu0 0.0
  %458 = vmatpush1.msra.mxu0 0.0
  %459 = vmatprep.subr.mxu0 0.0
  %460 = vmatpush1.msra.mxu0 0.0
  %461 = vmatprep.subr.mxu0 0.0
  %462 = vmatpush1.msra.mxu0 0.0
  %463 = vmatprep.subr.mxu0 0.0
  %464 = vmatpush1.msra.mxu0 0.0
  %465 = vmatprep.subr.mxu0 0.0
  %466 = vmatpush1.msra.mxu0 0.0
  %467 = vmatprep.subr.mxu0 0.0
  %468 = vmatpush1.msra.mxu0 0.0
  %469 = vmatprep.subr.mxu0 0.0
  %470 = vmatpush1.msra.mxu0 0.0
  %471 = vmatprep.subr.mxu0 0.0
  %472 = vmatpush1.msra.mxu0 0.0
  %473 = vmatprep.subr.mxu0 0.0
  %474 = vmatpush1.msra.mxu0 0.0
  %475 = vmatprep.subr.mxu0 0.0
  %476 = vmatpush1.msra.mxu0 0.0
  %477 = vmatprep.subr.mxu0 0.0
  %478 = vmatpush1.msra.mxu0 0.0
  %479 = vmatprep.subr.mxu0 0.0
  %480 = vmatpush1.msra.mxu0 0.0
  %481 = vmatprep.subr.mxu0 0.0
  %482 = vmatpush1.msra.mxu0 0.0
  %483 = vmatprep.subr.mxu0 0.0
  %484 = vmatpush1.msra.mxu0 0.0
  %485 = vmatprep.subr.mxu0 0.0
  %486 = vmatpush1.msra.mxu0 0.0
  %487 = vmatprep.subr.mxu0 0.0
  %488 = vmatpush1.msra.mxu0 0.0
  %489 = vmatprep.subr.mxu0 0.0
  %490 = vmatpush1.msra.mxu0 0.0
  %491 = vmatprep.subr.mxu0 0.0
  %492 = vmatpush1.msra.mxu0 0.0
  %493 = vmatprep.mubr.f32.mxu0 0.0
  %494 = vmatmul.mubr.f32.gmra.mrb[0].mxu0 %v427
  %v495 = vpop.f32.mrb[0].mxu0
  %v496 = vadd.f32 %v425, %v495
  %v497 = vpop.f32.mrb[0].mxu0
  %498 = vdwg.mxu0
  %s499 = scalar_lea.vmem [#allocation2], 48
  %500 = vst [vmem:[%s499] sm:$0xff] %v496
  %s501 = scalar_lea.vmem %s1, 48
  %v502 = vld [vmem:[%s501] sm:$0xff]
  %s503 = scalar_lea.vmem %s0, 56
  %v504 = vld [vmem:[%s503] sm:$0xff]
  %v506 = vsel %vm30, %v502, 0
  %508 = vmatprep.subr.mxu0 0.0
  %509 = vmatpush1.msra.mxu0 %v496
  %510 = vmatprep.subr.mxu0 0.0
  %511 = vmatpush1.msra.mxu0 0.0
  %512 = vmatprep.subr.mxu0 0.0
  %513 = vmatpush1.msra.mxu0 0.0
  %514 = vmatprep.subr.mxu0 0.0
  %515 = vmatpush1.msra.mxu0 0.0
  %516 = vmatprep.subr.mxu0 0.0
  %517 = vmatpush1.msra.mxu0 0.0
  %518 = vmatprep.subr.mxu0 0.0
  %519 = vmatpush1.msra.mxu0 0.0
  %520 = vmatprep.subr.mxu0 0.0
  %521 = vmatpush1.msra.mxu0 0.0
  %522 = vmatprep.subr.mxu0 0.0
  %523 = vmatpush1.msra.mxu0 0.0
  %524 = vmatprep.subr.mxu0 0.0
  %525 = vmatpush1.msra.mxu0 0.0
  %526 = vmatprep.subr.mxu0 0.0
  %527 = vmatpush1.msra.mxu0 0.0
  %528 = vmatprep.subr.mxu0 0.0
  %529 = vmatpush1.msra.mxu0 0.0
  %530 = vmatprep.subr.mxu0 0.0
  %531 = vmatpush1.msra.mxu0 0.0
  %532 = vmatprep.subr.mxu0 0.0
  %533 = vmatpush1.msra.mxu0 0.0
  %534 = vmatprep.subr.mxu0 0.0
  %535 = vmatpush1.msra.mxu0 0.0
  %536 = vmatprep.subr.mxu0 0.0
  %537 = vmatpush1.msra.mxu0 0.0
  %538 = vmatprep.subr.mxu0 0.0
  %539 = vmatpush1.msra.mxu0 0.0
  %540 = vmatprep.subr.mxu0 0.0
  %541 = vmatpush1.msra.mxu0 0.0
  %542 = vmatprep.subr.mxu0 0.0
  %543 = vmatpush1.msra.mxu0 0.0
  %544 = vmatprep.subr.mxu0 0.0
  %545 = vmatpush1.msra.mxu0 0.0
  %546 = vmatprep.subr.mxu0 0.0
  %547 = vmatpush1.msra.mxu0 0.0
  %548 = vmatprep.subr.mxu0 0.0
  %549 = vmatpush1.msra.mxu0 0.0
  %550 = vmatprep.subr.mxu0 0.0
  %551 = vmatpush1.msra.mxu0 0.0
  %552 = vmatprep.subr.mxu0 0.0
  %553 = vmatpush1.msra.mxu0 0.0
  %554 = vmatprep.subr.mxu0 0.0
  %555 = vmatpush1.msra.mxu0 0.0
  %556 = vmatprep.subr.mxu0 0.0
  %557 = vmatpush1.msra.mxu0 0.0
  %558 = vmatprep.subr.mxu0 0.0
  %559 = vmatpush1.msra.mxu0 0.0
  %560 = vmatprep.subr.mxu0 0.0
  %561 = vmatpush1.msra.mxu0 0.0
  %562 = vmatprep.subr.mxu0 0.0
  %563 = vmatpush1.msra.mxu0 0.0
  %564 = vmatprep.subr.mxu0 0.0
  %565 = vmatpush1.msra.mxu0 0.0
  %566 = vmatprep.subr.mxu0 0.0
  %567 = vmatpush1.msra.mxu0 0.0
  %568 = vmatprep.subr.mxu0 0.0
  %569 = vmatpush1.msra.mxu0 0.0
  %570 = vmatprep.subr.mxu0 0.0
  %571 = vmatpush1.msra.mxu0 0.0
  %572 = vmatprep.mubr.f32.mxu0 0.0
  %573 = vmatmul.mubr.f32.gmra.mrb[0].mxu0 %v506
  %v574 = vpop.f32.mrb[0].mxu0
  %v575 = vadd.f32 %v504, %v574
  %v576 = vpop.f32.mrb[0].mxu0
  %577 = vdwg.mxu0
  %s578 = scalar_lea.vmem [#allocation2], 56
  %579 = vst [vmem:[%s578] sm:$0xff] %v575
  %v580 = vld [vmem:[%s5] sm:$0xf]
  %582 = vset.pattern.permute.xlu0 0
  %583 = vperm.xlu0 %582, %v580
  %v584 = vpop.permute.xlu0 %583
  %586 = vst [vmem:[%s7] sm:$0xf] %v584
  %v587 = vld [vmem:[%s4] sm:$0xf]
  %v588 = vld [vmem:[%s4 + $0x4] sm:$0xf]
  %v589 = vld [vmem:[%s4 + $0x8] sm:$0xf]
  %v590 = vld [vmem:[%s4 + $0xc] sm:$0xf]
  %v591 = vld [vmem:[%s4 + $0x10] sm:$0xf]
  %v592 = vld [vmem:[%s4 + $0x14] sm:$0xf]
  %v593 = vld [vmem:[%s4 + $0x18] sm:$0xf]
  %v594 = vld [vmem:[#allocation2] sm:$0xff]
  %v595 = vld [vmem:[#allocation2 + $0x8] sm:$0xff]
  %v596 = vld [vmem:[#allocation2 + $0x10] sm:$0xff]
  %v597 = vld [vmem:[#allocation2 + $0x18] sm:$0xff]
  %v598 = vld [vmem:[#allocation2 + $0x20] sm:$0xff]
  %v599 = vld [vmem:[#allocation2 + $0x28] sm:$0xff]
  %v600 = vld [vmem:[#allocation2 + $0x30] sm:$0xff]
  %v602 = vsel %vm30, %v587, 0
  %604 = vmatprep.subr.mxu0 0.0
  %605 = vmatpush1.msra.mxu0 %v594
  %606 = vmatprep.subr.mxu0 0.0
  %607 = vmatpush1.msra.mxu0 0.0
  %608 = vmatprep.subr.mxu0 0.0
  %609 = vmatpush1.msra.mxu0 0.0
  %610 = vmatprep.subr.mxu0 0.0
  %611 = vmatpush1.msra.mxu0 0.0
  %612 = vmatprep.subr.mxu0 0.0
  %613 = vmatpush1.msra.mxu0 0.0
  %614 = vmatprep.subr.mxu0 0.0
  %615 = vmatpush1.msra.mxu0 0.0
  %616 = vmatprep.subr.mxu0 0.0
  %617 = vmatpush1.msra.mxu0 0.0
  %618 = vmatprep.subr.mxu0 0.0
  %619 = vmatpush1.msra.mxu0 0.0
  %620 = vmatprep.subr.mxu0 0.0
  %621 = vmatpush1.msra.mxu0 0.0
  %622 = vmatprep.subr.mxu0 0.0
  %623 = vmatpush1.msra.mxu0 0.0
  %624 = vmatprep.subr.mxu0 0.0
  %625 = vmatpush1.msra.mxu0 0.0
  %626 = vmatprep.subr.mxu0 0.0
  %627 = vmatpush1.msra.mxu0 0.0
  %628 = vmatprep.subr.mxu0 0.0
  %629 = vmatpush1.msra.mxu0 0.0
  %630 = vmatprep.subr.mxu0 0.0
  %631 = vmatpush1.msra.mxu0 0.0
  %632 = vmatprep.subr.mxu0 0.0
  %633 = vmatpush1.msra.mxu0 0.0
  %634 = vmatprep.subr.mxu0 0.0
  %635 = vmatpush1.msra.mxu0 0.0
  %636 = vmatprep.subr.mxu0 0.0
  %637 = vmatpush1.msra.mxu0 0.0
  %638 = vmatprep.subr.mxu0 0.0
  %639 = vmatpush1.msra.mxu0 0.0
  %640 = vmatprep.subr.mxu0 0.0
  %641 = vmatpush1.msra.mxu0 0.0
  %642 = vmatprep.subr.mxu0 0.0
  %643 = vmatpush1.msra.mxu0 0.0
  %644 = vmatprep.subr.mxu0 0.0
  %645 = vmatpush1.msra.mxu0 0.0
  %646 = vmatprep.subr.mxu0 0.0
  %647 = vmatpush1.msra.mxu0 0.0
  %648 = vmatprep.subr.mxu0 0.0
  %649 = vmatpush1.msra.mxu0 0.0
  %650 = vmatprep.subr.mxu0 0.0
  %651 = vmatpush1.msra.mxu0 0.0
  %652 = vmatprep.subr.mxu0 0.0
  %653 = vmatpush1.msra.mxu0 0.0
  %654 = vmatprep.subr.mxu0 0.0
  %655 = vmatpush1.msra.mxu0 0.0
  %656 = vmatprep.subr.mxu0 0.0
  %657 = vmatpush1.msra.mxu0 0.0
  %658 = vmatprep.subr.mxu0 0.0
  %659 = vmatpush1.msra.mxu0 0.0
  %660 = vmatprep.subr.mxu0 0.0
  %661 = vmatpush1.msra.mxu0 0.0
  %662 = vmatprep.subr.mxu0 0.0
  %663 = vmatpush1.msra.mxu0 0.0
  %664 = vmatprep.subr.mxu0 0.0
  %665 = vmatpush1.msra.mxu0 0.0
  %666 = vmatprep.subr.mxu0 0.0
  %667 = vmatpush1.msra.mxu0 0.0
  %668 = vmatprep.mubr.f32.mxu0 0.0
  %669 = vmatmul.mubr.f32.gmra.mrb[0].mxu0 %v602
  %v670 = vpop.f32.mrb[0].mxu0
  %v671 = vadd.f32 0.0, %v670
  %v672 = vpop.f32.mrb[0].mxu0
  %673 = vdwg.mxu0
  %v675 = vsel %vm30, %v588, 0
  %677 = vmatprep.subr.mxu0 0.0
  %678 = vmatpush1.msra.mxu0 %v595
  %679 = vmatprep.subr.mxu0 0.0
  %680 = vmatpush1.msra.mxu0 0.0
  %681 = vmatprep.subr.mxu0 0.0
  %682 = vmatpush1.msra.mxu0 0.0
  %683 = vmatprep.subr.mxu0 0.0
  %684 = vmatpush1.msra.mxu0 0.0
  %685 = vmatprep.subr.mxu0 0.0
  %686 = vmatpush1.msra.mxu0 0.0
  %687 = vmatprep.subr.mxu0 0.0
  %688 = vmatpush1.msra.mxu0 0.0
  %689 = vmatprep.subr.mxu0 0.0
  %690 = vmatpush1.msra.mxu0 0.0
  %691 = vmatprep.subr.mxu0 0.0
  %692 = vmatpush1.msra.mxu0 0.0
  %693 = vmatprep.subr.mxu0 0.0
  %694 = vmatpush1.msra.mxu0 0.0
  %695 = vmatprep.subr.mxu0 0.0
  %696 = vmatpush1.msra.mxu0 0.0
  %697 = vmatprep.subr.mxu0 0.0
  %698 = vmatpush1.msra.mxu0 0.0
  %699 = vmatprep.subr.mxu0 0.0
  %700 = vmatpush1.msra.mxu0 0.0
  %701 = vmatprep.subr.mxu0 0.0
  %702 = vmatpush1.msra.mxu0 0.0
  %703 = vmatprep.subr.mxu0 0.0
  %704 = vmatpush1.msra.mxu0 0.0
  %705 = vmatprep.subr.mxu0 0.0
  %706 = vmatpush1.msra.mxu0 0.0
  %707 = vmatprep.subr.mxu0 0.0
  %708 = vmatpush1.msra.mxu0 0.0
  %709 = vmatprep.subr.mxu0 0.0
  %710 = vmatpush1.msra.mxu0 0.0
  %711 = vmatprep.subr.mxu0 0.0
  %712 = vmatpush1.msra.mxu0 0.0
  %713 = vmatprep.subr.mxu0 0.0
  %714 = vmatpush1.msra.mxu0 0.0
  %715 = vmatprep.subr.mxu0 0.0
  %716 = vmatpush1.msra.mxu0 0.0
  %717 = vmatprep.subr.mxu0 0.0
  %718 = vmatpush1.msra.mxu0 0.0
  %719 = vmatprep.subr.mxu0 0.0
  %720 = vmatpush1.msra.mxu0 0.0
  %721 = vmatprep.subr.mxu0 0.0
  %722 = vmatpush1.msra.mxu0 0.0
  %723 = vmatprep.subr.mxu0 0.0
  %724 = vmatpush1.msra.mxu0 0.0
  %725 = vmatprep.subr.mxu0 0.0
  %726 = vmatpush1.msra.mxu0 0.0
  %727 = vmatprep.subr.mxu0 0.0
  %728 = vmatpush1.msra.mxu0 0.0
  %729 = vmatprep.subr.mxu0 0.0
  %730 = vmatpush1.msra.mxu0 0.0
  %731 = vmatprep.subr.mxu0 0.0
  %732 = vmatpush1.msra.mxu0 0.0
  %733 = vmatprep.subr.mxu0 0.0
  %734 = vmatpush1.msra.mxu0 0.0
  %735 = vmatprep.subr.mxu0 0.0
  %736 = vmatpush1.msra.mxu0 0.0
  %737 = vmatprep.subr.mxu0 0.0
  %738 = vmatpush1.msra.mxu0 0.0
  %739 = vmatprep.subr.mxu0 0.0
  %740 = vmatpush1.msra.mxu0 0.0
  %741 = vmatprep.mubr.f32.mxu0 0.0
  %742 = vmatmul.mubr.f32.gmra.mrb[0].mxu0 %v675
  %v743 = vpop.f32.mrb[0].mxu0
  %v744 = vadd.f32 0.0, %v743
  %v745 = vpop.f32.mrb[0].mxu0
  %746 = vdwg.mxu0
  %v748 = vsel %vm30, %v589, 0
  %750 = vmatprep.subr.mxu0 0.0
  %751 = vmatpush1.msra.mxu0 %v596
  %752 = vmatprep.subr.mxu0 0.0
  %753 = vmatpush1.msra.mxu0 0.0
  %754 = vmatprep.subr.mxu0 0.0
  %755 = vmatpush1.msra.mxu0 0.0
  %756 = vmatprep.subr.mxu0 0.0
  %757 = vmatpush1.msra.mxu0 0.0
  %758 = vmatprep.subr.mxu0 0.0
  %759 = vmatpush1.msra.mxu0 0.0
  %760 = vmatprep.subr.mxu0 0.0
  %761 = vmatpush1.msra.mxu0 0.0
  %762 = vmatprep.subr.mxu0 0.0
  %763 = vmatpush1.msra.mxu0 0.0
  %764 = vmatprep.subr.mxu0 0.0
  %765 = vmatpush1.msra.mxu0 0.0
  %766 = vmatprep.subr.mxu0 0.0
  %767 = vmatpush1.msra.mxu0 0.0
  %768 = vmatprep.subr.mxu0 0.0
  %769 = vmatpush1.msra.mxu0 0.0
  %770 = vmatprep.subr.mxu0 0.0
  %771 = vmatpush1.msra.mxu0 0.0
  %772 = vmatprep.subr.mxu0 0.0
  %773 = vmatpush1.msra.mxu0 0.0
  %774 = vmatprep.subr.mxu0 0.0
  %775 = vmatpush1.msra.mxu0 0.0
  %776 = vmatprep.subr.mxu0 0.0
  %777 = vmatpush1.msra.mxu0 0.0
  %778 = vmatprep.subr.mxu0 0.0
  %779 = vmatpush1.msra.mxu0 0.0
  %780 = vmatprep.subr.mxu0 0.0
  %781 = vmatpush1.msra.mxu0 0.0
  %782 = vmatprep.subr.mxu0 0.0
  %783 = vmatpush1.msra.mxu0 0.0
  %784 = vmatprep.subr.mxu0 0.0
  %785 = vmatpush1.msra.mxu0 0.0
  %786 = vmatprep.subr.mxu0 0.0
  %787 = vmatpush1.msra.mxu0 0.0
  %788 = vmatprep.subr.mxu0 0.0
  %789 = vmatpush1.msra.mxu0 0.0
  %790 = vmatprep.subr.mxu0 0.0
  %791 = vmatpush1.msra.mxu0 0.0
  %792 = vmatprep.subr.mxu0 0.0
  %793 = vmatpush1.msra.mxu0 0.0
  %794 = vmatprep.subr.mxu0 0.0
  %795 = vmatpush1.msra.mxu0 0.0
  %796 = vmatprep.subr.mxu0 0.0
  %797 = vmatpush1.msra.mxu0 0.0
  %798 = vmatprep.subr.mxu0 0.0
  %799 = vmatpush1.msra.mxu0 0.0
  %800 = vmatprep.subr.mxu0 0.0
  %801 = vmatpush1.msra.mxu0 0.0
  %802 = vmatprep.subr.mxu0 0.0
  %803 = vmatpush1.msra.mxu0 0.0
  %804 = vmatprep.subr.mxu0 0.0
  %805 = vmatpush1.msra.mxu0 0.0
  %806 = vmatprep.subr.mxu0 0.0
  %807 = vmatpush1.msra.mxu0 0.0
  %808 = vmatprep.subr.mxu0 0.0
  %809 = vmatpush1.msra.mxu0 0.0
  %810 = vmatprep.subr.mxu0 0.0
  %811 = vmatpush1.msra.mxu0 0.0
  %812 = vmatprep.subr.mxu0 0.0
  %813 = vmatpush1.msra.mxu0 0.0
  %814 = vmatprep.mubr.f32.mxu0 0.0
  %815 = vmatmul.mubr.f32.gmra.mrb[0].mxu0 %v748
  %v816 = vpop.f32.mrb[0].mxu0
  %v817 = vadd.f32 0.0, %v816
  %v818 = vpop.f32.mrb[0].mxu0
  %819 = vdwg.mxu0
  %v821 = vsel %vm30, %v590, 0
  %823 = vmatprep.subr.mxu0 0.0
  %824 = vmatpush1.msra.mxu0 %v597
  %825 = vmatprep.subr.mxu0 0.0
  %826 = vmatpush1.msra.mxu0 0.0
  %827 = vmatprep.subr.mxu0 0.0
  %828 = vmatpush1.msra.mxu0 0.0
  %829 = vmatprep.subr.mxu0 0.0
  %830 = vmatpush1.msra.mxu0 0.0
  %831 = vmatprep.subr.mxu0 0.0
  %832 = vmatpush1.msra.mxu0 0.0
  %833 = vmatprep.subr.mxu0 0.0
  %834 = vmatpush1.msra.mxu0 0.0
  %835 = vmatprep.subr.mxu0 0.0
  %836 = vmatpush1.msra.mxu0 0.0
  %837 = vmatprep.subr.mxu0 0.0
  %838 = vmatpush1.msra.mxu0 0.0
  %839 = vmatprep.subr.mxu0 0.0
  %840 = vmatpush1.msra.mxu0 0.0
  %841 = vmatprep.subr.mxu0 0.0
  %842 = vmatpush1.msra.mxu0 0.0
  %843 = vmatprep.subr.mxu0 0.0
  %844 = vmatpush1.msra.mxu0 0.0
  %845 = vmatprep.subr.mxu0 0.0
  %846 = vmatpush1.msra.mxu0 0.0
  %847 = vmatprep.subr.mxu0 0.0
  %848 = vmatpush1.msra.mxu0 0.0
  %849 = vmatprep.subr.mxu0 0.0
  %850 = vmatpush1.msra.mxu0 0.0
  %851 = vmatprep.subr.mxu0 0.0
  %852 = vmatpush1.msra.mxu0 0.0
  %853 = vmatprep.subr.mxu0 0.0
  %854 = vmatpush1.msra.mxu0 0.0
  %855 = vmatprep.subr.mxu0 0.0
  %856 = vmatpush1.msra.mxu0 0.0
  %857 = vmatprep.subr.mxu0 0.0
  %858 = vmatpush1.msra.mxu0 0.0
  %859 = vmatprep.subr.mxu0 0.0
  %860 = vmatpush1.msra.mxu0 0.0
  %861 = vmatprep.subr.mxu0 0.0
  %862 = vmatpush1.msra.mxu0 0.0
  %863 = vmatprep.subr.mxu0 0.0
  %864 = vmatpush1.msra.mxu0 0.0
  %865 = vmatprep.subr.mxu0 0.0
  %866 = vmatpush1.msra.mxu0 0.0
  %867 = vmatprep.subr.mxu0 0.0
  %868 = vmatpush1.msra.mxu0 0.0
  %869 = vmatprep.subr.mxu0 0.0
  %870 = vmatpush1.msra.mxu0 0.0
  %871 = vmatprep.subr.mxu0 0.0
  %872 = vmatpush1.msra.mxu0 0.0
  %873 = vmatprep.subr.mxu0 0.0
  %874 = vmatpush1.msra.mxu0 0.0
  %875 = vmatprep.subr.mxu0 0.0
  %876 = vmatpush1.msra.mxu0 0.0
  %877 = vmatprep.subr.mxu0 0.0
  %878 = vmatpush1.msra.mxu0 0.0
  %879 = vmatprep.subr.mxu0 0.0
  %880 = vmatpush1.msra.mxu0 0.0
  %881 = vmatprep.subr.mxu0 0.0
  %882 = vmatpush1.msra.mxu0 0.0
  %883 = vmatprep.subr.mxu0 0.0
  %884 = vmatpush1.msra.mxu0 0.0
  %885 = vmatprep.subr.mxu0 0.0
  %886 = vmatpush1.msra.mxu0 0.0
  %887 = vmatprep.mubr.f32.mxu0 0.0
  %888 = vmatmul.mubr.f32.gmra.mrb[0].mxu0 %v821
  %v889 = vpop.f32.mrb[0].mxu0
  %v890 = vadd.f32 0.0, %v889
  %v891 = vpop.f32.mrb[0].mxu0
  %892 = vdwg.mxu0
  %v894 = vsel %vm30, %v591, 0
  %896 = vmatprep.subr.mxu0 0.0
  %897 = vmatpush1.msra.mxu0 %v598
  %898 = vmatprep.subr.mxu0 0.0
  %899 = vmatpush1.msra.mxu0 0.0
  %900 = vmatprep.subr.mxu0 0.0
  %901 = vmatpush1.msra.mxu0 0.0
  %902 = vmatprep.subr.mxu0 0.0
  %903 = vmatpush1.msra.mxu0 0.0
  %904 = vmatprep.subr.mxu0 0.0
  %905 = vmatpush1.msra.mxu0 0.0
  %906 = vmatprep.subr.mxu0 0.0
  %907 = vmatpush1.msra.mxu0 0.0
  %908 = vmatprep.subr.mxu0 0.0
  %909 = vmatpush1.msra.mxu0 0.0
  %910 = vmatprep.subr.mxu0 0.0
  %911 = vmatpush1.msra.mxu0 0.0
  %912 = vmatprep.subr.mxu0 0.0
  %913 = vmatpush1.msra.mxu0 0.0
  %914 = vmatprep.subr.mxu0 0.0
  %915 = vmatpush1.msra.mxu0 0.0
  %916 = vmatprep.subr.mxu0 0.0
  %917 = vmatpush1.msra.mxu0 0.0
  %918 = vmatprep.subr.mxu0 0.0
  %919 = vmatpush1.msra.mxu0 0.0
  %920 = vmatprep.subr.mxu0 0.0
  %921 = vmatpush1.msra.mxu0 0.0
  %922 = vmatprep.subr.mxu0 0.0
  %923 = vmatpush1.msra.mxu0 0.0
  %924 = vmatprep.subr.mxu0 0.0
  %925 = vmatpush1.msra.mxu0 0.0
  %926 = vmatprep.subr.mxu0 0.0
  %927 = vmatpush1.msra.mxu0 0.0
  %928 = vmatprep.subr.mxu0 0.0
  %929 = vmatpush1.msra.mxu0 0.0
  %930 = vmatprep.subr.mxu0 0.0
  %931 = vmatpush1.msra.mxu0 0.0
  %932 = vmatprep.subr.mxu0 0.0
  %933 = vmatpush1.msra.mxu0 0.0
  %934 = vmatprep.subr.mxu0 0.0
  %935 = vmatpush1.msra.mxu0 0.0
  %936 = vmatprep.subr.mxu0 0.0
  %937 = vmatpush1.msra.mxu0 0.0
  %938 = vmatprep.subr.mxu0 0.0
  %939 = vmatpush1.msra.mxu0 0.0
  %940 = vmatprep.subr.mxu0 0.0
  %941 = vmatpush1.msra.mxu0 0.0
  %942 = vmatprep.subr.mxu0 0.0
  %943 = vmatpush1.msra.mxu0 0.0
  %944 = vmatprep.subr.mxu0 0.0
  %945 = vmatpush1.msra.mxu0 0.0
  %946 = vmatprep.subr.mxu0 0.0
  %947 = vmatpush1.msra.mxu0 0.0
  %948 = vmatprep.subr.mxu0 0.0
  %949 = vmatpush1.msra.mxu0 0.0
  %950 = vmatprep.subr.mxu0 0.0
  %951 = vmatpush1.msra.mxu0 0.0
  %952 = vmatprep.subr.mxu0 0.0
  %953 = vmatpush1.msra.mxu0 0.0
  %954 = vmatprep.subr.mxu0 0.0
  %955 = vmatpush1.msra.mxu0 0.0
  %956 = vmatprep.subr.mxu0 0.0
  %957 = vmatpush1.msra.mxu0 0.0
  %958 = vmatprep.subr.mxu0 0.0
  %959 = vmatpush1.msra.mxu0 0.0
  %960 = vmatprep.mubr.f32.mxu0 0.0
  %961 = vmatmul.mubr.f32.gmra.mrb[0].mxu0 %v894
  %v962 = vpop.f32.mrb[0].mxu0
  %v963 = vadd.f32 0.0, %v962
  %v964 = vpop.f32.mrb[0].mxu0
  %965 = vdwg.mxu0
  %v967 = vsel %vm30, %v592, 0
  %969 = vmatprep.subr.mxu0 0.0
  %970 = vmatpush1.msra.mxu0 %v599
  %971 = vmatprep.subr.mxu0 0.0
  %972 = vmatpush1.msra.mxu0 0.0
  %973 = vmatprep.subr.mxu0 0.0
  %974 = vmatpush1.msra.mxu0 0.0
  %975 = vmatprep.subr.mxu0 0.0
  %976 = vmatpush1.msra.mxu0 0.0
  %977 = vmatprep.subr.mxu0 0.0
  %978 = vmatpush1.msra.mxu0 0.0
  %979 = vmatprep.subr.mxu0 0.0
  %980 = vmatpush1.msra.mxu0 0.0
  %981 = vmatprep.subr.mxu0 0.0
  %982 = vmatpush1.msra.mxu0 0.0
  %983 = vmatprep.subr.mxu0 0.0
  %984 = vmatpush1.msra.mxu0 0.0
  %985 = vmatprep.subr.mxu0 0.0
  %986 = vmatpush1.msra.mxu0 0.0
  %987 = vmatprep.subr.mxu0 0.0
  %988 = vmatpush1.msra.mxu0 0.0
  %989 = vmatprep.subr.mxu0 0.0
  %990 = vmatpush1.msra.mxu0 0.0
  %991 = vmatprep.subr.mxu0 0.0
  %992 = vmatpush1.msra.mxu0 0.0
  %993 = vmatprep.subr.mxu0 0.0
  %994 = vmatpush1.msra.mxu0 0.0
  %995 = vmatprep.subr.mxu0 0.0
  %996 = vmatpush1.msra.mxu0 0.0
  %997 = vmatprep.subr.mxu0 0.0
  %998 = vmatpush1.msra.mxu0 0.0
  %999 = vmatprep.subr.mxu0 0.0
  %1000 = vmatpush1.msra.mxu0 0.0
  %1001 = vmatprep.subr.mxu0 0.0
  %1002 = vmatpush1.msra.mxu0 0.0
  %1003 = vmatprep.subr.mxu0 0.0
  %1004 = vmatpush1.msra.mxu0 0.0
  %1005 = vmatprep.subr.mxu0 0.0
  %1006 = vmatpush1.msra.mxu0 0.0
  %1007 = vmatprep.subr.mxu0 0.0
  %1008 = vmatpush1.msra.mxu0 0.0
  %1009 = vmatprep.subr.mxu0 0.0
  %1010 = vmatpush1.msra.mxu0 0.0
  %1011 = vmatprep.subr.mxu0 0.0
  %1012 = vmatpush1.msra.mxu0 0.0
  %1013 = vmatprep.subr.mxu0 0.0
  %1014 = vmatpush1.msra.mxu0 0.0
  %1015 = vmatprep.subr.mxu0 0.0
  %1016 = vmatpush1.msra.mxu0 0.0
  %1017 = vmatprep.subr.mxu0 0.0
  %1018 = vmatpush1.msra.mxu0 0.0
  %1019 = vmatprep.subr.mxu0 0.0
  %1020 = vmatpush1.msra.mxu0 0.0
  %1021 = vmatprep.subr.mxu0 0.0
  %1022 = vmatpush1.msra.mxu0 0.0
  %1023 = vmatprep.subr.mxu0 0.0
  %1024 = vmatpush1.msra.mxu0 0.0
  %1025 = vmatprep.subr.mxu0 0.0
  %1026 = vmatpush1.msra.mxu0 0.0
  %1027 = vmatprep.subr.mxu0 0.0
  %1028 = vmatpush1.msra.mxu0 0.0
  %1029 = vmatprep.subr.mxu0 0.0
  %1030 = vmatpush1.msra.mxu0 0.0
  %1031 = vmatprep.subr.mxu0 0.0
  %1032 = vmatpush1.msra.mxu0 0.0
  %1033 = vmatprep.mubr.f32.mxu0 0.0
  %1034 = vmatmul.mubr.f32.gmra.mrb[0].mxu0 %v967
  %v1035 = vpop.f32.mrb[0].mxu0
  %v1036 = vadd.f32 0.0, %v1035
  %v1037 = vpop.f32.mrb[0].mxu0
  %1038 = vdwg.mxu0
  %v1040 = vsel %vm30, %v593, 0
  %1042 = vmatprep.subr.mxu0 0.0
  %1043 = vmatpush1.msra.mxu0 %v600
  %1044 = vmatprep.subr.mxu0 0.0
  %1045 = vmatpush1.msra.mxu0 0.0
  %1046 = vmatprep.subr.mxu0 0.0
  %1047 = vmatpush1.msra.mxu0 0.0
  %1048 = vmatprep.subr.mxu0 0.0
  %1049 = vmatpush1.msra.mxu0 0.0
  %1050 = vmatprep.subr.mxu0 0.0
  %1051 = vmatpush1.msra.mxu0 0.0
  %1052 = vmatprep.subr.mxu0 0.0
  %1053 = vmatpush1.msra.mxu0 0.0
  %1054 = vmatprep.subr.mxu0 0.0
  %1055 = vmatpush1.msra.mxu0 0.0
  %1056 = vmatprep.subr.mxu0 0.0
  %1057 = vmatpush1.msra.mxu0 0.0
  %1058 = vmatprep.subr.mxu0 0.0
  %1059 = vmatpush1.msra.mxu0 0.0
  %1060 = vmatprep.subr.mxu0 0.0
  %1061 = vmatpush1.msra.mxu0 0.0
  %1062 = vmatprep.subr.mxu0 0.0
  %1063 = vmatpush1.msra.mxu0 0.0
  %1064 = vmatprep.subr.mxu0 0.0
  %1065 = vmatpush1.msra.mxu0 0.0
  %1066 = vmatprep.subr.mxu0 0.0
  %1067 = vmatpush1.msra.mxu0 0.0
  %1068 = vmatprep.subr.mxu0 0.0
  %1069 = vmatpush1.msra.mxu0 0.0
  %1070 = vmatprep.subr.mxu0 0.0
  %1071 = vmatpush1.msra.mxu0 0.0
  %1072 = vmatprep.subr.mxu0 0.0
  %1073 = vmatpush1.msra.mxu0 0.0
  %1074 = vmatprep.subr.mxu0 0.0
  %1075 = vmatpush1.msra.mxu0 0.0
  %1076 = vmatprep.subr.mxu0 0.0
  %1077 = vmatpush1.msra.mxu0 0.0
  %1078 = vmatprep.subr.mxu0 0.0
  %1079 = vmatpush1.msra.mxu0 0.0
  %1080 = vmatprep.subr.mxu0 0.0
  %1081 = vmatpush1.msra.mxu0 0.0
  %1082 = vmatprep.subr.mxu0 0.0
  %1083 = vmatpush1.msra.mxu0 0.0
  %1084 = vmatprep.subr.mxu0 0.0
  %1085 = vmatpush1.msra.mxu0 0.0
  %1086 = vmatprep.subr.mxu0 0.0
  %1087 = vmatpush1.msra.mxu0 0.0
  %1088 = vmatprep.subr.mxu0 0.0
  %1089 = vmatpush1.msra.mxu0 0.0
  %1090 = vmatprep.subr.mxu0 0.0
  %1091 = vmatpush1.msra.mxu0 0.0
  %1092 = vmatprep.subr.mxu0 0.0
  %1093 = vmatpush1.msra.mxu0 0.0
  %1094 = vmatprep.subr.mxu0 0.0
  %1095 = vmatpush1.msra.mxu0 0.0
  %1096 = vmatprep.subr.mxu0 0.0
  %1097 = vmatpush1.msra.mxu0 0.0
  %1098 = vmatprep.subr.mxu0 0.0
  %1099 = vmatpush1.msra.mxu0 0.0
  %1100 = vmatprep.subr.mxu0 0.0
  %1101 = vmatpush1.msra.mxu0 0.0
  %1102 = vmatprep.subr.mxu0 0.0
  %1103 = vmatpush1.msra.mxu0 0.0
  %1104 = vmatprep.subr.mxu0 0.0
  %1105 = vmatpush1.msra.mxu0 0.0
  %1106 = vmatprep.mubr.f32.mxu0 0.0
  %1107 = vmatmul.mubr.f32.gmra.mrb[0].mxu0 %v1040
  %v1108 = vpop.f32.mrb[0].mxu0
  %v1109 = vadd.f32 0.0, %v1108
  %v1110 = vpop.f32.mrb[0].mxu0
  %1111 = vdwg.mxu0
  %s1112 = scalar_lea.vmem %s7, 4
  %1113 = vst [vmem:[%s1112] sm:$0xf] %v671
  %1114 = vst [vmem:[%s1112 + $0x4] sm:$0xf] %v744
  %1115 = vst [vmem:[%s1112 + $0x8] sm:$0xf] %v817
  %1116 = vst [vmem:[%s1112 + $0xc] sm:$0xf] %v890
  %1117 = vst [vmem:[%s1112 + $0x10] sm:$0xf] %v963
  %1118 = vst [vmem:[%s1112 + $0x14] sm:$0xf] %v1036
  %1119 = vst [vmem:[%s1112 + $0x18] sm:$0xf] %v1109
  %v1120 = vld [vmem:[%s3] sm:$0xff]
  %v1121 = vld [vmem:[%s3 + $0x8] sm:$0xff]
  %v1122 = vld [vmem:[%s3 + $0x10] sm:$0xff]
  %v1123 = vld [vmem:[%s3 + $0x18] sm:$0xff]
  %v1124 = vld [vmem:[%s3 + $0x20] sm:$0xff]
  %v1125 = vld [vmem:[%s3 + $0x28] sm:$0xff]
  %v1126 = vld [vmem:[%s3 + $0x30] sm:$0xff]
  %v1127 = vld [vmem:[#allocation2] sm:$0xff]
  %v1128 = vld [vmem:[#allocation2 + $0x8] sm:$0xff]
  %v1129 = vld [vmem:[#allocation2 + $0x10] sm:$0xff]
  %v1130 = vld [vmem:[#allocation2 + $0x18] sm:$0xff]
  %v1131 = vld [vmem:[#allocation2 + $0x20] sm:$0xff]
  %v1132 = vld [vmem:[#allocation2 + $0x28] sm:$0xff]
  %v1133 = vld [vmem:[#allocation2 + $0x30] sm:$0xff]
  %v1135 = vsel %vm30, %v1120, 0
  %1137 = vmatprep.subr.mxu0 0.0
  %1138 = vmatpush1.msra.mxu0 %v1127
  %1139 = vmatprep.subr.mxu0 0.0
  %1140 = vmatpush1.msra.mxu0 0.0
  %1141 = vmatprep.subr.mxu0 0.0
  %1142 = vmatpush1.msra.mxu0 0.0
  %1143 = vmatprep.subr.mxu0 0.0
  %1144 = vmatpush1.msra.mxu0 0.0
  %1145 = vmatprep.subr.mxu0 0.0
  %1146 = vmatpush1.msra.mxu0 0.0
  %1147 = vmatprep.subr.mxu0 0.0
  %1148 = vmatpush1.msra.mxu0 0.0
  %1149 = vmatprep.subr.mxu0 0.0
  %1150 = vmatpush1.msra.mxu0 0.0
  %1151 = vmatprep.subr.mxu0 0.0
  %1152 = vmatpush1.msra.mxu0 0.0
  %1153 = vmatprep.subr.mxu0 0.0
  %1154 = vmatpush1.msra.mxu0 0.0
  %1155 = vmatprep.subr.mxu0 0.0
  %1156 = vmatpush1.msra.mxu0 0.0
  %1157 = vmatprep.subr.mxu0 0.0
  %1158 = vmatpush1.msra.mxu0 0.0
  %1159 = vmatprep.subr.mxu0 0.0
  %1160 = vmatpush1.msra.mxu0 0.0
  %1161 = vmatprep.subr.mxu0 0.0
  %1162 = vmatpush1.msra.mxu0 0.0
  %1163 = vmatprep.subr.mxu0 0.0
  %1164 = vmatpush1.msra.mxu0 0.0
  %1165 = vmatprep.subr.mxu0 0.0
  %1166 = vmatpush1.msra.mxu0 0.0
  %1167 = vmatprep.subr.mxu0 0.0
  %1168 = vmatpush1.msra.mxu0 0.0
  %1169 = vmatprep.subr.mxu0 0.0
  %1170 = vmatpush1.msra.mxu0 0.0
  %1171 = vmatprep.subr.mxu0 0.0
  %1172 = vmatpush1.msra.mxu0 0.0
  %1173 = vmatprep.subr.mxu0 0.0
  %1174 = vmatpush1.msra.mxu0 0.0
  %1175 = vmatprep.subr.mxu0 0.0
  %1176 = vmatpush1.msra.mxu0 0.0
  %1177 = vmatprep.subr.mxu0 0.0
  %1178 = vmatpush1.msra.mxu0 0.0
  %1179 = vmatprep.subr.mxu0 0.0
  %1180 = vmatpush1.msra.mxu0 0.0
  %1181 = vmatprep.subr.mxu0 0.0
  %1182 = vmatpush1.msra.mxu0 0.0
  %1183 = vmatprep.subr.mxu0 0.0
  %1184 = vmatpush1.msra.mxu0 0.0
  %1185 = vmatprep.subr.mxu0 0.0
  %1186 = vmatpush1.msra.mxu0 0.0
  %1187 = vmatprep.subr.mxu0 0.0
  %1188 = vmatpush1.msra.mxu0 0.0
  %1189 = vmatprep.subr.mxu0 0.0
  %1190 = vmatpush1.msra.mxu0 0.0
  %1191 = vmatprep.subr.mxu0 0.0
  %1192 = vmatpush1.msra.mxu0 0.0
  %1193 = vmatprep.subr.mxu0 0.0
  %1194 = vmatpush1.msra.mxu0 0.0
  %1195 = vmatprep.subr.mxu0 0.0
  %1196 = vmatpush1.msra.mxu0 0.0
  %1197 = vmatprep.subr.mxu0 0.0
  %1198 = vmatpush1.msra.mxu0 0.0
  %1199 = vmatprep.subr.mxu0 0.0
  %1200 = vmatpush1.msra.mxu0 0.0
  %1201 = vmatprep.mubr.f32.mxu0 0.0
  %1202 = vmatmul.mubr.f32.gmra.mrb[0].mxu0 %v1135
  %v1203 = vpop.f32.mrb[0].mxu0
  %v1204 = vadd.f32 0.0, %v1203
  %v1205 = vpop.f32.mrb[0].mxu0
  %1206 = vdwg.mxu0
  %v1208 = vsel %vm30, %v1121, 0
  %1210 = vmatprep.subr.mxu0 0.0
  %1211 = vmatpush1.msra.mxu0 %v1128
  %1212 = vmatprep.subr.mxu0 0.0
  %1213 = vmatpush1.msra.mxu0 0.0
  %1214 = vmatprep.subr.mxu0 0.0
  %1215 = vmatpush1.msra.mxu0 0.0
  %1216 = vmatprep.subr.mxu0 0.0
  %1217 = vmatpush1.msra.mxu0 0.0
  %1218 = vmatprep.subr.mxu0 0.0
  %1219 = vmatpush1.msra.mxu0 0.0
  %1220 = vmatprep.subr.mxu0 0.0
  %1221 = vmatpush1.msra.mxu0 0.0
  %1222 = vmatprep.subr.mxu0 0.0
  %1223 = vmatpush1.msra.mxu0 0.0
  %1224 = vmatprep.subr.mxu0 0.0
  %1225 = vmatpush1.msra.mxu0 0.0
  %1226 = vmatprep.subr.mxu0 0.0
  %1227 = vmatpush1.msra.mxu0 0.0
  %1228 = vmatprep.subr.mxu0 0.0
  %1229 = vmatpush1.msra.mxu0 0.0
  %1230 = vmatprep.subr.mxu0 0.0
  %1231 = vmatpush1.msra.mxu0 0.0
  %1232 = vmatprep.subr.mxu0 0.0
  %1233 = vmatpush1.msra.mxu0 0.0
  %1234 = vmatprep.subr.mxu0 0.0
  %1235 = vmatpush1.msra.mxu0 0.0
  %1236 = vmatprep.subr.mxu0 0.0
  %1237 = vmatpush1.msra.mxu0 0.0
  %1238 = vmatprep.subr.mxu0 0.0
  %1239 = vmatpush1.msra.mxu0 0.0
  %1240 = vmatprep.subr.mxu0 0.0
  %1241 = vmatpush1.msra.mxu0 0.0
  %1242 = vmatprep.subr.mxu0 0.0
  %1243 = vmatpush1.msra.mxu0 0.0
  %1244 = vmatprep.subr.mxu0 0.0
  %1245 = vmatpush1.msra.mxu0 0.0
  %1246 = vmatprep.subr.mxu0 0.0
  %1247 = vmatpush1.msra.mxu0 0.0
  %1248 = vmatprep.subr.mxu0 0.0
  %1249 = vmatpush1.msra.mxu0 0.0
  %1250 = vmatprep.subr.mxu0 0.0
  %1251 = vmatpush1.msra.mxu0 0.0
  %1252 = vmatprep.subr.mxu0 0.0
  %1253 = vmatpush1.msra.mxu0 0.0
  %1254 = vmatprep.subr.mxu0 0.0
  %1255 = vmatpush1.msra.mxu0 0.0
  %1256 = vmatprep.subr.mxu0 0.0
  %1257 = vmatpush1.msra.mxu0 0.0
  %1258 = vmatprep.subr.mxu0 0.0
  %1259 = vmatpush1.msra.mxu0 0.0
  %1260 = vmatprep.subr.mxu0 0.0
  %1261 = vmatpush1.msra.mxu0 0.0
  %1262 = vmatprep.subr.mxu0 0.0
  %1263 = vmatpush1.msra.mxu0 0.0
  %1264 = vmatprep.subr.mxu0 0.0
  %1265 = vmatpush1.msra.mxu0 0.0
  %1266 = vmatprep.subr.mxu0 0.0
  %1267 = vmatpush1.msra.mxu0 0.0
  %1268 = vmatprep.subr.mxu0 0.0
  %1269 = vmatpush1.msra.mxu0 0.0
  %1270 = vmatprep.subr.mxu0 0.0
  %1271 = vmatpush1.msra.mxu0 0.0
  %1272 = vmatprep.subr.mxu0 0.0
  %1273 = vmatpush1.msra.mxu0 0.0
  %1274 = vmatprep.mubr.f32.mxu0 0.0
  %1275 = vmatmul.mubr.f32.gmra.mrb[0].mxu0 %v1208
  %v1276 = vpop.f32.mrb[0].mxu0
  %v1277 = vadd.f32 0.0, %v1276
  %v1278 = vpop.f32.mrb[0].mxu0
  %1279 = vdwg.mxu0
  %v1281 = vsel %vm30, %v1122, 0
  %1283 = vmatprep.subr.mxu0 0.0
  %1284 = vmatpush1.msra.mxu0 %v1129
  %1285 = vmatprep.subr.mxu0 0.0
  %1286 = vmatpush1.msra.mxu0 0.0
  %1287 = vmatprep.subr.mxu0 0.0
  %1288 = vmatpush1.msra.mxu0 0.0
  %1289 = vmatprep.subr.mxu0 0.0
  %1290 = vmatpush1.msra.mxu0 0.0
  %1291 = vmatprep.subr.mxu0 0.0
  %1292 = vmatpush1.msra.mxu0 0.0
  %1293 = vmatprep.subr.mxu0 0.0
  %1294 = vmatpush1.msra.mxu0 0.0
  %1295 = vmatprep.subr.mxu0 0.0
  %1296 = vmatpush1.msra.mxu0 0.0
  %1297 = vmatprep.subr.mxu0 0.0
  %1298 = vmatpush1.msra.mxu0 0.0
  %1299 = vmatprep.subr.mxu0 0.0
  %1300 = vmatpush1.msra.mxu0 0.0
  %1301 = vmatprep.subr.mxu0 0.0
  %1302 = vmatpush1.msra.mxu0 0.0
  %1303 = vmatprep.subr.mxu0 0.0
  %1304 = vmatpush1.msra.mxu0 0.0
  %1305 = vmatprep.subr.mxu0 0.0
  %1306 = vmatpush1.msra.mxu0 0.0
  %1307 = vmatprep.subr.mxu0 0.0
  %1308 = vmatpush1.msra.mxu0 0.0
  %1309 = vmatprep.subr.mxu0 0.0
  %1310 = vmatpush1.msra.mxu0 0.0
  %1311 = vmatprep.subr.mxu0 0.0
  %1312 = vmatpush1.msra.mxu0 0.0
  %1313 = vmatprep.subr.mxu0 0.0
  %1314 = vmatpush1.msra.mxu0 0.0
  %1315 = vmatprep.subr.mxu0 0.0
  %1316 = vmatpush1.msra.mxu0 0.0
  %1317 = vmatprep.subr.mxu0 0.0
  %1318 = vmatpush1.msra.mxu0 0.0
  %1319 = vmatprep.subr.mxu0 0.0
  %1320 = vmatpush1.msra.mxu0 0.0
  %1321 = vmatprep.subr.mxu0 0.0
  %1322 = vmatpush1.msra.mxu0 0.0
  %1323 = vmatprep.subr.mxu0 0.0
  %1324 = vmatpush1.msra.mxu0 0.0
  %1325 = vmatprep.subr.mxu0 0.0
  %1326 = vmatpush1.msra.mxu0 0.0
  %1327 = vmatprep.subr.mxu0 0.0
  %1328 = vmatpush1.msra.mxu0 0.0
  %1329 = vmatprep.subr.mxu0 0.0
  %1330 = vmatpush1.msra.mxu0 0.0
  %1331 = vmatprep.subr.mxu0 0.0
  %1332 = vmatpush1.msra.mxu0 0.0
  %1333 = vmatprep.subr.mxu0 0.0
  %1334 = vmatpush1.msra.mxu0 0.0
  %1335 = vmatprep.subr.mxu0 0.0
  %1336 = vmatpush1.msra.mxu0 0.0
  %1337 = vmatprep.subr.mxu0 0.0
  %1338 = vmatpush1.msra.mxu0 0.0
  %1339 = vmatprep.subr.mxu0 0.0
  %1340 = vmatpush1.msra.mxu0 0.0
  %1341 = vmatprep.subr.mxu0 0.0
  %1342 = vmatpush1.msra.mxu0 0.0
  %1343 = vmatprep.subr.mxu0 0.0
  %1344 = vmatpush1.msra.mxu0 0.0
  %1345 = vmatprep.subr.mxu0 0.0
  %1346 = vmatpush1.msra.mxu0 0.0
  %1347 = vmatprep.mubr.f32.mxu0 0.0
  %1348 = vmatmul.mubr.f32.gmra.mrb[0].mxu0 %v1281
  %v1349 = vpop.f32.mrb[0].mxu0
  %v1350 = vadd.f32 0.0, %v1349
  %v1351 = vpop.f32.mrb[0].mxu0
  %1352 = vdwg.mxu0
  %v1354 = vsel %vm30, %v1123, 0
  %1356 = vmatprep.subr.mxu0 0.0
  %1357 = vmatpush1.msra.mxu0 %v1130
  %1358 = vmatprep.subr.mxu0 0.0
  %1359 = vmatpush1.msra.mxu0 0.0
  %1360 = vmatprep.subr.mxu0 0.0
  %1361 = vmatpush1.msra.mxu0 0.0
  %1362 = vmatprep.subr.mxu0 0.0
  %1363 = vmatpush1.msra.mxu0 0.0
  %1364 = vmatprep.subr.mxu0 0.0
  %1365 = vmatpush1.msra.mxu0 0.0
  %1366 = vmatprep.subr.mxu0 0.0
  %1367 = vmatpush1.msra.mxu0 0.0
  %1368 = vmatprep.subr.mxu0 0.0
  %1369 = vmatpush1.msra.mxu0 0.0
  %1370 = vmatprep.subr.mxu0 0.0
  %1371 = vmatpush1.msra.mxu0 0.0
  %1372 = vmatprep.subr.mxu0 0.0
  %1373 = vmatpush1.msra.mxu0 0.0
  %1374 = vmatprep.subr.mxu0 0.0
  %1375 = vmatpush1.msra.mxu0 0.0
  %1376 = vmatprep.subr.mxu0 0.0
  %1377 = vmatpush1.msra.mxu0 0.0
  %1378 = vmatprep.subr.mxu0 0.0
  %1379 = vmatpush1.msra.mxu0 0.0
  %1380 = vmatprep.subr.mxu0 0.0
  %1381 = vmatpush1.msra.mxu0 0.0
  %1382 = vmatprep.subr.mxu0 0.0
  %1383 = vmatpush1.msra.mxu0 0.0
  %1384 = vmatprep.subr.mxu0 0.0
  %1385 = vmatpush1.msra.mxu0 0.0
  %1386 = vmatprep.subr.mxu0 0.0
  %1387 = vmatpush1.msra.mxu0 0.0
  %1388 = vmatprep.subr.mxu0 0.0
  %1389 = vmatpush1.msra.mxu0 0.0
  %1390 = vmatprep.subr.mxu0 0.0
  %1391 = vmatpush1.msra.mxu0 0.0
  %1392 = vmatprep.subr.mxu0 0.0
  %1393 = vmatpush1.msra.mxu0 0.0
  %1394 = vmatprep.subr.mxu0 0.0
  %1395 = vmatpush1.msra.mxu0 0.0
  %1396 = vmatprep.subr.mxu0 0.0
  %1397 = vmatpush1.msra.mxu0 0.0
  %1398 = vmatprep.subr.mxu0 0.0
  %1399 = vmatpush1.msra.mxu0 0.0
  %1400 = vmatprep.subr.mxu0 0.0
  %1401 = vmatpush1.msra.mxu0 0.0
  %1402 = vmatprep.subr.mxu0 0.0
  %1403 = vmatpush1.msra.mxu0 0.0
  %1404 = vmatprep.subr.mxu0 0.0
  %1405 = vmatpush1.msra.mxu0 0.0
  %1406 = vmatprep.subr.mxu0 0.0
  %1407 = vmatpush1.msra.mxu0 0.0
  %1408 = vmatprep.subr.mxu0 0.0
  %1409 = vmatpush1.msra.mxu0 0.0
  %1410 = vmatprep.subr.mxu0 0.0
  %1411 = vmatpush1.msra.mxu0 0.0
  %1412 = vmatprep.subr.mxu0 0.0
  %1413 = vmatpush1.msra.mxu0 0.0
  %1414 = vmatprep.subr.mxu0 0.0
  %1415 = vmatpush1.msra.mxu0 0.0
  %1416 = vmatprep.subr.mxu0 0.0
  %1417 = vmatpush1.msra.mxu0 0.0
  %1418 = vmatprep.subr.mxu0 0.0
  %1419 = vmatpush1.msra.mxu0 0.0
  %1420 = vmatprep.mubr.f32.mxu0 0.0
  %1421 = vmatmul.mubr.f32.gmra.mrb[0].mxu0 %v1354
  %v1422 = vpop.f32.mrb[0].mxu0
  %v1423 = vadd.f32 0.0, %v1422
  %v1424 = vpop.f32.mrb[0].mxu0
  %1425 = vdwg.mxu0
  %v1427 = vsel %vm30, %v1124, 0
  %1429 = vmatprep.subr.mxu0 0.0
  %1430 = vmatpush1.msra.mxu0 %v1131
  %1431 = vmatprep.subr.mxu0 0.0
  %1432 = vmatpush1.msra.mxu0 0.0
  %1433 = vmatprep.subr.mxu0 0.0
  %1434 = vmatpush1.msra.mxu0 0.0
  %1435 = vmatprep.subr.mxu0 0.0
  %1436 = vmatpush1.msra.mxu0 0.0
  %1437 = vmatprep.subr.mxu0 0.0
  %1438 = vmatpush1.msra.mxu0 0.0
  %1439 = vmatprep.subr.mxu0 0.0
  %1440 = vmatpush1.msra.mxu0 0.0
  %1441 = vmatprep.subr.mxu0 0.0
  %1442 = vmatpush1.msra.mxu0 0.0
  %1443 = vmatprep.subr.mxu0 0.0
  %1444 = vmatpush1.msra.mxu0 0.0
  %1445 = vmatprep.subr.mxu0 0.0
  %1446 = vmatpush1.msra.mxu0 0.0
  %1447 = vmatprep.subr.mxu0 0.0
  %1448 = vmatpush1.msra.mxu0 0.0
  %1449 = vmatprep.subr.mxu0 0.0
  %1450 = vmatpush1.msra.mxu0 0.0
  %1451 = vmatprep.subr.mxu0 0.0
  %1452 = vmatpush1.msra.mxu0 0.0
  %1453 = vmatprep.subr.mxu0 0.0
  %1454 = vmatpush1.msra.mxu0 0.0
  %1455 = vmatprep.subr.mxu0 0.0
  %1456 = vmatpush1.msra.mxu0 0.0
  %1457 = vmatprep.subr.mxu0 0.0
  %1458 = vmatpush1.msra.mxu0 0.0
  %1459 = vmatprep.subr.mxu0 0.0
  %1460 = vmatpush1.msra.mxu0 0.0
  %1461 = vmatprep.subr.mxu0 0.0
  %1462 = vmatpush1.msra.mxu0 0.0
  %1463 = vmatprep.subr.mxu0 0.0
  %1464 = vmatpush1.msra.mxu0 0.0
  %1465 = vmatprep.subr.mxu0 0.0
  %1466 = vmatpush1.msra.mxu0 0.0
  %1467 = vmatprep.subr.mxu0 0.0
  %1468 = vmatpush1.msra.mxu0 0.0
  %1469 = vmatprep.subr.mxu0 0.0
  %1470 = vmatpush1.msra.mxu0 0.0
  %1471 = vmatprep.subr.mxu0 0.0
  %1472 = vmatpush1.msra.mxu0 0.0
  %1473 = vmatprep.subr.mxu0 0.0
  %1474 = vmatpush1.msra.mxu0 0.0
  %1475 = vmatprep.subr.mxu0 0.0
  %1476 = vmatpush1.msra.mxu0 0.0
  %1477 = vmatprep.subr.mxu0 0.0
  %1478 = vmatpush1.msra.mxu0 0.0
  %1479 = vmatprep.subr.mxu0 0.0
  %1480 = vmatpush1.msra.mxu0 0.0
  %1481 = vmatprep.subr.mxu0 0.0
  %1482 = vmatpush1.msra.mxu0 0.0
  %1483 = vmatprep.subr.mxu0 0.0
  %1484 = vmatpush1.msra.mxu0 0.0
  %1485 = vmatprep.subr.mxu0 0.0
  %1486 = vmatpush1.msra.mxu0 0.0
  %1487 = vmatprep.subr.mxu0 0.0
  %1488 = vmatpush1.msra.mxu0 0.0
  %1489 = vmatprep.subr.mxu0 0.0
  %1490 = vmatpush1.msra.mxu0 0.0
  %1491 = vmatprep.subr.mxu0 0.0
  %1492 = vmatpush1.msra.mxu0 0.0
  %1493 = vmatprep.mubr.f32.mxu0 0.0
  %1494 = vmatmul.mubr.f32.gmra.mrb[0].mxu0 %v1427
  %v1495 = vpop.f32.mrb[0].mxu0
  %v1496 = vadd.f32 0.0, %v1495
  %v1497 = vpop.f32.mrb[0].mxu0
  %1498 = vdwg.mxu0
  %v1500 = vsel %vm30, %v1125, 0
  %1502 = vmatprep.subr.mxu0 0.0
  %1503 = vmatpush1.msra.mxu0 %v1132
  %1504 = vmatprep.subr.mxu0 0.0
  %1505 = vmatpush1.msra.mxu0 0.0
  %1506 = vmatprep.subr.mxu0 0.0
  %1507 = vmatpush1.msra.mxu0 0.0
  %1508 = vmatprep.subr.mxu0 0.0
  %1509 = vmatpush1.msra.mxu0 0.0
  %1510 = vmatprep.subr.mxu0 0.0
  %1511 = vmatpush1.msra.mxu0 0.0
  %1512 = vmatprep.subr.mxu0 0.0
  %1513 = vmatpush1.msra.mxu0 0.0
  %1514 = vmatprep.subr.mxu0 0.0
  %1515 = vmatpush1.msra.mxu0 0.0
  %1516 = vmatprep.subr.mxu0 0.0
  %1517 = vmatpush1.msra.mxu0 0.0
  %1518 = vmatprep.subr.mxu0 0.0
  %1519 = vmatpush1.msra.mxu0 0.0
  %1520 = vmatprep.subr.mxu0 0.0
  %1521 = vmatpush1.msra.mxu0 0.0
  %1522 = vmatprep.subr.mxu0 0.0
  %1523 = vmatpush1.msra.mxu0 0.0
  %1524 = vmatprep.subr.mxu0 0.0
  %1525 = vmatpush1.msra.mxu0 0.0
  %1526 = vmatprep.subr.mxu0 0.0
  %1527 = vmatpush1.msra.mxu0 0.0
  %1528 = vmatprep.subr.mxu0 0.0
  %1529 = vmatpush1.msra.mxu0 0.0
  %1530 = vmatprep.subr.mxu0 0.0
  %1531 = vmatpush1.msra.mxu0 0.0
  %1532 = vmatprep.subr.mxu0 0.0
  %1533 = vmatpush1.msra.mxu0 0.0
  %1534 = vmatprep.subr.mxu0 0.0
  %1535 = vmatpush1.msra.mxu0 0.0
  %1536 = vmatprep.subr.mxu0 0.0
  %1537 = vmatpush1.msra.mxu0 0.0
  %1538 = vmatprep.subr.mxu0 0.0
  %1539 = vmatpush1.msra.mxu0 0.0
  %1540 = vmatprep.subr.mxu0 0.0
  %1541 = vmatpush1.msra.mxu0 0.0
  %1542 = vmatprep.subr.mxu0 0.0
  %1543 = vmatpush1.msra.mxu0 0.0
  %1544 = vmatprep.subr.mxu0 0.0
  %1545 = vmatpush1.msra.mxu0 0.0
  %1546 = vmatprep.subr.mxu0 0.0
  %1547 = vmatpush1.msra.mxu0 0.0
  %1548 = vmatprep.subr.mxu0 0.0
  %1549 = vmatpush1.msra.mxu0 0.0
  %1550 = vmatprep.subr.mxu0 0.0
  %1551 = vmatpush1.msra.mxu0 0.0
  %1552 = vmatprep.subr.mxu0 0.0
  %1553 = vmatpush1.msra.mxu0 0.0
  %1554 = vmatprep.subr.mxu0 0.0
  %1555 = vmatpush1.msra.mxu0 0.0
  %1556 = vmatprep.subr.mxu0 0.0
  %1557 = vmatpush1.msra.mxu0 0.0
  %1558 = vmatprep.subr.mxu0 0.0
  %1559 = vmatpush1.msra.mxu0 0.0
  %1560 = vmatprep.subr.mxu0 0.0
  %1561 = vmatpush1.msra.mxu0 0.0
  %1562 = vmatprep.subr.mxu0 0.0
  %1563 = vmatpush1.msra.mxu0 0.0
  %1564 = vmatprep.subr.mxu0 0.0
  %1565 = vmatpush1.msra.mxu0 0.0
  %1566 = vmatprep.mubr.f32.mxu0 0.0
  %1567 = vmatmul.mubr.f32.gmra.mrb[0].mxu0 %v1500
  %v1568 = vpop.f32.mrb[0].mxu0
  %v1569 = vadd.f32 0.0, %v1568
  %v1570 = vpop.f32.mrb[0].mxu0
  %1571 = vdwg.mxu0
  %v1573 = vsel %vm30, %v1126, 0
  %1575 = vmatprep.subr.mxu0 0.0
  %1576 = vmatpush1.msra.mxu0 %v1133
  %1577 = vmatprep.subr.mxu0 0.0
  %1578 = vmatpush1.msra.mxu0 0.0
  %1579 = vmatprep.subr.mxu0 0.0
  %1580 = vmatpush1.msra.mxu0 0.0
  %1581 = vmatprep.subr.mxu0 0.0
  %1582 = vmatpush1.msra.mxu0 0.0
  %1583 = vmatprep.subr.mxu0 0.0
  %1584 = vmatpush1.msra.mxu0 0.0
  %1585 = vmatprep.subr.mxu0 0.0
  %1586 = vmatpush1.msra.mxu0 0.0
  %1587 = vmatprep.subr.mxu0 0.0
  %1588 = vmatpush1.msra.mxu0 0.0
  %1589 = vmatprep.subr.mxu0 0.0
  %1590 = vmatpush1.msra.mxu0 0.0
  %1591 = vmatprep.subr.mxu0 0.0
  %1592 = vmatpush1.msra.mxu0 0.0
  %1593 = vmatprep.subr.mxu0 0.0
  %1594 = vmatpush1.msra.mxu0 0.0
  %1595 = vmatprep.subr.mxu0 0.0
  %1596 = vmatpush1.msra.mxu0 0.0
  %1597 = vmatprep.subr.mxu0 0.0
  %1598 = vmatpush1.msra.mxu0 0.0
  %1599 = vmatprep.subr.mxu0 0.0
  %1600 = vmatpush1.msra.mxu0 0.0
  %1601 = vmatprep.subr.mxu0 0.0
  %1602 = vmatpush1.msra.mxu0 0.0
  %1603 = vmatprep.subr.mxu0 0.0
  %1604 = vmatpush1.msra.mxu0 0.0
  %1605 = vmatprep.subr.mxu0 0.0
  %1606 = vmatpush1.msra.mxu0 0.0
  %1607 = vmatprep.subr.mxu0 0.0
  %1608 = vmatpush1.msra.mxu0 0.0
  %1609 = vmatprep.subr.mxu0 0.0
  %1610 = vmatpush1.msra.mxu0 0.0
  %1611 = vmatprep.subr.mxu0 0.0
  %1612 = vmatpush1.msra.mxu0 0.0
  %1613 = vmatprep.subr.mxu0 0.0
  %1614 = vmatpush1.msra.mxu0 0.0
  %1615 = vmatprep.subr.mxu0 0.0
  %1616 = vmatpush1.msra.mxu0 0.0
  %1617 = vmatprep.subr.mxu0 0.0
  %1618 = vmatpush1.msra.mxu0 0.0
  %1619 = vmatprep.subr.mxu0 0.0
  %1620 = vmatpush1.msra.mxu0 0.0
  %1621 = vmatprep.subr.mxu0 0.0
  %1622 = vmatpush1.msra.mxu0 0.0
  %1623 = vmatprep.subr.mxu0 0.0
  %1624 = vmatpush1.msra.mxu0 0.0
  %1625 = vmatprep.subr.mxu0 0.0
  %1626 = vmatpush1.msra.mxu0 0.0
  %1627 = vmatprep.subr.mxu0 0.0
  %1628 = vmatpush1.msra.mxu0 0.0
  %1629 = vmatprep.subr.mxu0 0.0
  %1630 = vmatpush1.msra.mxu0 0.0
  %1631 = vmatprep.subr.mxu0 0.0
  %1632 = vmatpush1.msra.mxu0 0.0
  %1633 = vmatprep.subr.mxu0 0.0
  %1634 = vmatpush1.msra.mxu0 0.0
  %1635 = vmatprep.subr.mxu0 0.0
  %1636 = vmatpush1.msra.mxu0 0.0
  %1637 = vmatprep.subr.mxu0 0.0
  %1638 = vmatpush1.msra.mxu0 0.0
  %1639 = vmatprep.mubr.f32.mxu0 0.0
  %1640 = vmatmul.mubr.f32.gmra.mrb[0].mxu0 %v1573
  %v1641 = vpop.f32.mrb[0].mxu0
  %v1642 = vadd.f32 0.0, %v1641
  %v1643 = vpop.f32.mrb[0].mxu0
  %1644 = vdwg.mxu0
  %1645 = vst [vmem:[#allocation2] sm:$0xff] %v1204
  %1646 = vst [vmem:[#allocation2 + $0x8] sm:$0xff] %v1277
  %1647 = vst [vmem:[#allocation2 + $0x10] sm:$0xff] %v1350
  %1648 = vst [vmem:[#allocation2 + $0x18] sm:$0xff] %v1423
  %1649 = vst [vmem:[#allocation2 + $0x20] sm:$0xff] %v1496
  %1650 = vst [vmem:[#allocation2 + $0x28] sm:$0xff] %v1569
  %1651 = vst [vmem:[#allocation2 + $0x30] sm:$0xff] %v1642
  %s1652 = scalar_lea.vmem %s6, 56
  %1653 = vst [vmem:[%s1652] sm:$0xff] %v575
  %s1654 = scalar_lea.vmem %s2, 48
  %v1655 = vld [vmem:[%s1654] sm:$0xff]
  %v1656 = vld [vmem:[%s499] sm:$0xff]
  %v1658 = vsel %vm30, %v1655, 0
  %1660 = vmatprep.subr.mxu0 0.0
  %1661 = vmatpush1.msra.mxu0 %v575
  %1662 = vmatprep.subr.mxu0 0.0
  %1663 = vmatpush1.msra.mxu0 0.0
  %1664 = vmatprep.subr.mxu0 0.0
  %1665 = vmatpush1.msra.mxu0 0.0
  %1666 = vmatprep.subr.mxu0 0.0
  %1667 = vmatpush1.msra.mxu0 0.0
  %1668 = vmatprep.subr.mxu0 0.0
  %1669 = vmatpush1.msra.mxu0 0.0
  %1670 = vmatprep.subr.mxu0 0.0
  %1671 = vmatpush1.msra.mxu0 0.0
  %1672 = vmatprep.subr.mxu0 0.0
  %1673 = vmatpush1.msra.mxu0 0.0
  %1674 = vmatprep.subr.mxu0 0.0
  %1675 = vmatpush1.msra.mxu0 0.0
  %1676 = vmatprep.subr.mxu0 0.0
  %1677 = vmatpush1.msra.mxu0 0.0
  %1678 = vmatprep.subr.mxu0 0.0
  %1679 = vmatpush1.msra.mxu0 0.0
  %1680 = vmatprep.subr.mxu0 0.0
  %1681 = vmatpush1.msra.mxu0 0.0
  %1682 = vmatprep.subr.mxu0 0.0
  %1683 = vmatpush1.msra.mxu0 0.0
  %1684 = vmatprep.subr.mxu0 0.0
  %1685 = vmatpush1.msra.mxu0 0.0
  %1686 = vmatprep.subr.mxu0 0.0
  %1687 = vmatpush1.msra.mxu0 0.0
  %1688 = vmatprep.subr.mxu0 0.0
  %1689 = vmatpush1.msra.mxu0 0.0
  %1690 = vmatprep.subr.mxu0 0.0
  %1691 = vmatpush1.msra.mxu0 0.0
  %1692 = vmatprep.subr.mxu0 0.0
  %1693 = vmatpush1.msra.mxu0 0.0
  %1694 = vmatprep.subr.mxu0 0.0
  %1695 = vmatpush1.msra.mxu0 0.0
  %1696 = vmatprep.subr.mxu0 0.0
  %1697 = vmatpush1.msra.mxu0 0.0
  %1698 = vmatprep.subr.mxu0 0.0
  %1699 = vmatpush1.msra.mxu0 0.0
  %1700 = vmatprep.subr.mxu0 0.0
  %1701 = vmatpush1.msra.mxu0 0.0
  %1702 = vmatprep.subr.mxu0 0.0
  %1703 = vmatpush1.msra.mxu0 0.0
  %1704 = vmatprep.subr.mxu0 0.0
  %1705 = vmatpush1.msra.mxu0 0.0
  %1706 = vmatprep.subr.mxu0 0.0
  %1707 = vmatpush1.msra.mxu0 0.0
  %1708 = vmatprep.subr.mxu0 0.0
  %1709 = vmatpush1.msra.mxu0 0.0
  %1710 = vmatprep.subr.mxu0 0.0
  %1711 = vmatpush1.msra.mxu0 0.0
  %1712 = vmatprep.subr.mxu0 0.0
  %1713 = vmatpush1.msra.mxu0 0.0
  %1714 = vmatprep.subr.mxu0 0.0
  %1715 = vmatpush1.msra.mxu0 0.0
  %1716 = vmatprep.subr.mxu0 0.0
  %1717 = vmatpush1.msra.mxu0 0.0
  %1718 = vmatprep.subr.mxu0 0.0
  %1719 = vmatpush1.msra.mxu0 0.0
  %1720 = vmatprep.subr.mxu0 0.0
  %1721 = vmatpush1.msra.mxu0 0.0
  %1722 = vmatprep.subr.mxu0 0.0
  %1723 = vmatpush1.msra.mxu0 0.0
  %1724 = vmatprep.mubr.f32.mxu0 0.0
  %1725 = vmatmul.mubr.f32.gmra.mrb[0].mxu0 %v1658
  %v1726 = vpop.f32.mrb[0].mxu0
  %v1727 = vadd.f32 %v1656, %v1726
  %v1728 = vpop.f32.mrb[0].mxu0
  %1729 = vdwg.mxu0
  %s1730 = scalar_lea.vmem %s6, 48
  %1731 = vst [vmem:[%s1730] sm:$0xff] %v1727
  %s1732 = scalar_lea.vmem %s2, 40
  %v1733 = vld [vmem:[%s1732] sm:$0xff]
  %v1734 = vld [vmem:[%s420] sm:$0xff]
  %v1736 = vsel %vm30, %v1733, 0
  %1738 = vmatprep.subr.mxu0 0.0
  %1739 = vmatpush1.msra.mxu0 %v1727
  %1740 = vmatprep.subr.mxu0 0.0
  %1741 = vmatpush1.msra.mxu0 0.0
  %1742 = vmatprep.subr.mxu0 0.0
  %1743 = vmatpush1.msra.mxu0 0.0
  %1744 = vmatprep.subr.mxu0 0.0
  %1745 = vmatpush1.msra.mxu0 0.0
  %1746 = vmatprep.subr.mxu0 0.0
  %1747 = vmatpush1.msra.mxu0 0.0
  %1748 = vmatprep.subr.mxu0 0.0
  %1749 = vmatpush1.msra.mxu0 0.0
  %1750 = vmatprep.subr.mxu0 0.0
  %1751 = vmatpush1.msra.mxu0 0.0
  %1752 = vmatprep.subr.mxu0 0.0
  %1753 = vmatpush1.msra.mxu0 0.0
  %1754 = vmatprep.subr.mxu0 0.0
  %1755 = vmatpush1.msra.mxu0 0.0
  %1756 = vmatprep.subr.mxu0 0.0
  %1757 = vmatpush1.msra.mxu0 0.0
  %1758 = vmatprep.subr.mxu0 0.0
  %1759 = vmatpush1.msra.mxu0 0.0
  %1760 = vmatprep.subr.mxu0 0.0
  %1761 = vmatpush1.msra.mxu0 0.0
  %1762 = vmatprep.subr.mxu0 0.0
  %1763 = vmatpush1.msra.mxu0 0.0
  %1764 = vmatprep.subr.mxu0 0.0
  %1765 = vmatpush1.msra.mxu0 0.0
  %1766 = vmatprep.subr.mxu0 0.0
  %1767 = vmatpush1.msra.mxu0 0.0
  %1768 = vmatprep.subr.mxu0 0.0
  %1769 = vmatpush1.msra.mxu0 0.0
  %1770 = vmatprep.subr.mxu0 0.0
  %1771 = vmatpush1.msra.mxu0 0.0
  %1772 = vmatprep.subr.mxu0 0.0
  %1773 = vmatpush1.msra.mxu0 0.0
  %1774 = vmatprep.subr.mxu0 0.0
  %1775 = vmatpush1.msra.mxu0 0.0
  %1776 = vmatprep.subr.mxu0 0.0
  %1777 = vmatpush1.msra.mxu0 0.0
  %1778 = vmatprep.subr.mxu0 0.0
  %1779 = vmatpush1.msra.mxu0 0.0
  %1780 = vmatprep.subr.mxu0 0.0
  %1781 = vmatpush1.msra.mxu0 0.0
  %1782 = vmatprep.subr.mxu0 0.0
  %1783 = vmatpush1.msra.mxu0 0.0
  %1784 = vmatprep.subr.mxu0 0.0
  %1785 = vmatpush1.msra.mxu0 0.0
  %1786 = vmatprep.subr.mxu0 0.0
  %1787 = vmatpush1.msra.mxu0 0.0
  %1788 = vmatprep.subr.mxu0 0.0
  %1789 = vmatpush1.msra.mxu0 0.0
  %1790 = vmatprep.subr.mxu0 0.0
  %1791 = vmatpush1.msra.mxu0 0.0
  %1792 = vmatprep.subr.mxu0 0.0
  %1793 = vmatpush1.msra.mxu0 0.0
  %1794 = vmatprep.subr.mxu0 0.0
  %1795 = vmatpush1.msra.mxu0 0.0
  %1796 = vmatprep.subr.mxu0 0.0
  %1797 = vmatpush1.msra.mxu0 0.0
  %1798 = vmatprep.subr.mxu0 0.0
  %1799 = vmatpush1.msra.mxu0 0.0
  %1800 = vmatprep.subr.mxu0 0.0
  %1801 = vmatpush1.msra.mxu0 0.0
  %1802 = vmatprep.mubr.f32.mxu0 0.0
  %1803 = vmatmul.mubr.f32.gmra.mrb[0].mxu0 %v1736
  %v1804 = vpop.f32.mrb[0].mxu0
  %v1805 = vadd.f32 %v1734, %v1804
  %v1806 = vpop.f32.mrb[0].mxu0
  %1807 = vdwg.mxu0
  %s1808 = scalar_lea.vmem %s6, 40
  %1809 = vst [vmem:[%s1808] sm:$0xff] %v1805
  %s1810 = scalar_lea.vmem %s2, 32
  %v1811 = vld [vmem:[%s1810] sm:$0xff]
  %v1812 = vld [vmem:[%s341] sm:$0xff]
  %v1814 = vsel %vm30, %v1811, 0
  %1816 = vmatprep.subr.mxu0 0.0
  %1817 = vmatpush1.msra.mxu0 %v1805
  %1818 = vmatprep.subr.mxu0 0.0
  %1819 = vmatpush1.msra.mxu0 0.0
  %1820 = vmatprep.subr.mxu0 0.0
  %1821 = vmatpush1.msra.mxu0 0.0
  %1822 = vmatprep.subr.mxu0 0.0
  %1823 = vmatpush1.msra.mxu0 0.0
  %1824 = vmatprep.subr.mxu0 0.0
  %1825 = vmatpush1.msra.mxu0 0.0
  %1826 = vmatprep.subr.mxu0 0.0
  %1827 = vmatpush1.msra.mxu0 0.0
  %1828 = vmatprep.subr.mxu0 0.0
  %1829 = vmatpush1.msra.mxu0 0.0
  %1830 = vmatprep.subr.mxu0 0.0
  %1831 = vmatpush1.msra.mxu0 0.0
  %1832 = vmatprep.subr.mxu0 0.0
  %1833 = vmatpush1.msra.mxu0 0.0
  %1834 = vmatprep.subr.mxu0 0.0
  %1835 = vmatpush1.msra.mxu0 0.0
  %1836 = vmatprep.subr.mxu0 0.0
  %1837 = vmatpush1.msra.mxu0 0.0
  %1838 = vmatprep.subr.mxu0 0.0
  %1839 = vmatpush1.msra.mxu0 0.0
  %1840 = vmatprep.subr.mxu0 0.0
  %1841 = vmatpush1.msra.mxu0 0.0
  %1842 = vmatprep.subr.mxu0 0.0
  %1843 = vmatpush1.msra.mxu0 0.0
  %1844 = vmatprep.subr.mxu0 0.0
  %1845 = vmatpush1.msra.mxu0 0.0
  %1846 = vmatprep.subr.mxu0 0.0
  %1847 = vmatpush1.msra.mxu0 0.0
  %1848 = vmatprep.subr.mxu0 0.0
  %1849 = vmatpush1.msra.mxu0 0.0
  %1850 = vmatprep.subr.mxu0 0.0
  %1851 = vmatpush1.msra.mxu0 0.0
  %1852 = vmatprep.subr.mxu0 0.0
  %1853 = vmatpush1.msra.mxu0 0.0
  %1854 = vmatprep.subr.mxu0 0.0
  %1855 = vmatpush1.msra.mxu0 0.0
  %1856 = vmatprep.subr.mxu0 0.0
  %1857 = vmatpush1.msra.mxu0 0.0
  %1858 = vmatprep.subr.mxu0 0.0
  %1859 = vmatpush1.msra.mxu0 0.0
  %1860 = vmatprep.subr.mxu0 0.0
  %1861 = vmatpush1.msra.mxu0 0.0
  %1862 = vmatprep.subr.mxu0 0.0
  %1863 = vmatpush1.msra.mxu0 0.0
  %1864 = vmatprep.subr.mxu0 0.0
  %1865 = vmatpush1.msra.mxu0 0.0
  %1866 = vmatprep.subr.mxu0 0.0
  %1867 = vmatpush1.msra.mxu0 0.0
  %1868 = vmatprep.subr.mxu0 0.0
  %1869 = vmatpush1.msra.mxu0 0.0
  %1870 = vmatprep.subr.mxu0 0.0
  %1871 = vmatpush1.msra.mxu0 0.0
  %1872 = vmatprep.subr.mxu0 0.0
  %1873 = vmatpush1.msra.mxu0 0.0
  %1874 = vmatprep.subr.mxu0 0.0
  %1875 = vmatpush1.msra.mxu0 0.0
  %1876 = vmatprep.subr.mxu0 0.0
  %1877 = vmatpush1.msra.mxu0 0.0
  %1878 = vmatprep.subr.mxu0 0.0
  %1879 = vmatpush1.msra.mxu0 0.0
  %1880 = vmatprep.mubr.f32.mxu0 0.0
  %1881 = vmatmul.mubr.f32.gmra.mrb[0].mxu0 %v1814
  %v1882 = vpop.f32.mrb[0].mxu0
  %v1883 = vadd.f32 %v1812, %v1882
  %v1884 = vpop.f32.mrb[0].mxu0
  %1885 = vdwg.mxu0
  %s1886 = scalar_lea.vmem %s6, 32
  %1887 = vst [vmem:[%s1886] sm:$0xff] %v1883
  %s1888 = scalar_lea.vmem %s2, 24
  %v1889 = vld [vmem:[%s1888] sm:$0xff]
  %v1890 = vld [vmem:[%s262] sm:$0xff]
  %v1892 = vsel %vm30, %v1889, 0
  %1894 = vmatprep.subr.mxu0 0.0
  %1895 = vmatpush1.msra.mxu0 %v1883
  %1896 = vmatprep.subr.mxu0 0.0
  %1897 = vmatpush1.msra.mxu0 0.0
  %1898 = vmatprep.subr.mxu0 0.0
  %1899 = vmatpush1.msra.mxu0 0.0
  %1900 = vmatprep.subr.mxu0 0.0
  %1901 = vmatpush1.msra.mxu0 0.0
  %1902 = vmatprep.subr.mxu0 0.0
  %1903 = vmatpush1.msra.mxu0 0.0
  %1904 = vmatprep.subr.mxu0 0.0
  %1905 = vmatpush1.msra.mxu0 0.0
  %1906 = vmatprep.subr.mxu0 0.0
  %1907 = vmatpush1.msra.mxu0 0.0
  %1908 = vmatprep.subr.mxu0 0.0
  %1909 = vmatpush1.msra.mxu0 0.0
  %1910 = vmatprep.subr.mxu0 0.0
  %1911 = vmatpush1.msra.mxu0 0.0
  %1912 = vmatprep.subr.mxu0 0.0
  %1913 = vmatpush1.msra.mxu0 0.0
  %1914 = vmatprep.subr.mxu0 0.0
  %1915 = vmatpush1.msra.mxu0 0.0
  %1916 = vmatprep.subr.mxu0 0.0
  %1917 = vmatpush1.msra.mxu0 0.0
  %1918 = vmatprep.subr.mxu0 0.0
  %1919 = vmatpush1.msra.mxu0 0.0
  %1920 = vmatprep.subr.mxu0 0.0
  %1921 = vmatpush1.msra.mxu0 0.0
  %1922 = vmatprep.subr.mxu0 0.0
  %1923 = vmatpush1.msra.mxu0 0.0
  %1924 = vmatprep.subr.mxu0 0.0
  %1925 = vmatpush1.msra.mxu0 0.0
  %1926 = vmatprep.subr.mxu0 0.0
  %1927 = vmatpush1.msra.mxu0 0.0
  %1928 = vmatprep.subr.mxu0 0.0
  %1929 = vmatpush1.msra.mxu0 0.0
  %1930 = vmatprep.subr.mxu0 0.0
  %1931 = vmatpush1.msra.mxu0 0.0
  %1932 = vmatprep.subr.mxu0 0.0
  %1933 = vmatpush1.msra.mxu0 0.0
  %1934 = vmatprep.subr.mxu0 0.0
  %1935 = vmatpush1.msra.mxu0 0.0
  %1936 = vmatprep.subr.mxu0 0.0
  %1937 = vmatpush1.msra.mxu0 0.0
  %1938 = vmatprep.subr.mxu0 0.0
  %1939 = vmatpush1.msra.mxu0 0.0
  %1940 = vmatprep.subr.mxu0 0.0
  %1941 = vmatpush1.msra.mxu0 0.0
  %1942 = vmatprep.subr.mxu0 0.0
  %1943 = vmatpush1.msra.mxu0 0.0
  %1944 = vmatprep.subr.mxu0 0.0
  %1945 = vmatpush1.msra.mxu0 0.0
  %1946 = vmatprep.subr.mxu0 0.0
  %1947 = vmatpush1.msra.mxu0 0.0
  %1948 = vmatprep.subr.mxu0 0.0
  %1949 = vmatpush1.msra.mxu0 0.0
  %1950 = vmatprep.subr.mxu0 0.0
  %1951 = vmatpush1.msra.mxu0 0.0
  %1952 = vmatprep.subr.mxu0 0.0
  %1953 = vmatpush1.msra.mxu0 0.0
  %1954 = vmatprep.subr.mxu0 0.0
  %1955 = vmatpush1.msra.mxu0 0.0
  %1956 = vmatprep.subr.mxu0 0.0
  %1957 = vmatpush1.msra.mxu0 0.0
  %1958 = vmatprep.mubr.f32.mxu0 0.0
  %1959 = vmatmul.mubr.f32.gmra.mrb[0].mxu0 %v1892
  %v1960 = vpop.f32.mrb[0].mxu0
  %v1961 = vadd.f32 %v1890, %v1960
  %v1962 = vpop.f32.mrb[0].mxu0
  %1963 = vdwg.mxu0
  %s1964 = scalar_lea.vmem %s6, 24
  %1965 = vst [vmem:[%s1964] sm:$0xff] %v1961
  %s1966 = scalar_lea.vmem %s2, 16
  %v1967 = vld [vmem:[%s1966] sm:$0xff]
  %v1968 = vld [vmem:[%s183] sm:$0xff]
  %v1970 = vsel %vm30, %v1967, 0
  %1972 = vmatprep.subr.mxu0 0.0
  %1973 = vmatpush1.msra.mxu0 %v1961
  %1974 = vmatprep.subr.mxu0 0.0
  %1975 = vmatpush1.msra.mxu0 0.0
  %1976 = vmatprep.subr.mxu0 0.0
  %1977 = vmatpush1.msra.mxu0 0.0
  %1978 = vmatprep.subr.mxu0 0.0
  %1979 = vmatpush1.msra.mxu0 0.0
  %1980 = vmatprep.subr.mxu0 0.0
  %1981 = vmatpush1.msra.mxu0 0.0
  %1982 = vmatprep.subr.mxu0 0.0
  %1983 = vmatpush1.msra.mxu0 0.0
  %1984 = vmatprep.subr.mxu0 0.0
  %1985 = vmatpush1.msra.mxu0 0.0
  %1986 = vmatprep.subr.mxu0 0.0
  %1987 = vmatpush1.msra.mxu0 0.0
  %1988 = vmatprep.subr.mxu0 0.0
  %1989 = vmatpush1.msra.mxu0 0.0
  %1990 = vmatprep.subr.mxu0 0.0
  %1991 = vmatpush1.msra.mxu0 0.0
  %1992 = vmatprep.subr.mxu0 0.0
  %1993 = vmatpush1.msra.mxu0 0.0
  %1994 = vmatprep.subr.mxu0 0.0
  %1995 = vmatpush1.msra.mxu0 0.0
  %1996 = vmatprep.subr.mxu0 0.0
  %1997 = vmatpush1.msra.mxu0 0.0
  %1998 = vmatprep.subr.mxu0 0.0
  %1999 = vmatpush1.msra.mxu0 0.0
  %2000 = vmatprep.subr.mxu0 0.0
  %2001 = vmatpush1.msra.mxu0 0.0
  %2002 = vmatprep.subr.mxu0 0.0
  %2003 = vmatpush1.msra.mxu0 0.0
  %2004 = vmatprep.subr.mxu0 0.0
  %2005 = vmatpush1.msra.mxu0 0.0
  %2006 = vmatprep.subr.mxu0 0.0
  %2007 = vmatpush1.msra.mxu0 0.0
  %2008 = vmatprep.subr.mxu0 0.0
  %2009 = vmatpush1.msra.mxu0 0.0
  %2010 = vmatprep.subr.mxu0 0.0
  %2011 = vmatpush1.msra.mxu0 0.0
  %2012 = vmatprep.subr.mxu0 0.0
  %2013 = vmatpush1.msra.mxu0 0.0
  %2014 = vmatprep.subr.mxu0 0.0
  %2015 = vmatpush1.msra.mxu0 0.0
  %2016 = vmatprep.subr.mxu0 0.0
  %2017 = vmatpush1.msra.mxu0 0.0
  %2018 = vmatprep.subr.mxu0 0.0
  %2019 = vmatpush1.msra.mxu0 0.0
  %2020 = vmatprep.subr.mxu0 0.0
  %2021 = vmatpush1.msra.mxu0 0.0
  %2022 = vmatprep.subr.mxu0 0.0
  %2023 = vmatpush1.msra.mxu0 0.0
  %2024 = vmatprep.subr.mxu0 0.0
  %2025 = vmatpush1.msra.mxu0 0.0
  %2026 = vmatprep.subr.mxu0 0.0
  %2027 = vmatpush1.msra.mxu0 0.0
  %2028 = vmatprep.subr.mxu0 0.0
  %2029 = vmatpush1.msra.mxu0 0.0
  %2030 = vmatprep.subr.mxu0 0.0
  %2031 = vmatpush1.msra.mxu0 0.0
  %2032 = vmatprep.subr.mxu0 0.0
  %2033 = vmatpush1.msra.mxu0 0.0
  %2034 = vmatprep.subr.mxu0 0.0
  %2035 = vmatpush1.msra.mxu0 0.0
  %2036 = vmatprep.mubr.f32.mxu0 0.0
  %2037 = vmatmul.mubr.f32.gmra.mrb[0].mxu0 %v1970
  %v2038 = vpop.f32.mrb[0].mxu0
  %v2039 = vadd.f32 %v1968, %v2038
  %v2040 = vpop.f32.mrb[0].mxu0
  %2041 = vdwg.mxu0
  %s2042 = scalar_lea.vmem %s6, 16
  %2043 = vst [vmem:[%s2042] sm:$0xff] %v2039
  %s2044 = scalar_lea.vmem %s2, 8
  %v2045 = vld [vmem:[%s2044] sm:$0xff]
  %v2046 = vld [vmem:[%s104] sm:$0xff]
  %v2048 = vsel %vm30, %v2045, 0
  %2050 = vmatprep.subr.mxu0 0.0
  %2051 = vmatpush1.msra.mxu0 %v2039
  %2052 = vmatprep.subr.mxu0 0.0
  %2053 = vmatpush1.msra.mxu0 0.0
  %2054 = vmatprep.subr.mxu0 0.0
  %2055 = vmatpush1.msra.mxu0 0.0
  %2056 = vmatprep.subr.mxu0 0.0
  %2057 = vmatpush1.msra.mxu0 0.0
  %2058 = vmatprep.subr.mxu0 0.0
  %2059 = vmatpush1.msra.mxu0 0.0
  %2060 = vmatprep.subr.mxu0 0.0
  %2061 = vmatpush1.msra.mxu0 0.0
  %2062 = vmatprep.subr.mxu0 0.0
  %2063 = vmatpush1.msra.mxu0 0.0
  %2064 = vmatprep.subr.mxu0 0.0
  %2065 = vmatpush1.msra.mxu0 0.0
  %2066 = vmatprep.subr.mxu0 0.0
  %2067 = vmatpush1.msra.mxu0 0.0
  %2068 = vmatprep.subr.mxu0 0.0
  %2069 = vmatpush1.msra.mxu0 0.0
  %2070 = vmatprep.subr.mxu0 0.0
  %2071 = vmatpush1.msra.mxu0 0.0
  %2072 = vmatprep.subr.mxu0 0.0
  %2073 = vmatpush1.msra.mxu0 0.0
  %2074 = vmatprep.subr.mxu0 0.0
  %2075 = vmatpush1.msra.mxu0 0.0
  %2076 = vmatprep.subr.mxu0 0.0
  %2077 = vmatpush1.msra.mxu0 0.0
  %2078 = vmatprep.subr.mxu0 0.0
  %2079 = vmatpush1.msra.mxu0 0.0
  %2080 = vmatprep.subr.mxu0 0.0
  %2081 = vmatpush1.msra.mxu0 0.0
  %2082 = vmatprep.subr.mxu0 0.0
  %2083 = vmatpush1.msra.mxu0 0.0
  %2084 = vmatprep.subr.mxu0 0.0
  %2085 = vmatpush1.msra.mxu0 0.0
  %2086 = vmatprep.subr.mxu0 0.0
  %2087 = vmatpush1.msra.mxu0 0.0
  %2088 = vmatprep.subr.mxu0 0.0
  %2089 = vmatpush1.msra.mxu0 0.0
  %2090 = vmatprep.subr.mxu0 0.0
  %2091 = vmatpush1.msra.mxu0 0.0
  %2092 = vmatprep.subr.mxu0 0.0
  %2093 = vmatpush1.msra.mxu0 0.0
  %2094 = vmatprep.subr.mxu0 0.0
  %2095 = vmatpush1.msra.mxu0 0.0
  %2096 = vmatprep.subr.mxu0 0.0
  %2097 = vmatpush1.msra.mxu0 0.0
  %2098 = vmatprep.subr.mxu0 0.0
  %2099 = vmatpush1.msra.mxu0 0.0
  %2100 = vmatprep.subr.mxu0 0.0
  %2101 = vmatpush1.msra.mxu0 0.0
  %2102 = vmatprep.subr.mxu0 0.0
  %2103 = vmatpush1.msra.mxu0 0.0
  %2104 = vmatprep.subr.mxu0 0.0
  %2105 = vmatpush1.msra.mxu0 0.0
  %2106 = vmatprep.subr.mxu0 0.0
  %2107 = vmatpush1.msra.mxu0 0.0
  %2108 = vmatprep.subr.mxu0 0.0
  %2109 = vmatpush1.msra.mxu0 0.0
  %2110 = vmatprep.subr.mxu0 0.0
  %2111 = vmatpush1.msra.mxu0 0.0
  %2112 = vmatprep.subr.mxu0 0.0
  %2113 = vmatpush1.msra.mxu0 0.0
  %2114 = vmatprep.mubr.f32.mxu0 0.0
  %2115 = vmatmul.mubr.f32.gmra.mrb[0].mxu0 %v2048
  %v2116 = vpop.f32.mrb[0].mxu0
  %v2117 = vadd.f32 %v2046, %v2116
  %v2118 = vpop.f32.mrb[0].mxu0
  %2119 = vdwg.mxu0
  %s2120 = scalar_lea.vmem %s6, 8
  %2121 = vst [vmem:[%s2120] sm:$0xff] %v2117
  %v2122 = vld [vmem:[%s2] sm:$0xff]
  %v2123 = vld [vmem:[#allocation2] sm:$0xff]
  %v2125 = vsel %vm30, %v2122, 0
  %2127 = vmatprep.subr.mxu0 0.0
  %2128 = vmatpush1.msra.mxu0 %v2117
  %2129 = vmatprep.subr.mxu0 0.0
  %2130 = vmatpush1.msra.mxu0 0.0
  %2131 = vmatprep.subr.mxu0 0.0
  %2132 = vmatpush1.msra.mxu0 0.0
  %2133 = vmatprep.subr.mxu0 0.0
  %2134 = vmatpush1.msra.mxu0 0.0
  %2135 = vmatprep.subr.mxu0 0.0
  %2136 = vmatpush1.msra.mxu0 0.0
  %2137 = vmatprep.subr.mxu0 0.0
  %2138 = vmatpush1.msra.mxu0 0.0
  %2139 = vmatprep.subr.mxu0 0.0
  %2140 = vmatpush1.msra.mxu0 0.0
  %2141 = vmatprep.subr.mxu0 0.0
  %2142 = vmatpush1.msra.mxu0 0.0
  %2143 = vmatprep.subr.mxu0 0.0
  %2144 = vmatpush1.msra.mxu0 0.0
  %2145 = vmatprep.subr.mxu0 0.0
  %2146 = vmatpush1.msra.mxu0 0.0
  %2147 = vmatprep.subr.mxu0 0.0
  %2148 = vmatpush1.msra.mxu0 0.0
  %2149 = vmatprep.subr.mxu0 0.0
  %2150 = vmatpush1.msra.mxu0 0.0
  %2151 = vmatprep.subr.mxu0 0.0
  %2152 = vmatpush1.msra.mxu0 0.0
  %2153 = vmatprep.subr.mxu0 0.0
  %2154 = vmatpush1.msra.mxu0 0.0
  %2155 = vmatprep.subr.mxu0 0.0
  %2156 = vmatpush1.msra.mxu0 0.0
  %2157 = vmatprep.subr.mxu0 0.0
  %2158 = vmatpush1.msra.mxu0 0.0
  %2159 = vmatprep.subr.mxu0 0.0
  %2160 = vmatpush1.msra.mxu0 0.0
  %2161 = vmatprep.subr.mxu0 0.0
  %2162 = vmatpush1.msra.mxu0 0.0
  %2163 = vmatprep.subr.mxu0 0.0
  %2164 = vmatpush1.msra.mxu0 0.0
  %2165 = vmatprep.subr.mxu0 0.0
  %2166 = vmatpush1.msra.mxu0 0.0
  %2167 = vmatprep.subr.mxu0 0.0
  %2168 = vmatpush1.msra.mxu0 0.0
  %2169 = vmatprep.subr.mxu0 0.0
  %2170 = vmatpush1.msra.mxu0 0.0
  %2171 = vmatprep.subr.mxu0 0.0
  %2172 = vmatpush1.msra.mxu0 0.0
  %2173 = vmatprep.subr.mxu0 0.0
  %2174 = vmatpush1.msra.mxu0 0.0
  %2175 = vmatprep.subr.mxu0 0.0
  %2176 = vmatpush1.msra.mxu0 0.0
  %2177 = vmatprep.subr.mxu0 0.0
  %2178 = vmatpush1.msra.mxu0 0.0
  %2179 = vmatprep.subr.mxu0 0.0
  %2180 = vmatpush1.msra.mxu0 0.0
  %2181 = vmatprep.subr.mxu0 0.0
  %2182 = vmatpush1.msra.mxu0 0.0
  %2183 = vmatprep.subr.mxu0 0.0
  %2184 = vmatpush1.msra.mxu0 0.0
  %2185 = vmatprep.subr.mxu0 0.0
  %2186 = vmatpush1.msra.mxu0 0.0
  %2187 = vmatprep.subr.mxu0 0.0
  %2188 = vmatpush1.msra.mxu0 0.0
  %2189 = vmatprep.subr.mxu0 0.0
  %2190 = vmatpush1.msra.mxu0 0.0
  %2191 = vmatprep.mubr.f32.mxu0 0.0
  %2192 = vmatmul.mubr.f32.gmra.mrb[0].mxu0 %v2125
  %v2193 = vpop.f32.mrb[0].mxu0
  %v2194 = vadd.f32 %v2123, %v2193
  %v2195 = vpop.f32.mrb[0].mxu0
  %2196 = vdwg.mxu0
  %2197 = vst [vmem:[%s6] sm:$0xff] %v2194
  // Predicated region
  $region26: #{hmm_forward.1} parent=0 // pred_check
    _
  $region27: #{hmm_forward.1} parent=0 // pred_check_branch
    %2199 = sbr.rel (0) target = $region29
  $region28: #{hmm_forward.1} parent=0 // pred_region
    _
  $region29: #{hmm_forward.1} parent=0 // pred_fallthru
    _
  // Predicated region
  $region30: #{hmm_forward.1} parent=0 // pred_check
    _
  $region31: #{hmm_forward.1} parent=0 // pred_check_branch
    %2201 = sbr.rel (0) target = $region33
  $region32: #{hmm_forward.1} parent=0 // pred_region
    _
  $region33: #{hmm_forward.1} parent=0 // pred_fallthru
    _
  // Predicated region
  $region34: #{hmm_forward.1} parent=0 // pred_check
    _
  $region35: #{hmm_forward.1} parent=0 // pred_check_branch
    %2203 = sbr.rel (0) target = $region37
  $region36: #{hmm_forward.1} parent=0 // pred_region
    _
  $region37: #{hmm_forward.1} parent=0 // pred_fallthru
    _
  // Predicated region
  $region38: #{hmm_forward.1} parent=0 // pred_check
    _
  $region39: #{hmm_forward.1} parent=0 // pred_check_branch
    %2205 = sbr.rel (0) target = $region41
  $region40: #{hmm_forward.1} parent=0 // pred_region
    _
  $region41: #{hmm_forward.1} parent=0 // pred_fallthru
    _

</llo_original>
